<compile_context>
chip_gen: v7x
topology: tpu7x:2x2x1
jax: 0.10.0
libtpu: 0.0.40
codegen_flags: <defaults>
</compile_context>

<pallas_src>
import functools

import jax
import jax.numpy as jnp
from jax.experimental import pallas as pl
from jax.experimental.pallas import tpu as pltpu

LANE = 128


def _round_up(x, m):
    return (x + m - 1) // m * m


def _chip_info():
    """(tensorcores_per_chip, vmem_budget_bytes) — coarse, device_kind based."""
    try:
        kind = jax.devices()[0].device_kind.lower()
    except Exception:
        kind = ""
    two_tc = ("v7" in kind) or ("v4" in kind) or ("v5p" in kind)
    vmem_cap = (48 << 20) if "v7" in kind else (64 << 20)
    return (2 if two_tc else 1), vmem_cap


# ---------------------------------------------------------------------------
# Pallas kernels
# ---------------------------------------------------------------------------
def _mm_bias_kernel(x_ref, w_ref, b_ref, o_ref, *, relu):
    # Whole-K dot per M tile; f32 accumulation on the MXU.
    y = jnp.dot(x_ref[...], w_ref[...], preferred_element_type=jnp.float32)
    y = y + b_ref[...]
    if relu:
        y = jnp.maximum(y, 0.0)
    o_ref[...] = y.astype(o_ref.dtype)


def _mm_bias_res_kernel(x_ref, w_ref, b_ref, r_ref, o_ref, *, relu):
    y = jnp.dot(x_ref[...], w_ref[...], preferred_element_type=jnp.float32)
    y = y + b_ref[...] + r_ref[...].astype(jnp.float32)
    if relu:
        y = jnp.maximum(y, 0.0)
    o_ref[...] = y.astype(o_ref.dtype)


def _gap_head_kernel(x_ref, wc_ref, bc_ref, wf_ref, bf_ref, o_ref, pool_ref, *,
                     inv_hw):
    # AdaptiveAvgPool2d((1,1)) -> conv1x1(->256) -> ReLU -> flatten -> Linear,
    # fused.  H*W is tiled along the (only) grid axis; the pooled sum is
    # accumulated into a (Bp, Cp) f32 scratch; the two small matmuls run once
    # on the last step.
    s = pl.program_id(0)

    @pl.when(s == 0)
    def _init():
        pool_ref[...] = jnp.zeros_like(pool_ref)

    pool_ref[...] += jnp.sum(x_ref[...].astype(jnp.float32), axis=1)

    @pl.when(s == pl.num_programs(0) - 1)
    def _finalize():
        pooled = (pool_ref[...] * inv_hw).astype(jnp.bfloat16)          # (Bp, Cp)
        h = jnp.dot(pooled, wc_ref[...], preferred_element_type=jnp.float32)
        h = jnp.maximum(h + bc_ref[...], 0.0)
        y = jnp.dot(h.astype(jnp.bfloat16), wf_ref[...],
                    preferred_element_type=jnp.float32) + bf_ref[...]
        o_ref[...] = y


# ---------------------------------------------------------------------------
# Pallas-backed ops
# ---------------------------------------------------------------------------
def _pick_tm(m_pad, cores):
    """Generation-aware M tile: 1 big step on single-TC chips, >=2 on v7x."""
    cap = 512
    if cores >= 2:
        cap = min(256, max(8, m_pad // 2))
    tm = max(8, min(cap, m_pad))
    tm -= tm % 8
    while m_pad % tm:
        tm -= 8
    return tm


def matmul_bias(x, w, b, *, relu=False, residual=None, out_dtype=jnp.bfloat16):
    """y = act(x @ w + b [+ residual]).

    x:(Mp,Kp) bf16, w:(Kp,Np) bf16, b:(1,Np) f32.  The whole contraction fits
    VMEM (Kp <= ~1k here), so the grid is (M//tm,) only: one dot per step, no
    acc scratch, weight block index constant (fetched once).
    """
    M, K = x.shape
    Kw, N = w.shape
    assert Kw == K and M % 8 == 0 and K % LANE == 0 and N % LANE == 0

    cores, vmem_cap = _chip_info()
    tm = _pick_tm(M, cores)
    grid = (M // tm,)

    in_specs = [
        pl.BlockSpec((tm, K), lambda i: (i, 0)),    # activation tile
        pl.BlockSpec((K, N), lambda i: (0, 0)),     # whole weight, VMEM-resident
        pl.BlockSpec((1, N), lambda i: (0, 0)),     # bias
    ]
    args = [x, w, b]
    if residual is None:
        kern = functools.partial(_mm_bias_kernel, relu=relu)
    else:
        kern = functools.partial(_mm_bias_res_kernel, relu=relu)
        in_specs.append(pl.BlockSpec((tm, N), lambda i: (i, 0)))
        args.append(residual)

    # Explicit VMEM budget: double-buffered inputs + double-buffered output.
    res_bytes = tm * N * 2 if residual is not None else 0
    need = 2 * (tm * K * 2 + K * N * 2 + N * 4 + res_bytes) + 2 * tm * N * 2
    vmem_limit = int(min(vmem_cap, max(32 << 20, 2 * need)))

    return pl.pallas_call(
        kern,
        grid=grid,
        in_specs=in_specs,
        out_specs=pl.BlockSpec((tm, N), lambda i: (i, 0)),
        out_shape=jax.ShapeDtypeStruct((M, N), out_dtype),
        compiler_params=pltpu.CompilerParams(
            dimension_semantics=("parallel",),
            vmem_limit_bytes=vmem_limit),
    )(*args)


def gap_head(x_flat, hw_true, wc, bc, wf, bf):
    """Fused GAP + conv1x1(->256) + ReLU + flatten + Linear.

    x_flat: (Bp, HWp, Cp) bf16 — batch pre-padded to a multiple of 8, H*W
    zero-padded to a multiple of the tile (zeros don't change the sum; the
    mean uses the true H*W).
    """
    Bp, HWp, Cp = x_flat.shape
    Hh = wc.shape[1]
    Fp = wf.shape[1]
    thw = min(HWp, 512)
    assert Bp % 8 == 0 and HWp % thw == 0
    grid = (HWp // thw,)

    kern = functools.partial(_gap_head_kernel, inv_hw=1.0 / float(hw_true))
    return pl.pallas_call(
        kern,
        grid=grid,
        in_specs=[
            pl.BlockSpec((Bp, thw, Cp), lambda s: (0, s, 0)),
            pl.BlockSpec((Cp, Hh), lambda s: (0, 0)),
            pl.BlockSpec((1, Hh), lambda s: (0, 0)),
            pl.BlockSpec((Hh, Fp), lambda s: (0, 0)),
            pl.BlockSpec((1, Fp), lambda s: (0, 0)),
        ],
        out_specs=pl.BlockSpec((Bp, Fp), lambda s: (0, 0)),
        out_shape=jax.ShapeDtypeStruct((Bp, Fp), jnp.float32),
        scratch_shapes=[pltpu.VMEM((Bp, Cp), jnp.float32)],
        compiler_params=pltpu.CompilerParams(
            dimension_semantics=("arbitrary",)),
    )(x_flat, wc, bc, wf, bf)


# ---------------------------------------------------------------------------
# Conv via tap-major im2col (bf16 glue, true Cin) + Pallas matmul (hot path)
# ---------------------------------------------------------------------------
def _im2col_nhwc(x, kh, kw, stride, pad):
    B, H, W, C = x.shape
    xp = jnp.pad(x, ((0, 0), (pad, pad), (pad, pad), (0, 0)))
    Ho = (H + 2 * pad - kh) // stride + 1
    Wo = (W + 2 * pad - kw) // stride + 1
    cols = [xp[:, dh:dh + stride * Ho:stride, dw:dw + stride * Wo:stride, :]
            for dh in range(kh) for dw in range(kw)]
    # lane-axis concat: (B, Ho, Wo, KH*KW*C), K ordered (kh, kw, cin)
    patches = jnp.concatenate(cols, axis=-1)
    return patches.reshape(B * Ho * Wo, kh * kw * C), Ho, Wo


def conv2d(x_nhwc, wmat, bias, *, cin, kh=3, kw=3, stride=1, pad=1, relu=False,
           residual_nhwc=None):
    B = x_nhwc.shape[0]
    x_nhwc = x_nhwc[..., :cin]                 # drop padded channels before im2col
    cols, Ho, Wo = _im2col_nhwc(x_nhwc, kh, kw, stride, pad)
    M, K = cols.shape
    Kp, Np = wmat.shape                        # weights already 128-padded at init
    Mp = _round_up(M, LANE)
    if (Mp, Kp) != (M, K):
        cols = jnp.pad(cols, ((0, Mp - M), (0, Kp - K)))
    res = None
    if residual_nhwc is not None:
        res = residual_nhwc.reshape(M, Np)
        if Mp != M:
            res = jnp.pad(res, ((0, Mp - M), (0, 0)))
    y = matmul_bias(cols, wmat, bias, relu=relu, residual=res)
    return y[:M].reshape(B, Ho, Wo, Np)


# ---------------------------------------------------------------------------
# Parameter init (deterministic, packed/padded/bf16 once) and forward
# ---------------------------------------------------------------------------
def _pack_conv(w_oihw, b):
    Cout, Cin, KH, KW = w_oihw.shape
    Np = _round_up(Cout, LANE)
    K = KH * KW * Cin
    Kp = _round_up(K, LANE)
    # K ordered (kh, kw, cin) to match the tap-major im2col concat.
    wmat = jnp.transpose(w_oihw, (2, 3, 1, 0)).reshape(K, Cout)
    wmat = jnp.pad(wmat, ((0, Kp - K), (0, Np - Cout)))
    bias = jnp.pad(b, (0, Np - Cout)).reshape(1, Np)
    return wmat.astype(jnp.bfloat16), bias.astype(jnp.float32)


def _pack_fc(w_of, b):
    F, H = w_of.shape
    Fp = _round_up(F, LANE)
    wmat = jnp.pad(w_of.T, ((0, 0), (0, Fp - F)))            # (H, Fp)
    bias = jnp.pad(b, (0, Fp - F)).reshape(1, Fp)
    return wmat.astype(jnp.bfloat16), bias.astype(jnp.float32)


def init_params(key, *, in_ch=3, stem_ch=32, feat_ch=64, num_features=32):
    def w_init(k, shape):
        fan_in = 1
        for d in shape[1:]:
            fan_in *= d
        return jax.random.normal(k, shape, jnp.float32) / jnp.sqrt(float(fan_in))

    ks = jax.random.split(key, 8)

    stem_w, stem_b = _pack_conv(w_init(ks[0], (stem_ch, in_ch, 3, 3)),
                                jnp.zeros((stem_ch,), jnp.float32))
    b1_w1, b1_b1 = _pack_conv(w_init(ks[1], (stem_ch, stem_ch, 3, 3)),
                              jnp.zeros((stem_ch,), jnp.float32))
    b1_w2, b1_b2 = _pack_conv(w_init(ks[2], (stem_ch, stem_ch, 3, 3)),
                              jnp.zeros((stem_ch,), jnp.float32))
    down_w, down_b = _pack_conv(w_init(ks[3], (feat_ch, stem_ch, 3, 3)),
                                jnp.zeros((feat_ch,), jnp.float32))
    # head: nn.Conv2d(in_features, 256, 1), nn.Linear(256, num_features)
    conv_w, conv_b = _pack_conv(
        w_init(ks[4], (256, feat_ch, 1, 1)),
        0.01 * jax.random.normal(ks[5], (256,), jnp.float32))
    fc_w, fc_b = _pack_fc(
        w_init(ks[6], (num_features, 256)),
        0.01 * jax.random.normal(ks[7], (num_features,), jnp.float32))

    return {
        "stem_wmat": stem_w, "stem_b": stem_b,
        "b1_wmat1": b1_w1, "b1_b1": b1_b1,
        "b1_wmat2": b1_w2, "b1_b2": b1_b2,
        "down_wmat": down_w, "down_b": down_b,
        "conv_wmat": conv_w, "conv_b": conv_b,
        "fc_wmat": fc_w, "fc_b": fc_b,
    }


@functools.partial(jax.jit,
                   static_argnames=("in_ch", "stem_ch", "feat_ch", "num_features"))
def resnetx_feature_extractor_forward(x_nchw, p, *, in_ch, stem_ch, feat_ch,
                                      num_features):
    # NCHW (PyTorch) in -> NHWC bf16 internally -> (B, num_features) f32 out.
    # NOTE: activations are bf16 (f32 MXU accumulation); results will not match
    # a PyTorch f32 reference bit-wise.
    x = jnp.transpose(x_nchw, (0, 2, 3, 1)).astype(jnp.bfloat16)

    # --- self.features (synthetic ResNet-style backbone; GAP is its last op,
    #     matching torchvision ResNet's avgpool, fused into the head kernel) ---
    x = conv2d(x, p["stem_wmat"], p["stem_b"], cin=in_ch, stride=1, pad=1,
               relu=True)
    identity = x
    h = conv2d(x, p["b1_wmat1"], p["b1_b1"], cin=stem_ch, stride=1, pad=1,
               relu=True)
    x = conv2d(h, p["b1_wmat2"], p["b1_b2"], cin=stem_ch, stride=1, pad=1,
               relu=True, residual_nhwc=identity)
    x = conv2d(x, p["down_wmat"], p["down_b"], cin=stem_ch, stride=2, pad=1,
               relu=True)

    # --- GAP + self.conv(1x1) -> relu -> view(B,-1) -> self.fc (one kernel) ---
    B, Ho, Wo, Cp = x.shape
    HW = Ho * Wo
    x_flat = x.reshape(B, HW, Cp)
    Bp = _round_up(max(B, 8), 8)
    HWp = _round_up(HW, 8)
    thw = min(HWp, 512)
    HWp = _round_up(HWp, thw)
    if (Bp, HWp) != (B, HW):
        x_flat = jnp.pad(x_flat, ((0, Bp - B), (0, HWp - HW), (0, 0)))
    feats = gap_head(x_flat, HW,
                     p["conv_wmat"], p["conv_b"], p["fc_wmat"], p["fc_b"])
    return feats[:B, :num_features]


if __name__ == "__main__":
    key = jax.random.PRNGKey(0)
    k_params, k_x = jax.random.split(key)

    IN_CH, STEM_CH, FEAT_CH, NUM_FEATURES = 3, 32, 64, 32
    params = init_params(k_params, in_ch=IN_CH, stem_ch=STEM_CH,
                         feat_ch=FEAT_CH, num_features=NUM_FEATURES)
    x = jax.random.normal(k_x, (2, IN_CH, 16, 16), jnp.float32)  # NCHW, like PyTorch

    out = resnetx_feature_extractor_forward(
        x, params, in_ch=IN_CH, stem_ch=STEM_CH, feat_ch=FEAT_CH,
        num_features=NUM_FEATURES)
    out = jax.block_until_ready(out)
    assert out.shape == (2, NUM_FEATURES) and out.dtype == jnp.float32
    assert bool(jnp.all(jnp.isfinite(out)))
    print("KERNEL_OK")
</pallas_src>

<mosaic_0001>
module attributes {stable_mosaic.version = 11 : i64} {
  func.func @_mm_bias_kernel(%arg0: i32, %arg1: memref<512x128xbf16, #tpu.memory_space<vmem>>, %arg2: memref<128x128xbf16, #tpu.memory_space<vmem>>, %arg3: memref<1x128xf32, #tpu.memory_space<vmem>>, %arg4: memref<512x128xbf16, #tpu.memory_space<vmem>>) attributes {dimension_semantics = [#tpu.dimension_semantics<parallel>], iteration_bounds = array<i64: 1>, scalar_prefetch = 0 : i64, scratch_operands = 0 : i64, tpu.core_type = #tpu.core_type<tc>, window_params = [{transform_indices = @transform_0, window_bounds = array<i64: 512, 128>}, {pipeline_mode = #tpu.pipeline_mode<synchronous>, transform_indices = @transform_1, window_bounds = array<i64: 128, 128>}, {pipeline_mode = #tpu.pipeline_mode<synchronous>, transform_indices = @transform_2, window_bounds = array<i64: 1, 128>}, {transform_indices = @transform_3, window_bounds = array<i64: 512, 128>}]} {
    %c0 = arith.constant 0 : index
    %c0_0 = arith.constant 0 : index
    %0 = vector.load %arg1[%c0, %c0_0] : memref<512x128xbf16, #tpu.memory_space<vmem>>, vector<512x128xbf16>
    %c0_1 = arith.constant 0 : index
    %c0_2 = arith.constant 0 : index
    %1 = vector.load %arg2[%c0_1, %c0_2] : memref<128x128xbf16, #tpu.memory_space<vmem>>, vector<128x128xbf16>
    %cst = arith.constant dense<0.000000e+00> : vector<512x128xf32>
    %2 = tpu.matmul %0, %1, %cst {dimension_numbers = #tpu.dot_dimension_numbers<[1], [0], [0], [1], [0, 0, 1, 1], [], []>} : vector<512x128xbf16>, vector<128x128xbf16>, vector<512x128xf32> -> vector<512x128xf32>
    %c0_3 = arith.constant 0 : index
    %c0_4 = arith.constant 0 : index
    %3 = vector.load %arg3[%c0_3, %c0_4] : memref<1x128xf32, #tpu.memory_space<vmem>>, vector<1x128xf32>
    %4 = vector.broadcast %3 : vector<1x128xf32> to vector<512x128xf32>
    %5 = arith.addf %2, %4 : vector<512x128xf32>
    %cst_5 = arith.constant 0.000000e+00 : f32
    %6 = vector.broadcast %cst_5 : f32 to vector<512x128xf32>
    %7 = arith.maximumf %5, %6 : vector<512x128xf32>
    %8 = arith.truncf %7 : vector<512x128xf32> to vector<512x128xbf16>
    %c0_6 = arith.constant 0 : index
    %c0_7 = arith.constant 0 : index
    %9 = vector.load %arg4[%c0_6, %c0_7] : memref<512x128xbf16, #tpu.memory_space<vmem>>, vector<512x128xbf16>
    tpu.vector_store %arg4[%c0_6, %c0_7], %8 {strides = array<i32>} : memref<512x128xbf16, #tpu.memory_space<vmem>>, vector<512x128xbf16>,
    return
  }
  func.func @transform_0(%arg0: i32) -> (i32, i32) {
    %c0_i32 = arith.constant 0 : i32
    %c0_i32_0 = arith.constant 0 : i32
    return %arg0, %c0_i32 : i32, i32
  }
  func.func @transform_1(%arg0: i32) -> (i32, i32) {
    %c0_i32 = arith.constant 0 : i32
    %c0_i32_0 = arith.constant 0 : i32
    %c0_i32_1 = arith.constant 0 : i32
    return %c0_i32, %c0_i32_0 : i32, i32
  }
  func.func @transform_2(%arg0: i32) -> (i32, i32) {
    %c0_i32 = arith.constant 0 : i32
    %c0_i32_0 = arith.constant 0 : i32
    %c0_i32_1 = arith.constant 0 : i32
    return %c0_i32, %c0_i32_0 : i32, i32
  }
  func.func @transform_3(%arg0: i32) -> (i32, i32) {
    %c0_i32 = arith.constant 0 : i32
    %c0_i32_0 = arith.constant 0 : i32
    return %arg0, %c0_i32 : i32, i32
  }
}

module attributes {stable_mosaic.version = 11 : i64} {
  func.func @_mm_bias_kernel(%arg0: i32, %arg1: memref<512x384xbf16, #tpu.memory_space<vmem>>, %arg2: memref<384x128xbf16, #tpu.memory_space<vmem>>, %arg3: memref<1x128xf32, #tpu.memory_space<vmem>>, %arg4: memref<512x128xbf16, #tpu.memory_space<vmem>>) attributes {dimension_semantics = [#tpu.dimension_semantics<parallel>], iteration_bounds = array<i64: 1>, scalar_prefetch = 0 : i64, scratch_operands = 0 : i64, tpu.core_type = #tpu.core_type<tc>, window_params = [{transform_indices = @transform_0, window_bounds = array<i64: 512, 384>}, {pipeline_mode = #tpu.pipeline_mode<synchronous>, transform_indices = @transform_1, window_bounds = array<i64: 384, 128>}, {pipeline_mode = #tpu.pipeline_mode<synchronous>, transform_indices = @transform_2, window_bounds = array<i64: 1, 128>}, {transform_indices = @transform_3, window_bounds = array<i64: 512, 128>}]} {
    %c0 = arith.constant 0 : index
    %c0_0 = arith.constant 0 : index
    %0 = vector.load %arg1[%c0, %c0_0] : memref<512x384xbf16, #tpu.memory_space<vmem>>, vector<512x384xbf16>
    %c0_1 = arith.constant 0 : index
    %c0_2 = arith.constant 0 : index
    %1 = vector.load %arg2[%c0_1, %c0_2] : memref<384x128xbf16, #tpu.memory_space<vmem>>, vector<384x128xbf16>
    %cst = arith.constant dense<0.000000e+00> : vector<512x128xf32>
    %2 = tpu.matmul %0, %1, %cst {dimension_numbers = #tpu.dot_dimension_numbers<[1], [0], [0], [1], [0, 0, 1, 1], [], []>} : vector<512x384xbf16>, vector<384x128xbf16>, vector<512x128xf32> -> vector<512x128xf32>
    %c0_3 = arith.constant 0 : index
    %c0_4 = arith.constant 0 : index
    %3 = vector.load %arg3[%c0_3, %c0_4] : memref<1x128xf32, #tpu.memory_space<vmem>>, vector<1x128xf32>
    %4 = vector.broadcast %3 : vector<1x128xf32> to vector<512x128xf32>
    %5 = arith.addf %2, %4 : vector<512x128xf32>
    %cst_5 = arith.constant 0.000000e+00 : f32
    %6 = vector.broadcast %cst_5 : f32 to vector<512x128xf32>
    %7 = arith.maximumf %5, %6 : vector<512x128xf32>
    %8 = arith.truncf %7 : vector<512x128xf32> to vector<512x128xbf16>
    %c0_6 = arith.constant 0 : index
    %c0_7 = arith.constant 0 : index
    %9 = vector.load %arg4[%c0_6, %c0_7] : memref<512x128xbf16, #tpu.memory_space<vmem>>, vector<512x128xbf16>
    tpu.vector_store %arg4[%c0_6, %c0_7], %8 {strides = array<i32>} : memref<512x128xbf16, #tpu.memory_space<vmem>>, vector<512x128xbf16>,
    return
  }
  func.func @transform_0(%arg0: i32) -> (i32, i32) {
    %c0_i32 = arith.constant 0 : i32
    %c0_i32_0 = arith.constant 0 : i32
    return %arg0, %c0_i32 : i32, i32
  }
  func.func @transform_1(%arg0: i32) -> (i32, i32) {
    %c0_i32 = arith.constant 0 : i32
    %c0_i32_0 = arith.constant 0 : i32
    %c0_i32_1 = arith.constant 0 : i32
    return %c0_i32, %c0_i32_0 : i32, i32
  }
  func.func @transform_2(%arg0: i32) -> (i32, i32) {
    %c0_i32 = arith.constant 0 : i32
    %c0_i32_0 = arith.constant 0 : i32
    %c0_i32_1 = arith.constant 0 : i32
    return %c0_i32, %c0_i32_0 : i32, i32
  }
  func.func @transform_3(%arg0: i32) -> (i32, i32) {
    %c0_i32 = arith.constant 0 : i32
    %c0_i32_0 = arith.constant 0 : i32
    return %arg0, %c0_i32 : i32, i32
  }
}

module attributes {stable_mosaic.version = 11 : i64} {
  func.func @_mm_bias_res_kernel(%arg0: i32, %arg1: memref<512x384xbf16, #tpu.memory_space<vmem>>, %arg2: memref<384x128xbf16, #tpu.memory_space<vmem>>, %arg3: memref<1x128xf32, #tpu.memory_space<vmem>>, %arg4: memref<512x128xbf16, #tpu.memory_space<vmem>>, %arg5: memref<512x128xbf16, #tpu.memory_space<vmem>>) attributes {dimension_semantics = [#tpu.dimension_semantics<parallel>], iteration_bounds = array<i64: 1>, scalar_prefetch = 0 : i64, scratch_operands = 0 : i64, tpu.core_type = #tpu.core_type<tc>, window_params = [{transform_indices = @transform_0, window_bounds = array<i64: 512, 384>}, {pipeline_mode = #tpu.pipeline_mode<synchronous>, transform_indices = @transform_1, window_bounds = array<i64: 384, 128>}, {pipeline_mode = #tpu.pipeline_mode<synchronous>, transform_indices = @transform_2, window_bounds = array<i64: 1, 128>}, {transform_indices = @transform_3, window_bounds = array<i64: 512, 128>}, {transform_indices = @transform_4, window_bounds = array<i64: 512, 128>}]} {
    %c0 = arith.constant 0 : index
    %c0_0 = arith.constant 0 : index
    %0 = vector.load %arg1[%c0, %c0_0] : memref<512x384xbf16, #tpu.memory_space<vmem>>, vector<512x384xbf16>
    %c0_1 = arith.constant 0 : index
    %c0_2 = arith.constant 0 : index
    %1 = vector.load %arg2[%c0_1, %c0_2] : memref<384x128xbf16, #tpu.memory_space<vmem>>, vector<384x128xbf16>
    %cst = arith.constant dense<0.000000e+00> : vector<512x128xf32>
    %2 = tpu.matmul %0, %1, %cst {dimension_numbers = #tpu.dot_dimension_numbers<[1], [0], [0], [1], [0, 0, 1, 1], [], []>} : vector<512x384xbf16>, vector<384x128xbf16>, vector<512x128xf32> -> vector<512x128xf32>
    %c0_3 = arith.constant 0 : index
    %c0_4 = arith.constant 0 : index
    %3 = vector.load %arg3[%c0_3, %c0_4] : memref<1x128xf32, #tpu.memory_space<vmem>>, vector<1x128xf32>
    %4 = vector.broadcast %3 : vector<1x128xf32> to vector<512x128xf32>
    %5 = arith.addf %2, %4 : vector<512x128xf32>
    %c0_5 = arith.constant 0 : index
    %c0_6 = arith.constant 0 : index
    %6 = vector.load %arg4[%c0_5, %c0_6] : memref<512x128xbf16, #tpu.memory_space<vmem>>, vector<512x128xbf16>
    %7 = arith.extf %6 : vector<512x128xbf16> to vector<512x128xf32>
    %8 = arith.addf %5, %7 : vector<512x128xf32>
    %cst_7 = arith.constant 0.000000e+00 : f32
    %9 = vector.broadcast %cst_7 : f32 to vector<512x128xf32>
    %10 = arith.maximumf %8, %9 : vector<512x128xf32>
    %11 = arith.truncf %10 : vector<512x128xf32> to vector<512x128xbf16>
    %c0_8 = arith.constant 0 : index
    %c0_9 = arith.constant 0 : index
    %12 = vector.load %arg5[%c0_8, %c0_9] : memref<512x128xbf16, #tpu.memory_space<vmem>>, vector<512x128xbf16>
    tpu.vector_store %arg5[%c0_8, %c0_9], %11 {strides = array<i32>} : memref<512x128xbf16, #tpu.memory_space<vmem>>, vector<512x128xbf16>,
    return
  }
  func.func @transform_0(%arg0: i32) -> (i32, i32) {
    %c0_i32 = arith.constant 0 : i32
    %c0_i32_0 = arith.constant 0 : i32
    return %arg0, %c0_i32 : i32, i32
  }
  func.func @transform_1(%arg0: i32) -> (i32, i32) {
    %c0_i32 = arith.constant 0 : i32
    %c0_i32_0 = arith.constant 0 : i32
    %c0_i32_1 = arith.constant 0 : i32
    return %c0_i32, %c0_i32_0 : i32, i32
  }
  func.func @transform_2(%arg0: i32) -> (i32, i32) {
    %c0_i32 = arith.constant 0 : i32
    %c0_i32_0 = arith.constant 0 : i32
    %c0_i32_1 = arith.constant 0 : i32
    return %c0_i32, %c0_i32_0 : i32, i32
  }
  func.func @transform_3(%arg0: i32) -> (i32, i32) {
    %c0_i32 = arith.constant 0 : i32
    %c0_i32_0 = arith.constant 0 : i32
    return %arg0, %c0_i32 : i32, i32
  }
  func.func @transform_4(%arg0: i32) -> (i32, i32) {
    %c0_i32 = arith.constant 0 : i32
    %c0_i32_0 = arith.constant 0 : i32
    return %arg0, %c0_i32 : i32, i32
  }
}

module attributes {stable_mosaic.version = 11 : i64} {
  func.func @_mm_bias_kernel(%arg0: i32, %arg1: memref<128x384xbf16, #tpu.memory_space<vmem>>, %arg2: memref<384x128xbf16, #tpu.memory_space<vmem>>, %arg3: memref<1x128xf32, #tpu.memory_space<vmem>>, %arg4: memref<128x128xbf16, #tpu.memory_space<vmem>>) attributes {dimension_semantics = [#tpu.dimension_semantics<parallel>], iteration_bounds = array<i64: 1>, scalar_prefetch = 0 : i64, scratch_operands = 0 : i64, tpu.core_type = #tpu.core_type<tc>, window_params = [{transform_indices = @transform_0, window_bounds = array<i64: 128, 384>}, {pipeline_mode = #tpu.pipeline_mode<synchronous>, transform_indices = @transform_1, window_bounds = array<i64: 384, 128>}, {pipeline_mode = #tpu.pipeline_mode<synchronous>, transform_indices = @transform_2, window_bounds = array<i64: 1, 128>}, {transform_indices = @transform_3, window_bounds = array<i64: 128, 128>}]} {
    %c0 = arith.constant 0 : index
    %c0_0 = arith.constant 0 : index
    %0 = vector.load %arg1[%c0, %c0_0] : memref<128x384xbf16, #tpu.memory_space<vmem>>, vector<128x384xbf16>
    %c0_1 = arith.constant 0 : index
    %c0_2 = arith.constant 0 : index
    %1 = vector.load %arg2[%c0_1, %c0_2] : memref<384x128xbf16, #tpu.memory_space<vmem>>, vector<384x128xbf16>
    %cst = arith.constant dense<0.000000e+00> : vector<128x128xf32>
    %2 = tpu.matmul %0, %1, %cst {dimension_numbers = #tpu.dot_dimension_numbers<[1], [0], [0], [1], [0, 0, 1, 1], [], []>} : vector<128x384xbf16>, vector<384x128xbf16>, vector<128x128xf32> -> vector<128x128xf32>
    %c0_3 = arith.constant 0 : index
    %c0_4 = arith.constant 0 : index
    %3 = vector.load %arg3[%c0_3, %c0_4] : memref<1x128xf32, #tpu.memory_space<vmem>>, vector<1x128xf32>
    %4 = vector.broadcast %3 : vector<1x128xf32> to vector<128x128xf32>
    %5 = arith.addf %2, %4 : vector<128x128xf32>
    %cst_5 = arith.constant 0.000000e+00 : f32
    %6 = vector.broadcast %cst_5 : f32 to vector<128x128xf32>
    %7 = arith.maximumf %5, %6 : vector<128x128xf32>
    %8 = arith.truncf %7 : vector<128x128xf32> to vector<128x128xbf16>
    %c0_6 = arith.constant 0 : index
    %c0_7 = arith.constant 0 : index
    %9 = vector.load %arg4[%c0_6, %c0_7] : memref<128x128xbf16, #tpu.memory_space<vmem>>, vector<128x128xbf16>
    tpu.vector_store %arg4[%c0_6, %c0_7], %8 {strides = array<i32>} : memref<128x128xbf16, #tpu.memory_space<vmem>>, vector<128x128xbf16>,
    return
  }
  func.func @transform_0(%arg0: i32) -> (i32, i32) {
    %c0_i32 = arith.constant 0 : i32
    %c0_i32_0 = arith.constant 0 : i32
    return %arg0, %c0_i32 : i32, i32
  }
  func.func @transform_1(%arg0: i32) -> (i32, i32) {
    %c0_i32 = arith.constant 0 : i32
    %c0_i32_0 = arith.constant 0 : i32
    %c0_i32_1 = arith.constant 0 : i32
    return %c0_i32, %c0_i32_0 : i32, i32
  }
  func.func @transform_2(%arg0: i32) -> (i32, i32) {
    %c0_i32 = arith.constant 0 : i32
    %c0_i32_0 = arith.constant 0 : i32
    %c0_i32_1 = arith.constant 0 : i32
    return %c0_i32, %c0_i32_0 : i32, i32
  }
  func.func @transform_3(%arg0: i32) -> (i32, i32) {
    %c0_i32 = arith.constant 0 : i32
    %c0_i32_0 = arith.constant 0 : i32
    return %arg0, %c0_i32 : i32, i32
  }
}

module attributes {stable_mosaic.version = 11 : i64} {
  func.func @_gap_head_kernel(%arg0: i32, %arg1: memref<8x64x128xbf16, #tpu.memory_space<vmem>>, %arg2: memref<128x256xbf16, #tpu.memory_space<vmem>>, %arg3: memref<1x256xf32, #tpu.memory_space<vmem>>, %arg4: memref<256x128xbf16, #tpu.memory_space<vmem>>, %arg5: memref<1x128xf32, #tpu.memory_space<vmem>>, %arg6: memref<8x128xf32, #tpu.memory_space<vmem>>, %arg7: memref<8x128xf32, #tpu.memory_space<vmem>>) attributes {dimension_semantics = [#tpu.dimension_semantics<arbitrary>], iteration_bounds = array<i64: 1>, scalar_prefetch = 0 : i64, scratch_operands = 1 : i64, tpu.core_type = #tpu.core_type<tc>, window_params = [{transform_indices = @transform_0, window_bounds = array<i64: 8, 64, 128>}, {pipeline_mode = #tpu.pipeline_mode<synchronous>, transform_indices = @transform_1, window_bounds = array<i64: 128, 256>}, {pipeline_mode = #tpu.pipeline_mode<synchronous>, transform_indices = @transform_2, window_bounds = array<i64: 1, 256>}, {pipeline_mode = #tpu.pipeline_mode<synchronous>, transform_indices = @transform_3, window_bounds = array<i64: 256, 128>}, {pipeline_mode = #tpu.pipeline_mode<synchronous>, transform_indices = @transform_4, window_bounds = array<i64: 1, 128>}, {pipeline_mode = #tpu.pipeline_mode<synchronous>, transform_indices = @transform_5, window_bounds = array<i64: 8, 128>}]} {
    %c0_i32 = arith.constant 0 : i32
    %0 = arith.cmpi eq, %arg0, %c0_i32 : i32
    %1 = arith.extui %0 : i1 to i32
    %c0_i32_0 = arith.constant 0 : i32
    %2 = arith.cmpi ne, %1, %c0_i32_0 : i32
    scf.if %2 {
      %cst_9 = arith.constant 0.000000e+00 : f32
      %12 = vector.broadcast %cst_9 : f32 to vector<8x128xf32>
      %c0_10 = arith.constant 0 : index
      %c0_11 = arith.constant 0 : index
      %13 = vector.load %arg7[%c0_10, %c0_11] : memref<8x128xf32, #tpu.memory_space<vmem>>, vector<8x128xf32>
      tpu.vector_store %arg7[%c0_10, %c0_11], %12 {strides = array<i32>} : memref<8x128xf32, #tpu.memory_space<vmem>>, vector<8x128xf32>,
    } else {
    }
    %c0 = arith.constant 0 : index
    %c0_1 = arith.constant 0 : index
    %3 = vector.load %arg7[%c0, %c0_1] : memref<8x128xf32, #tpu.memory_space<vmem>>, vector<8x128xf32>
    %c0_2 = arith.constant 0 : index
    %c0_3 = arith.constant 0 : index
    %c0_4 = arith.constant 0 : index
    %4 = vector.load %arg1[%c0_2, %c0_3, %c0_4] : memref<8x64x128xbf16, #tpu.memory_space<vmem>>, vector<8x64x128xbf16>
    %5 = arith.extf %4 : vector<8x64x128xbf16> to vector<8x64x128xf32>
    %cst = arith.constant dense<0.000000e+00> : vector<8x128xf32>
    %6 = vector.multi_reduction <add>, %5, %cst [1] : vector<8x64x128xf32> to vector<8x128xf32>
    %7 = arith.addf %3, %6 : vector<8x128xf32>
    %c0_5 = arith.constant 0 : index
    %c0_6 = arith.constant 0 : index
    %8 = vector.load %arg7[%c0_5, %c0_6] : memref<8x128xf32, #tpu.memory_space<vmem>>, vector<8x128xf32>
    tpu.vector_store %arg7[%c0_5, %c0_6], %7 {strides = array<i32>} : memref<8x128xf32, #tpu.memory_space<vmem>>, vector<8x128xf32>,
    %c0_i32_7 = arith.constant 0 : i32
    %9 = arith.cmpi eq, %arg0, %c0_i32_7 : i32
    %10 = arith.extui %9 : i1 to i32
    %c0_i32_8 = arith.constant 0 : i32
    %11 = arith.cmpi ne, %10, %c0_i32_8 : i32
    scf.if %11 {
      %c0_9 = arith.constant 0 : index
      %c0_10 = arith.constant 0 : index
      %12 = vector.load %arg7[%c0_9, %c0_10] : memref<8x128xf32, #tpu.memory_space<vmem>>, vector<8x128xf32>
      %cst_11 = arith.constant 1.562500e-02 : f32
      %13 = vector.broadcast %cst_11 : f32 to vector<8x128xf32>
      %14 = arith.mulf %12, %13 : vector<8x128xf32>
      %15 = arith.truncf %14 : vector<8x128xf32> to vector<8x128xbf16>
      %c0_12 = arith.constant 0 : index
      %c0_13 = arith.constant 0 : index
      %16 = vector.load %arg2[%c0_12, %c0_13] : memref<128x256xbf16, #tpu.memory_space<vmem>>, vector<128x256xbf16>
      %cst_14 = arith.constant dense<0.000000e+00> : vector<8x256xf32>
      %17 = tpu.matmul %15, %16, %cst_14 {dimension_numbers = #tpu.dot_dimension_numbers<[1], [0], [0], [1], [0, 0, 1, 1], [], []>} : vector<8x128xbf16>, vector<128x256xbf16>, vector<8x256xf32> -> vector<8x256xf32>
      %c0_15 = arith.constant 0 : index
      %c0_16 = arith.constant 0 : index
      %18 = vector.load %arg3[%c0_15, %c0_16] : memref<1x256xf32, #tpu.memory_space<vmem>>, vector<1x256xf32>
      %19 = vector.broadcast %18 : vector<1x256xf32> to vector<8x256xf32>
      %20 = arith.addf %17, %19 : vector<8x256xf32>
      %cst_17 = arith.constant 0.000000e+00 : f32
      %21 = vector.broadcast %cst_17 : f32 to vector<8x256xf32>
      %22 = arith.maximumf %20, %21 : vector<8x256xf32>
      %23 = arith.truncf %22 : vector<8x256xf32> to vector<8x256xbf16>
      %c0_18 = arith.constant 0 : index
      %c0_19 = arith.constant 0 : index
      %24 = vector.load %arg4[%c0_18, %c0_19] : memref<256x128xbf16, #tpu.memory_space<vmem>>, vector<256x128xbf16>
      %cst_20 = arith.constant dense<0.000000e+00> : vector<8x128xf32>
      %25 = tpu.matmul %23, %24, %cst_20 {dimension_numbers = #tpu.dot_dimension_numbers<[1], [0], [0], [1], [0, 0, 1, 1], [], []>} : vector<8x256xbf16>, vector<256x128xbf16>, vector<8x128xf32> -> vector<8x128xf32>
      %c0_21 = arith.constant 0 : index
      %c0_22 = arith.constant 0 : index
      %26 = vector.load %arg5[%c0_21, %c0_22] : memref<1x128xf32, #tpu.memory_space<vmem>>, vector<1x128xf32>
      %27 = vector.broadcast %26 : vector<1x128xf32> to vector<8x128xf32>
      %28 = arith.addf %25, %27 : vector<8x128xf32>
      %c0_23 = arith.constant 0 : index
      %c0_24 = arith.constant 0 : index
      %29 = vector.load %arg6[%c0_23, %c0_24] : memref<8x128xf32, #tpu.memory_space<vmem>>, vector<8x128xf32>
      tpu.vector_store %arg6[%c0_23, %c0_24], %28 {strides = array<i32>} : memref<8x128xf32, #tpu.memory_space<vmem>>, vector<8x128xf32>,
    } else {
    }
    return
  }
  func.func @transform_0(%arg0: i32) -> (i32, i32, i32) {
    %c0_i32 = arith.constant 0 : i32
    %c0_i32_0 = arith.constant 0 : i32
    %c0_i32_1 = arith.constant 0 : i32
    return %c0_i32, %arg0, %c0_i32_0 : i32, i32, i32
  }
  func.func @transform_1(%arg0: i32) -> (i32, i32) {
    %c0_i32 = arith.constant 0 : i32
    %c0_i32_0 = arith.constant 0 : i32
    %c0_i32_1 = arith.constant 0 : i32
    return %c0_i32, %c0_i32_0 : i32, i32
  }
  func.func @transform_2(%arg0: i32) -> (i32, i32) {
    %c0_i32 = arith.constant 0 : i32
    %c0_i32_0 = arith.constant 0 : i32
    %c0_i32_1 = arith.constant 0 : i32
    return %c0_i32, %c0_i32_0 : i32, i32
  }
  func.func @transform_3(%arg0: i32) -> (i32, i32) {
    %c0_i32 = arith.constant 0 : i32
    %c0_i32_0 = arith.constant 0 : i32
    %c0_i32_1 = arith.constant 0 : i32
    return %c0_i32, %c0_i32_0 : i32, i32
  }
  func.func @transform_4(%arg0: i32) -> (i32, i32) {
    %c0_i32 = arith.constant 0 : i32
    %c0_i32_0 = arith.constant 0 : i32
    %c0_i32_1 = arith.constant 0 : i32
    return %c0_i32, %c0_i32_0 : i32, i32
  }
  func.func @transform_5(%arg0: i32) -> (i32, i32) {
    %c0_i32 = arith.constant 0 : i32
    %c0_i32_0 = arith.constant 0 : i32
    %c0_i32_1 = arith.constant 0 : i32
    return %c0_i32, %c0_i32_0 : i32, i32
  }
}

</mosaic_0001>

<llo_original>
// kernel: resnetx_feature_extractor_forward.5
$region0: #{resnetx_feature_extractor_forward.5}
  #allocation0 [shape = 'u32[]', space=smem, size = 0x4, offset = 0x4, fixed_abs, tag = 'smem constant byte address 0x4 - core index']
  #allocation1 [shape = 'u32[144,128]{1,0:T(1,128)}', space=vmem, size = 0x12000, scoped, tag = 'internal scratch']
  %s0 = inlined_call_operand.vmem [shape: bf16[512,128], index: 0, kind: input, shape index: {}]
  %s1 = inlined_call_operand.vmem [shape: bf16[128,128], index: 1, kind: input, shape index: {}]
  %s2 = inlined_call_operand.vmem [shape: f32[1,128], index: 2, kind: input, shape index: {}]
  %s3 = inlined_call_operand.vmem [shape: bf16[512,128], index: 3, kind: output, shape index: {}]
  %s4 = sld [smem:[#allocation0]]
  $region22: #{resnetx_feature_extractor_forward.5} parent=0
    _
  %s6 = ssub.s32 1, %s4
  %s7 = scalar_select 0, %s6, %s4
  // Predicated region
  $region2: #{resnetx_feature_extractor_forward.5} parent=0 // pred_check
    _
  $region3: #{resnetx_feature_extractor_forward.5} parent=0 // pred_check_branch
    %9 = sbr.rel (0) target = $region5
  $region4: #{resnetx_feature_extractor_forward.5} parent=0 // pred_region
    _
  $region5: #{resnetx_feature_extractor_forward.5} parent=0 // pred_fallthru
    _
  // Predicated region
  $region6: #{resnetx_feature_extractor_forward.5} parent=0 // pred_check
    _
  $region7: #{resnetx_feature_extractor_forward.5} parent=0 // pred_check_branch
    %11 = sbr.rel (0) target = $region9
  $region8: #{resnetx_feature_extractor_forward.5} parent=0 // pred_region
    _
  $region9: #{resnetx_feature_extractor_forward.5} parent=0 // pred_fallthru
    _
  // Predicated region
  $region10: #{resnetx_feature_extractor_forward.5} parent=0 // pred_check
    _
  $region11: #{resnetx_feature_extractor_forward.5} parent=0 // pred_check_branch
    %13 = sbr.rel (0) target = $region13
  $region12: #{resnetx_feature_extractor_forward.5} parent=0 // pred_region
    _
  $region13: #{resnetx_feature_extractor_forward.5} parent=0 // pred_fallthru
    _
  %v15 = vld [vmem:[%s0] sm:$0xf]
  %v16 = vld [vmem:[%s0 + $0x4] sm:$0xf]
  %v17 = vld [vmem:[%s0 + $0x8] sm:$0xf]
  %v18 = vld [vmem:[%s0 + $0xc] sm:$0xf]
  %v19 = vld [vmem:[%s0 + $0x10] sm:$0xf]
  %v20 = vld [vmem:[%s0 + $0x14] sm:$0xf]
  %v21 = vld [vmem:[%s0 + $0x18] sm:$0xf]
  %v22 = vld [vmem:[%s0 + $0x1c] sm:$0xf]
  %v23 = vld [vmem:[%s0 + $0x20] sm:$0xf]
  %v24 = vld [vmem:[%s0 + $0x24] sm:$0xf]
  %v25 = vld [vmem:[%s0 + $0x28] sm:$0xf]
  %v26 = vld [vmem:[%s0 + $0x2c] sm:$0xf]
  %v27 = vld [vmem:[%s0 + $0x30] sm:$0xf]
  %v28 = vld [vmem:[%s0 + $0x34] sm:$0xf]
  %v29 = vld [vmem:[%s0 + $0x38] sm:$0xf]
  %v30 = vld [vmem:[%s0 + $0x3c] sm:$0xf]
  %v31 = vld [vmem:[%s0 + $0x40] sm:$0xf]
  %v32 = vld [vmem:[%s0 + $0x44] sm:$0xf]
  %v33 = vld [vmem:[%s0 + $0x48] sm:$0xf]
  %v34 = vld [vmem:[%s0 + $0x4c] sm:$0xf]
  %v35 = vld [vmem:[%s0 + $0x50] sm:$0xf]
  %v36 = vld [vmem:[%s0 + $0x54] sm:$0xf]
  %v37 = vld [vmem:[%s0 + $0x58] sm:$0xf]
  %v38 = vld [vmem:[%s0 + $0x5c] sm:$0xf]
  %v39 = vld [vmem:[%s0 + $0x60] sm:$0xf]
  %v40 = vld [vmem:[%s0 + $0x64] sm:$0xf]
  %v41 = vld [vmem:[%s0 + $0x68] sm:$0xf]
  %v42 = vld [vmem:[%s0 + $0x6c] sm:$0xf]
  %v43 = vld [vmem:[%s0 + $0x70] sm:$0xf]
  %v44 = vld [vmem:[%s0 + $0x74] sm:$0xf]
  %v45 = vld [vmem:[%s0 + $0x78] sm:$0xf]
  %v46 = vld [vmem:[%s0 + $0x7c] sm:$0xf]
  %v47 = vld [vmem:[%s0 + $0x80] sm:$0xf]
  %v48 = vld [vmem:[%s0 + $0x84] sm:$0xf]
  %v49 = vld [vmem:[%s0 + $0x88] sm:$0xf]
  %v50 = vld [vmem:[%s0 + $0x8c] sm:$0xf]
  %v51 = vld [vmem:[%s0 + $0x90] sm:$0xf]
  %v52 = vld [vmem:[%s0 + $0x94] sm:$0xf]
  %v53 = vld [vmem:[%s0 + $0x98] sm:$0xf]
  %v54 = vld [vmem:[%s0 + $0x9c] sm:$0xf]
  %v55 = vld [vmem:[%s0 + $0xa0] sm:$0xf]
  %v56 = vld [vmem:[%s0 + $0xa4] sm:$0xf]
  %v57 = vld [vmem:[%s0 + $0xa8] sm:$0xf]
  %v58 = vld [vmem:[%s0 + $0xac] sm:$0xf]
  %v59 = vld [vmem:[%s0 + $0xb0] sm:$0xf]
  %v60 = vld [vmem:[%s0 + $0xb4] sm:$0xf]
  %v61 = vld [vmem:[%s0 + $0xb8] sm:$0xf]
  %v62 = vld [vmem:[%s0 + $0xbc] sm:$0xf]
  %v63 = vld [vmem:[%s0 + $0xc0] sm:$0xf]
  %v64 = vld [vmem:[%s0 + $0xc4] sm:$0xf]
  %v65 = vld [vmem:[%s0 + $0xc8] sm:$0xf]
  %v66 = vld [vmem:[%s0 + $0xcc] sm:$0xf]
  %v67 = vld [vmem:[%s0 + $0xd0] sm:$0xf]
  %v68 = vld [vmem:[%s0 + $0xd4] sm:$0xf]
  %v69 = vld [vmem:[%s0 + $0xd8] sm:$0xf]
  %v70 = vld [vmem:[%s0 + $0xdc] sm:$0xf]
  %v71 = vld [vmem:[%s0 + $0xe0] sm:$0xf]
  %v72 = vld [vmem:[%s0 + $0xe4] sm:$0xf]
  %v73 = vld [vmem:[%s0 + $0xe8] sm:$0xf]
  %v74 = vld [vmem:[%s0 + $0xec] sm:$0xf]
  %v75 = vld [vmem:[%s0 + $0xf0] sm:$0xf]
  %v76 = vld [vmem:[%s0 + $0xf4] sm:$0xf]
  %v77 = vld [vmem:[%s0 + $0xf8] sm:$0xf]
  %v78 = vld [vmem:[%s0 + $0xfc] sm:$0xf]
  %v79 = vld [vmem:[%s1] sm:$0xf]
  %v80 = vld [vmem:[%s1 + $0x4] sm:$0xf]
  %v81 = vld [vmem:[%s1 + $0x8] sm:$0xf]
  %v82 = vld [vmem:[%s1 + $0xc] sm:$0xf]
  %v83 = vld [vmem:[%s1 + $0x10] sm:$0xf]
  %v84 = vld [vmem:[%s1 + $0x14] sm:$0xf]
  %v85 = vld [vmem:[%s1 + $0x18] sm:$0xf]
  %v86 = vld [vmem:[%s1 + $0x1c] sm:$0xf]
  %v87 = vld [vmem:[%s1 + $0x20] sm:$0xf]
  %v88 = vld [vmem:[%s1 + $0x24] sm:$0xf]
  %v89 = vld [vmem:[%s1 + $0x28] sm:$0xf]
  %v90 = vld [vmem:[%s1 + $0x2c] sm:$0xf]
  %v91 = vld [vmem:[%s1 + $0x30] sm:$0xf]
  %v92 = vld [vmem:[%s1 + $0x34] sm:$0xf]
  %v93 = vld [vmem:[%s1 + $0x38] sm:$0xf]
  %v94 = vld [vmem:[%s1 + $0x3c] sm:$0xf]
  %v95 = vld [vmem:[%s2] sm:$0x1]
  %v97 = vlaneseq
  %v98 = vshrl.u32 %v97, 7
  %v99 = vsub.s32 0, %v98
  %v100 = vrot.slane %v95, %v99
  %v166 = vunpack.c.l.b16 %v15
  %v167 = vunpack.c.l.b16 %v16
  %v168 = vunpack.c.l.b16 %v17
  %v169 = vunpack.c.l.b16 %v18
  %v170 = vunpack.c.l.b16 %v19
  %v171 = vunpack.c.l.b16 %v20
  %v172 = vunpack.c.l.b16 %v21
  %v173 = vunpack.c.l.b16 %v22
  %v174 = vunpack.c.l.b16 %v23
  %v175 = vunpack.c.l.b16 %v24
  %v176 = vunpack.c.l.b16 %v25
  %v177 = vunpack.c.l.b16 %v26
  %v178 = vunpack.c.l.b16 %v27
  %v179 = vunpack.c.l.b16 %v28
  %v180 = vunpack.c.l.b16 %v29
  %v181 = vunpack.c.l.b16 %v30
  %v182 = vunpack.c.l.b16 %v31
  %v183 = vunpack.c.l.b16 %v32
  %v184 = vunpack.c.l.b16 %v33
  %v185 = vunpack.c.l.b16 %v34
  %v186 = vunpack.c.l.b16 %v35
  %v187 = vunpack.c.l.b16 %v36
  %v188 = vunpack.c.l.b16 %v37
  %v189 = vunpack.c.l.b16 %v38
  %v190 = vunpack.c.l.b16 %v39
  %v191 = vunpack.c.l.b16 %v40
  %v192 = vunpack.c.l.b16 %v41
  %v193 = vunpack.c.l.b16 %v42
  %v194 = vunpack.c.l.b16 %v43
  %v195 = vunpack.c.l.b16 %v44
  %v196 = vunpack.c.l.b16 %v45
  %v197 = vunpack.c.l.b16 %v46
  %v198 = vunpack.c.l.b16 %v47
  %v199 = vunpack.c.l.b16 %v48
  %v200 = vunpack.c.l.b16 %v49
  %v201 = vunpack.c.l.b16 %v50
  %v202 = vunpack.c.l.b16 %v51
  %v203 = vunpack.c.l.b16 %v52
  %v204 = vunpack.c.l.b16 %v53
  %v205 = vunpack.c.l.b16 %v54
  %v206 = vunpack.c.l.b16 %v55
  %v207 = vunpack.c.l.b16 %v56
  %v208 = vunpack.c.l.b16 %v57
  %v209 = vunpack.c.l.b16 %v58
  %v210 = vunpack.c.l.b16 %v59
  %v211 = vunpack.c.l.b16 %v60
  %v212 = vunpack.c.l.b16 %v61
  %v213 = vunpack.c.l.b16 %v62
  %v214 = vunpack.c.l.b16 %v63
  %v215 = vunpack.c.l.b16 %v64
  %v216 = vunpack.c.l.b16 %v65
  %v217 = vunpack.c.l.b16 %v66
  %v218 = vunpack.c.l.b16 %v67
  %v219 = vunpack.c.l.b16 %v68
  %v220 = vunpack.c.l.b16 %v69
  %v221 = vunpack.c.l.b16 %v70
  %v222 = vunpack.c.l.b16 %v71
  %v223 = vunpack.c.l.b16 %v72
  %v224 = vunpack.c.l.b16 %v73
  %v225 = vunpack.c.l.b16 %v74
  %v226 = vunpack.c.l.b16 %v75
  %v227 = vunpack.c.l.b16 %v76
  %v228 = vunpack.c.l.b16 %v77
  %v229 = vunpack.c.l.b16 %v78
  %v230 = vpack.c.b16 %v167, %v166
  %v231 = vpack.c.b16 %v169, %v168
  %v232 = vpack.c.b16 %v171, %v170
  %v233 = vpack.c.b16 %v173, %v172
  %v234 = vpack.c.b16 %v175, %v174
  %v235 = vpack.c.b16 %v177, %v176
  %v236 = vpack.c.b16 %v179, %v178
  %v237 = vpack.c.b16 %v181, %v180
  %v238 = vpack.c.b16 %v183, %v182
  %v239 = vpack.c.b16 %v185, %v184
  %v240 = vpack.c.b16 %v187, %v186
  %v241 = vpack.c.b16 %v189, %v188
  %v242 = vpack.c.b16 %v191, %v190
  %v243 = vpack.c.b16 %v193, %v192
  %v244 = vpack.c.b16 %v195, %v194
  %v245 = vpack.c.b16 %v197, %v196
  %v246 = vpack.c.b16 %v199, %v198
  %v247 = vpack.c.b16 %v201, %v200
  %v248 = vpack.c.b16 %v203, %v202
  %v249 = vpack.c.b16 %v205, %v204
  %v250 = vpack.c.b16 %v207, %v206
  %v251 = vpack.c.b16 %v209, %v208
  %v252 = vpack.c.b16 %v211, %v210
  %v253 = vpack.c.b16 %v213, %v212
  %v254 = vpack.c.b16 %v215, %v214
  %v255 = vpack.c.b16 %v217, %v216
  %v256 = vpack.c.b16 %v219, %v218
  %v257 = vpack.c.b16 %v221, %v220
  %v258 = vpack.c.b16 %v223, %v222
  %v259 = vpack.c.b16 %v225, %v224
  %v260 = vpack.c.b16 %v227, %v226
  %v261 = vpack.c.b16 %v229, %v228
  %v310 = vunpack.c.l.b16 %v79
  %v311 = vunpack.c.l.b16 %v80
  %v312 = vunpack.c.l.b16 %v81
  %v313 = vunpack.c.l.b16 %v82
  %v314 = vunpack.c.l.b16 %v83
  %v315 = vunpack.c.l.b16 %v84
  %v316 = vunpack.c.l.b16 %v85
  %v317 = vunpack.c.l.b16 %v86
  %v318 = vunpack.c.l.b16 %v87
  %v319 = vunpack.c.l.b16 %v88
  %v320 = vunpack.c.l.b16 %v89
  %v321 = vunpack.c.l.b16 %v90
  %v322 = vunpack.c.l.b16 %v91
  %v323 = vunpack.c.l.b16 %v92
  %v324 = vunpack.c.l.b16 %v93
  %v325 = vunpack.c.l.b16 %v94
  %v326 = vpack.c.b16 %v311, %v310
  %v327 = vpack.c.b16 %v313, %v312
  %v328 = vpack.c.b16 %v315, %v314
  %v329 = vpack.c.b16 %v317, %v316
  %v330 = vpack.c.b16 %v319, %v318
  %v331 = vpack.c.b16 %v321, %v320
  %v332 = vpack.c.b16 %v323, %v322
  %v333 = vpack.c.b16 %v325, %v324
  %342 = vmatprep.subr.bf16.mxu0 0
  %343 = vmatpush1.bf16.msra.mxu0 %v326
  %344 = vmatprep.subr.bf16.mxu0 0
  %345 = vmatpush1.bf16.msra.mxu0 %v327
  %346 = vmatprep.subr.bf16.mxu0 0
  %347 = vmatpush1.bf16.msra.mxu0 %v328
  %348 = vmatprep.subr.bf16.mxu0 0
  %349 = vmatpush1.bf16.msra.mxu0 %v329
  %350 = vmatprep.subr.bf16.mxu0 0
  %351 = vmatpush1.bf16.msra.mxu0 %v330
  %352 = vmatprep.subr.bf16.mxu0 0
  %353 = vmatpush1.bf16.msra.mxu0 %v331
  %354 = vmatprep.subr.bf16.mxu0 0
  %355 = vmatpush1.bf16.msra.mxu0 %v332
  %356 = vmatprep.subr.bf16.mxu0 0
  %357 = vmatpush1.bf16.msra.mxu0 %v333
  %358 = vmatprep.subr.bf16.mxu0 0
  %359 = vmatpush1.bf16.msra.mxu0 0
  %360 = vmatprep.subr.bf16.mxu0 0
  %361 = vmatpush1.bf16.msra.mxu0 0
  %362 = vmatprep.subr.bf16.mxu0 0
  %363 = vmatpush1.bf16.msra.mxu0 0
  %364 = vmatprep.subr.bf16.mxu0 0
  %365 = vmatpush1.bf16.msra.mxu0 0
  %366 = vmatprep.subr.bf16.mxu0 0
  %367 = vmatpush1.bf16.msra.mxu0 0
  %368 = vmatprep.subr.bf16.mxu0 0
  %369 = vmatpush1.bf16.msra.mxu0 0
  %370 = vmatprep.subr.bf16.mxu0 0
  %371 = vmatpush1.bf16.msra.mxu0 0
  %372 = vmatprep.subr.bf16.mxu0 0
  %373 = vmatpush1.bf16.msra.mxu0 0
  %374 = vmatprep.mubr.bf16.mxu0 0
  %375 = vmatmul.mubr.bf16.gmra.mrb[0].mxu0 %v230
  %v376 = vpop.f32.mrb[0].mxu0
  %v377 = vadd.f32 %v100, %v376
  %v378 = vpop.f32.mrb[0].mxu0
  %v379 = vpop.f32.mrb[0].mxu0
  %v380 = vadd.f32 %v100, %v379
  %v381 = vpop.f32.mrb[0].mxu0
  %382 = vmatprep.mubr.bf16.mxu0 0
  %383 = vmatmul.mubr.bf16.gmra.mrb[0].mxu0 %v231
  %v384 = vpop.f32.mrb[0].mxu0
  %v385 = vadd.f32 %v100, %v384
  %v386 = vpop.f32.mrb[0].mxu0
  %v387 = vpop.f32.mrb[0].mxu0
  %v388 = vadd.f32 %v100, %v387
  %v389 = vpop.f32.mrb[0].mxu0
  %390 = vmatprep.mubr.bf16.mxu0 0
  %391 = vmatmul.mubr.bf16.gmra.mrb[0].mxu0 %v232
  %v392 = vpop.f32.mrb[0].mxu0
  %v393 = vadd.f32 %v100, %v392
  %v394 = vpop.f32.mrb[0].mxu0
  %v395 = vpop.f32.mrb[0].mxu0
  %v396 = vadd.f32 %v100, %v395
  %v397 = vpop.f32.mrb[0].mxu0
  %398 = vmatprep.mubr.bf16.mxu0 0
  %399 = vmatmul.mubr.bf16.gmra.mrb[0].mxu0 %v233
  %v400 = vpop.f32.mrb[0].mxu0
  %v401 = vadd.f32 %v100, %v400
  %v402 = vpop.f32.mrb[0].mxu0
  %v403 = vpop.f32.mrb[0].mxu0
  %v404 = vadd.f32 %v100, %v403
  %v405 = vpop.f32.mrb[0].mxu0
  %406 = vmatprep.mubr.bf16.mxu0 0
  %407 = vmatmul.mubr.bf16.gmra.mrb[0].mxu0 %v234
  %v408 = vpop.f32.mrb[0].mxu0
  %v409 = vadd.f32 %v100, %v408
  %v410 = vpop.f32.mrb[0].mxu0
  %v411 = vpop.f32.mrb[0].mxu0
  %v412 = vadd.f32 %v100, %v411
  %v413 = vpop.f32.mrb[0].mxu0
  %414 = vmatprep.mubr.bf16.mxu0 0
  %415 = vmatmul.mubr.bf16.gmra.mrb[0].mxu0 %v235
  %v416 = vpop.f32.mrb[0].mxu0
  %v417 = vadd.f32 %v100, %v416
  %v418 = vpop.f32.mrb[0].mxu0
  %v419 = vpop.f32.mrb[0].mxu0
  %v420 = vadd.f32 %v100, %v419
  %v421 = vpop.f32.mrb[0].mxu0
  %422 = vmatprep.mubr.bf16.mxu0 0
  %423 = vmatmul.mubr.bf16.gmra.mrb[0].mxu0 %v236
  %v424 = vpop.f32.mrb[0].mxu0
  %v425 = vadd.f32 %v100, %v424
  %v426 = vpop.f32.mrb[0].mxu0
  %v427 = vpop.f32.mrb[0].mxu0
  %v428 = vadd.f32 %v100, %v427
  %v429 = vpop.f32.mrb[0].mxu0
  %430 = vmatprep.mubr.bf16.mxu0 0
  %431 = vmatmul.mubr.bf16.gmra.mrb[0].mxu0 %v237
  %v432 = vpop.f32.mrb[0].mxu0
  %v433 = vadd.f32 %v100, %v432
  %v434 = vpop.f32.mrb[0].mxu0
  %v435 = vpop.f32.mrb[0].mxu0
  %v436 = vadd.f32 %v100, %v435
  %v437 = vpop.f32.mrb[0].mxu0
  %438 = vmatprep.mubr.bf16.mxu0 0
  %439 = vmatmul.mubr.bf16.gmra.mrb[0].mxu0 %v238
  %v440 = vpop.f32.mrb[0].mxu0
  %v441 = vadd.f32 %v100, %v440
  %v442 = vpop.f32.mrb[0].mxu0
  %v443 = vpop.f32.mrb[0].mxu0
  %v444 = vadd.f32 %v100, %v443
  %v445 = vpop.f32.mrb[0].mxu0
  %446 = vmatprep.mubr.bf16.mxu0 0
  %447 = vmatmul.mubr.bf16.gmra.mrb[0].mxu0 %v239
  %v448 = vpop.f32.mrb[0].mxu0
  %v449 = vadd.f32 %v100, %v448
  %v450 = vpop.f32.mrb[0].mxu0
  %v451 = vpop.f32.mrb[0].mxu0
  %v452 = vadd.f32 %v100, %v451
  %v453 = vpop.f32.mrb[0].mxu0
  %454 = vmatprep.mubr.bf16.mxu0 0
  %455 = vmatmul.mubr.bf16.gmra.mrb[0].mxu0 %v240
  %v456 = vpop.f32.mrb[0].mxu0
  %v457 = vadd.f32 %v100, %v456
  %v458 = vpop.f32.mrb[0].mxu0
  %v459 = vpop.f32.mrb[0].mxu0
  %v460 = vadd.f32 %v100, %v459
  %v461 = vpop.f32.mrb[0].mxu0
  %462 = vmatprep.mubr.bf16.mxu0 0
  %463 = vmatmul.mubr.bf16.gmra.mrb[0].mxu0 %v241
  %v464 = vpop.f32.mrb[0].mxu0
  %v465 = vadd.f32 %v100, %v464
  %v466 = vpop.f32.mrb[0].mxu0
  %v467 = vpop.f32.mrb[0].mxu0
  %v468 = vadd.f32 %v100, %v467
  %v469 = vpop.f32.mrb[0].mxu0
  %470 = vmatprep.mubr.bf16.mxu0 0
  %471 = vmatmul.mubr.bf16.gmra.mrb[0].mxu0 %v242
  %v472 = vpop.f32.mrb[0].mxu0
  %v473 = vadd.f32 %v100, %v472
  %v474 = vpop.f32.mrb[0].mxu0
  %v475 = vpop.f32.mrb[0].mxu0
  %v476 = vadd.f32 %v100, %v475
  %v477 = vpop.f32.mrb[0].mxu0
  %478 = vmatprep.mubr.bf16.mxu0 0
  %479 = vmatmul.mubr.bf16.gmra.mrb[0].mxu0 %v243
  %v480 = vpop.f32.mrb[0].mxu0
  %v481 = vadd.f32 %v100, %v480
  %v482 = vpop.f32.mrb[0].mxu0
  %v483 = vpop.f32.mrb[0].mxu0
  %v484 = vadd.f32 %v100, %v483
  %v485 = vpop.f32.mrb[0].mxu0
  %486 = vmatprep.mubr.bf16.mxu0 0
  %487 = vmatmul.mubr.bf16.gmra.mrb[0].mxu0 %v244
  %v488 = vpop.f32.mrb[0].mxu0
  %v489 = vadd.f32 %v100, %v488
  %v490 = vpop.f32.mrb[0].mxu0
  %v491 = vpop.f32.mrb[0].mxu0
  %v492 = vadd.f32 %v100, %v491
  %v493 = vpop.f32.mrb[0].mxu0
  %494 = vmatprep.mubr.bf16.mxu0 0
  %495 = vmatmul.mubr.bf16.gmra.mrb[0].mxu0 %v245
  %v496 = vpop.f32.mrb[0].mxu0
  %v497 = vadd.f32 %v100, %v496
  %v498 = vpop.f32.mrb[0].mxu0
  %v499 = vpop.f32.mrb[0].mxu0
  %v500 = vadd.f32 %v100, %v499
  %v501 = vpop.f32.mrb[0].mxu0
  %502 = vmatprep.mubr.bf16.mxu0 0
  %503 = vmatmul.mubr.bf16.gmra.mrb[0].mxu0 %v246
  %v504 = vpop.f32.mrb[0].mxu0
  %v505 = vadd.f32 %v100, %v504
  %v506 = vpop.f32.mrb[0].mxu0
  %v507 = vpop.f32.mrb[0].mxu0
  %v508 = vadd.f32 %v100, %v507
  %v509 = vpop.f32.mrb[0].mxu0
  %510 = vmatprep.mubr.bf16.mxu0 0
  %511 = vmatmul.mubr.bf16.gmra.mrb[0].mxu0 %v247
  %v512 = vpop.f32.mrb[0].mxu0
  %v513 = vadd.f32 %v100, %v512
  %v514 = vpop.f32.mrb[0].mxu0
  %v515 = vpop.f32.mrb[0].mxu0
  %v516 = vadd.f32 %v100, %v515
  %v517 = vpop.f32.mrb[0].mxu0
  %518 = vmatprep.mubr.bf16.mxu0 0
  %519 = vmatmul.mubr.bf16.gmra.mrb[0].mxu0 %v248
  %v520 = vpop.f32.mrb[0].mxu0
  %v521 = vadd.f32 %v100, %v520
  %v522 = vpop.f32.mrb[0].mxu0
  %v523 = vpop.f32.mrb[0].mxu0
  %v524 = vadd.f32 %v100, %v523
  %v525 = vpop.f32.mrb[0].mxu0
  %526 = vmatprep.mubr.bf16.mxu0 0
  %527 = vmatmul.mubr.bf16.gmra.mrb[0].mxu0 %v249
  %v528 = vpop.f32.mrb[0].mxu0
  %v529 = vadd.f32 %v100, %v528
  %v530 = vpop.f32.mrb[0].mxu0
  %v531 = vpop.f32.mrb[0].mxu0
  %v532 = vadd.f32 %v100, %v531
  %v533 = vpop.f32.mrb[0].mxu0
  %534 = vmatprep.mubr.bf16.mxu0 0
  %535 = vmatmul.mubr.bf16.gmra.mrb[0].mxu0 %v250
  %v536 = vpop.f32.mrb[0].mxu0
  %v537 = vadd.f32 %v100, %v536
  %v538 = vpop.f32.mrb[0].mxu0
  %v539 = vpop.f32.mrb[0].mxu0
  %v540 = vadd.f32 %v100, %v539
  %v541 = vpop.f32.mrb[0].mxu0
  %542 = vmatprep.mubr.bf16.mxu0 0
  %543 = vmatmul.mubr.bf16.gmra.mrb[0].mxu0 %v251
  %v544 = vpop.f32.mrb[0].mxu0
  %v545 = vadd.f32 %v100, %v544
  %v546 = vpop.f32.mrb[0].mxu0
  %v547 = vpop.f32.mrb[0].mxu0
  %v548 = vadd.f32 %v100, %v547
  %v549 = vpop.f32.mrb[0].mxu0
  %550 = vmatprep.mubr.bf16.mxu0 0
  %551 = vmatmul.mubr.bf16.gmra.mrb[0].mxu0 %v252
  %v552 = vpop.f32.mrb[0].mxu0
  %v553 = vadd.f32 %v100, %v552
  %v554 = vpop.f32.mrb[0].mxu0
  %v555 = vpop.f32.mrb[0].mxu0
  %v556 = vadd.f32 %v100, %v555
  %v557 = vpop.f32.mrb[0].mxu0
  %558 = vmatprep.mubr.bf16.mxu0 0
  %559 = vmatmul.mubr.bf16.gmra.mrb[0].mxu0 %v253
  %v560 = vpop.f32.mrb[0].mxu0
  %v561 = vadd.f32 %v100, %v560
  %v562 = vpop.f32.mrb[0].mxu0
  %v563 = vpop.f32.mrb[0].mxu0
  %v564 = vadd.f32 %v100, %v563
  %v565 = vpop.f32.mrb[0].mxu0
  %566 = vmatprep.mubr.bf16.mxu0 0
  %567 = vmatmul.mubr.bf16.gmra.mrb[0].mxu0 %v254
  %v568 = vpop.f32.mrb[0].mxu0
  %v569 = vadd.f32 %v100, %v568
  %v570 = vpop.f32.mrb[0].mxu0
  %v571 = vpop.f32.mrb[0].mxu0
  %v572 = vadd.f32 %v100, %v571
  %v573 = vpop.f32.mrb[0].mxu0
  %574 = vmatprep.mubr.bf16.mxu0 0
  %575 = vmatmul.mubr.bf16.gmra.mrb[0].mxu0 %v255
  %v576 = vpop.f32.mrb[0].mxu0
  %v577 = vadd.f32 %v100, %v576
  %v578 = vpop.f32.mrb[0].mxu0
  %v579 = vpop.f32.mrb[0].mxu0
  %v580 = vadd.f32 %v100, %v579
  %v581 = vpop.f32.mrb[0].mxu0
  %582 = vmatprep.mubr.bf16.mxu0 0
  %583 = vmatmul.mubr.bf16.gmra.mrb[0].mxu0 %v256
  %v584 = vpop.f32.mrb[0].mxu0
  %v585 = vadd.f32 %v100, %v584
  %v586 = vpop.f32.mrb[0].mxu0
  %v587 = vpop.f32.mrb[0].mxu0
  %v588 = vadd.f32 %v100, %v587
  %v589 = vpop.f32.mrb[0].mxu0
  %590 = vmatprep.mubr.bf16.mxu0 0
  %591 = vmatmul.mubr.bf16.gmra.mrb[0].mxu0 %v257
  %v592 = vpop.f32.mrb[0].mxu0
  %v593 = vadd.f32 %v100, %v592
  %v594 = vpop.f32.mrb[0].mxu0
  %v595 = vpop.f32.mrb[0].mxu0
  %v596 = vadd.f32 %v100, %v595
  %v597 = vpop.f32.mrb[0].mxu0
  %598 = vmatprep.mubr.bf16.mxu0 0
  %599 = vmatmul.mubr.bf16.gmra.mrb[0].mxu0 %v258
  %v600 = vpop.f32.mrb[0].mxu0
  %v601 = vadd.f32 %v100, %v600
  %v602 = vpop.f32.mrb[0].mxu0
  %v603 = vpop.f32.mrb[0].mxu0
  %v604 = vadd.f32 %v100, %v603
  %v605 = vpop.f32.mrb[0].mxu0
  %606 = vmatprep.mubr.bf16.mxu0 0
  %607 = vmatmul.mubr.bf16.gmra.mrb[0].mxu0 %v259
  %v608 = vpop.f32.mrb[0].mxu0
  %v609 = vadd.f32 %v100, %v608
  %v610 = vpop.f32.mrb[0].mxu0
  %v611 = vpop.f32.mrb[0].mxu0
  %v612 = vadd.f32 %v100, %v611
  %v613 = vpop.f32.mrb[0].mxu0
  %614 = vmatprep.mubr.bf16.mxu0 0
  %615 = vmatmul.mubr.bf16.gmra.mrb[0].mxu0 %v260
  %v616 = vpop.f32.mrb[0].mxu0
  %v617 = vadd.f32 %v100, %v616
  %v618 = vpop.f32.mrb[0].mxu0
  %v619 = vpop.f32.mrb[0].mxu0
  %v620 = vadd.f32 %v100, %v619
  %v621 = vpop.f32.mrb[0].mxu0
  %622 = vmatprep.mubr.bf16.mxu0 0
  %623 = vmatmul.mubr.bf16.gmra.mrb[0].mxu0 %v261
  %v624 = vpop.f32.mrb[0].mxu0
  %v625 = vadd.f32 %v100, %v624
  %v626 = vpop.f32.mrb[0].mxu0
  %v627 = vpop.f32.mrb[0].mxu0
  %v628 = vadd.f32 %v100, %v627
  %v629 = vpop.f32.mrb[0].mxu0
  %630 = vdwg.mxu0
  %v631 = vmax.f32 %v377, 0.0
  %v632 = vmax.f32 %v380, 0.0
  %v633 = vmax.f32 %v385, 0.0
  %v634 = vmax.f32 %v388, 0.0
  %v635 = vmax.f32 %v393, 0.0
  %v636 = vmax.f32 %v396, 0.0
  %v637 = vmax.f32 %v401, 0.0
  %v638 = vmax.f32 %v404, 0.0
  %v639 = vmax.f32 %v409, 0.0
  %v640 = vmax.f32 %v412, 0.0
  %v641 = vmax.f32 %v417, 0.0
  %v642 = vmax.f32 %v420, 0.0
  %v643 = vmax.f32 %v425, 0.0
  %v644 = vmax.f32 %v428, 0.0
  %v645 = vmax.f32 %v433, 0.0
  %v646 = vmax.f32 %v436, 0.0
  %v647 = vmax.f32 %v441, 0.0
  %v648 = vmax.f32 %v444, 0.0
  %v649 = vmax.f32 %v449, 0.0
  %v650 = vmax.f32 %v452, 0.0
  %v651 = vmax.f32 %v457, 0.0
  %v652 = vmax.f32 %v460, 0.0
  %v653 = vmax.f32 %v465, 0.0
  %v654 = vmax.f32 %v468, 0.0
  %v655 = vmax.f32 %v473, 0.0
  %v656 = vmax.f32 %v476, 0.0
  %v657 = vmax.f32 %v481, 0.0
  %v658 = vmax.f32 %v484, 0.0
  %v659 = vmax.f32 %v489, 0.0
  %v660 = vmax.f32 %v492, 0.0
  %v661 = vmax.f32 %v497, 0.0
  %v662 = vmax.f32 %v500, 0.0
  %v663 = vmax.f32 %v505, 0.0
  %v664 = vmax.f32 %v508, 0.0
  %v665 = vmax.f32 %v513, 0.0
  %v666 = vmax.f32 %v516, 0.0
  %v667 = vmax.f32 %v521, 0.0
  %v668 = vmax.f32 %v524, 0.0
  %v669 = vmax.f32 %v529, 0.0
  %v670 = vmax.f32 %v532, 0.0
  %v671 = vmax.f32 %v537, 0.0
  %v672 = vmax.f32 %v540, 0.0
  %v673 = vmax.f32 %v545, 0.0
  %v674 = vmax.f32 %v548, 0.0
  %v675 = vmax.f32 %v553, 0.0
  %v676 = vmax.f32 %v556, 0.0
  %v677 = vmax.f32 %v561, 0.0
  %v678 = vmax.f32 %v564, 0.0
  %v679 = vmax.f32 %v569, 0.0
  %v680 = vmax.f32 %v572, 0.0
  %v681 = vmax.f32 %v577, 0.0
  %v682 = vmax.f32 %v580, 0.0
  %v683 = vmax.f32 %v585, 0.0
  %v684 = vmax.f32 %v588, 0.0
  %v685 = vmax.f32 %v593, 0.0
  %v686 = vmax.f32 %v596, 0.0
  %v687 = vmax.f32 %v601, 0.0
  %v688 = vmax.f32 %v604, 0.0
  %v689 = vmax.f32 %v609, 0.0
  %v690 = vmax.f32 %v612, 0.0
  %v691 = vmax.f32 %v617, 0.0
  %v692 = vmax.f32 %v620, 0.0
  %v693 = vmax.f32 %v625, 0.0
  %v694 = vmax.f32 %v628, 0.0
  %v695 = vpack.c.bf16 %v632, %v631
  %v696 = vpack.c.bf16 %v634, %v633
  %v697 = vpack.c.bf16 %v636, %v635
  %v698 = vpack.c.bf16 %v638, %v637
  %v699 = vpack.c.bf16 %v640, %v639
  %v700 = vpack.c.bf16 %v642, %v641
  %v701 = vpack.c.bf16 %v644, %v643
  %v702 = vpack.c.bf16 %v646, %v645
  %v703 = vpack.c.bf16 %v648, %v647
  %v704 = vpack.c.bf16 %v650, %v649
  %v705 = vpack.c.bf16 %v652, %v651
  %v706 = vpack.c.bf16 %v654, %v653
  %v707 = vpack.c.bf16 %v656, %v655
  %v708 = vpack.c.bf16 %v658, %v657
  %v709 = vpack.c.bf16 %v660, %v659
  %v710 = vpack.c.bf16 %v662, %v661
  %v711 = vpack.c.bf16 %v664, %v663
  %v712 = vpack.c.bf16 %v666, %v665
  %v713 = vpack.c.bf16 %v668, %v667
  %v714 = vpack.c.bf16 %v670, %v669
  %v715 = vpack.c.bf16 %v672, %v671
  %v716 = vpack.c.bf16 %v674, %v673
  %v717 = vpack.c.bf16 %v676, %v675
  %v718 = vpack.c.bf16 %v678, %v677
  %v719 = vpack.c.bf16 %v680, %v679
  %v720 = vpack.c.bf16 %v682, %v681
  %v721 = vpack.c.bf16 %v684, %v683
  %v722 = vpack.c.bf16 %v686, %v685
  %v723 = vpack.c.bf16 %v688, %v687
  %v724 = vpack.c.bf16 %v690, %v689
  %v725 = vpack.c.bf16 %v692, %v691
  %v726 = vpack.c.bf16 %v694, %v693
  %v759 = vunpack.c.l.b16 %v695
  %v760 = vunpack.c.h.b16 %v695
  %v761 = vunpack.c.l.b16 %v696
  %v762 = vunpack.c.h.b16 %v696
  %v763 = vunpack.c.l.b16 %v697
  %v764 = vunpack.c.h.b16 %v697
  %v765 = vunpack.c.l.b16 %v698
  %v766 = vunpack.c.h.b16 %v698
  %v767 = vunpack.c.l.b16 %v699
  %v768 = vunpack.c.h.b16 %v699
  %v769 = vunpack.c.l.b16 %v700
  %v770 = vunpack.c.h.b16 %v700
  %v771 = vunpack.c.l.b16 %v701
  %v772 = vunpack.c.h.b16 %v701
  %v773 = vunpack.c.l.b16 %v702
  %v774 = vunpack.c.h.b16 %v702
  %v775 = vunpack.c.l.b16 %v703
  %v776 = vunpack.c.h.b16 %v703
  %v777 = vunpack.c.l.b16 %v704
  %v778 = vunpack.c.h.b16 %v704
  %v779 = vunpack.c.l.b16 %v705
  %v780 = vunpack.c.h.b16 %v705
  %v781 = vunpack.c.l.b16 %v706
  %v782 = vunpack.c.h.b16 %v706
  %v783 = vunpack.c.l.b16 %v707
  %v784 = vunpack.c.h.b16 %v707
  %v785 = vunpack.c.l.b16 %v708
  %v786 = vunpack.c.h.b16 %v708
  %v787 = vunpack.c.l.b16 %v709
  %v788 = vunpack.c.h.b16 %v709
  %v789 = vunpack.c.l.b16 %v710
  %v790 = vunpack.c.h.b16 %v710
  %v791 = vunpack.c.l.b16 %v711
  %v792 = vunpack.c.h.b16 %v711
  %v793 = vunpack.c.l.b16 %v712
  %v794 = vunpack.c.h.b16 %v712
  %v795 = vunpack.c.l.b16 %v713
  %v796 = vunpack.c.h.b16 %v713
  %v797 = vunpack.c.l.b16 %v714
  %v798 = vunpack.c.h.b16 %v714
  %v799 = vunpack.c.l.b16 %v715
  %v800 = vunpack.c.h.b16 %v715
  %v801 = vunpack.c.l.b16 %v716
  %v802 = vunpack.c.h.b16 %v716
  %v803 = vunpack.c.l.b16 %v717
  %v804 = vunpack.c.h.b16 %v717
  %v805 = vunpack.c.l.b16 %v718
  %v806 = vunpack.c.h.b16 %v718
  %v807 = vunpack.c.l.b16 %v719
  %v808 = vunpack.c.h.b16 %v719
  %v809 = vunpack.c.l.b16 %v720
  %v810 = vunpack.c.h.b16 %v720
  %v811 = vunpack.c.l.b16 %v721
  %v812 = vunpack.c.h.b16 %v721
  %v813 = vunpack.c.l.b16 %v722
  %v814 = vunpack.c.h.b16 %v722
  %v815 = vunpack.c.l.b16 %v723
  %v816 = vunpack.c.h.b16 %v723
  %v817 = vunpack.c.l.b16 %v724
  %v818 = vunpack.c.h.b16 %v724
  %v819 = vunpack.c.l.b16 %v725
  %v820 = vunpack.c.h.b16 %v725
  %v821 = vunpack.c.l.b16 %v726
  %v822 = vunpack.c.h.b16 %v726
  %v823 = vpack.c.b16 %v759, %v759
  %v824 = vpack.c.b16 %v760, %v760
  %v825 = vpack.c.b16 %v761, %v761
  %v826 = vpack.c.b16 %v762, %v762
  %v827 = vpack.c.b16 %v763, %v763
  %v828 = vpack.c.b16 %v764, %v764
  %v829 = vpack.c.b16 %v765, %v765
  %v830 = vpack.c.b16 %v766, %v766
  %v831 = vpack.c.b16 %v767, %v767
  %v832 = vpack.c.b16 %v768, %v768
  %v833 = vpack.c.b16 %v769, %v769
  %v834 = vpack.c.b16 %v770, %v770
  %v835 = vpack.c.b16 %v771, %v771
  %v836 = vpack.c.b16 %v772, %v772
  %v837 = vpack.c.b16 %v773, %v773
  %v838 = vpack.c.b16 %v774, %v774
  %v839 = vpack.c.b16 %v775, %v775
  %v840 = vpack.c.b16 %v776, %v776
  %v841 = vpack.c.b16 %v777, %v777
  %v842 = vpack.c.b16 %v778, %v778
  %v843 = vpack.c.b16 %v779, %v779
  %v844 = vpack.c.b16 %v780, %v780
  %v845 = vpack.c.b16 %v781, %v781
  %v846 = vpack.c.b16 %v782, %v782
  %v847 = vpack.c.b16 %v783, %v783
  %v848 = vpack.c.b16 %v784, %v784
  %v849 = vpack.c.b16 %v785, %v785
  %v850 = vpack.c.b16 %v786, %v786
  %v851 = vpack.c.b16 %v787, %v787
  %v852 = vpack.c.b16 %v788, %v788
  %v853 = vpack.c.b16 %v789, %v789
  %v854 = vpack.c.b16 %v790, %v790
  %v855 = vpack.c.b16 %v791, %v791
  %v856 = vpack.c.b16 %v792, %v792
  %v857 = vpack.c.b16 %v793, %v793
  %v858 = vpack.c.b16 %v794, %v794
  %v859 = vpack.c.b16 %v795, %v795
  %v860 = vpack.c.b16 %v796, %v796
  %v861 = vpack.c.b16 %v797, %v797
  %v862 = vpack.c.b16 %v798, %v798
  %v863 = vpack.c.b16 %v799, %v799
  %v864 = vpack.c.b16 %v800, %v800
  %v865 = vpack.c.b16 %v801, %v801
  %v866 = vpack.c.b16 %v802, %v802
  %v867 = vpack.c.b16 %v803, %v803
  %v868 = vpack.c.b16 %v804, %v804
  %v869 = vpack.c.b16 %v805, %v805
  %v870 = vpack.c.b16 %v806, %v806
  %v871 = vpack.c.b16 %v807, %v807
  %v872 = vpack.c.b16 %v808, %v808
  %v873 = vpack.c.b16 %v809, %v809
  %v874 = vpack.c.b16 %v810, %v810
  %v875 = vpack.c.b16 %v811, %v811
  %v876 = vpack.c.b16 %v812, %v812
  %v877 = vpack.c.b16 %v813, %v813
  %v878 = vpack.c.b16 %v814, %v814
  %v879 = vpack.c.b16 %v815, %v815
  %v880 = vpack.c.b16 %v816, %v816
  %v881 = vpack.c.b16 %v817, %v817
  %v882 = vpack.c.b16 %v818, %v818
  %v883 = vpack.c.b16 %v819, %v819
  %v884 = vpack.c.b16 %v820, %v820
  %v885 = vpack.c.b16 %v821, %v821
  %v886 = vpack.c.b16 %v822, %v822
  %951 = vst [vmem:[%s3] sm:$0xf] %v823
  %952 = vst [vmem:[%s3 + $0x4] sm:$0xf] %v824
  %953 = vst [vmem:[%s3 + $0x8] sm:$0xf] %v825
  %954 = vst [vmem:[%s3 + $0xc] sm:$0xf] %v826
  %955 = vst [vmem:[%s3 + $0x10] sm:$0xf] %v827
  %956 = vst [vmem:[%s3 + $0x14] sm:$0xf] %v828
  %957 = vst [vmem:[%s3 + $0x18] sm:$0xf] %v829
  %958 = vst [vmem:[%s3 + $0x1c] sm:$0xf] %v830
  %959 = vst [vmem:[%s3 + $0x20] sm:$0xf] %v831
  %960 = vst [vmem:[%s3 + $0x24] sm:$0xf] %v832
  %961 = vst [vmem:[%s3 + $0x28] sm:$0xf] %v833
  %962 = vst [vmem:[%s3 + $0x2c] sm:$0xf] %v834
  %963 = vst [vmem:[%s3 + $0x30] sm:$0xf] %v835
  %964 = vst [vmem:[%s3 + $0x34] sm:$0xf] %v836
  %965 = vst [vmem:[%s3 + $0x38] sm:$0xf] %v837
  %966 = vst [vmem:[%s3 + $0x3c] sm:$0xf] %v838
  %967 = vst [vmem:[%s3 + $0x40] sm:$0xf] %v839
  %968 = vst [vmem:[%s3 + $0x44] sm:$0xf] %v840
  %969 = vst [vmem:[%s3 + $0x48] sm:$0xf] %v841
  %970 = vst [vmem:[%s3 + $0x4c] sm:$0xf] %v842
  %971 = vst [vmem:[%s3 + $0x50] sm:$0xf] %v843
  %972 = vst [vmem:[%s3 + $0x54] sm:$0xf] %v844
  %973 = vst [vmem:[%s3 + $0x58] sm:$0xf] %v845
  %974 = vst [vmem:[%s3 + $0x5c] sm:$0xf] %v846
  %975 = vst [vmem:[%s3 + $0x60] sm:$0xf] %v847
  %976 = vst [vmem:[%s3 + $0x64] sm:$0xf] %v848
  %977 = vst [vmem:[%s3 + $0x68] sm:$0xf] %v849
  %978 = vst [vmem:[%s3 + $0x6c] sm:$0xf] %v850
  %979 = vst [vmem:[%s3 + $0x70] sm:$0xf] %v851
  %980 = vst [vmem:[%s3 + $0x74] sm:$0xf] %v852
  %981 = vst [vmem:[%s3 + $0x78] sm:$0xf] %v853
  %982 = vst [vmem:[%s3 + $0x7c] sm:$0xf] %v854
  %983 = vst [vmem:[%s3 + $0x80] sm:$0xf] %v855
  %984 = vst [vmem:[%s3 + $0x84] sm:$0xf] %v856
  %985 = vst [vmem:[%s3 + $0x88] sm:$0xf] %v857
  %986 = vst [vmem:[%s3 + $0x8c] sm:$0xf] %v858
  %987 = vst [vmem:[%s3 + $0x90] sm:$0xf] %v859
  %988 = vst [vmem:[%s3 + $0x94] sm:$0xf] %v860
  %989 = vst [vmem:[%s3 + $0x98] sm:$0xf] %v861
  %990 = vst [vmem:[%s3 + $0x9c] sm:$0xf] %v862
  %991 = vst [vmem:[%s3 + $0xa0] sm:$0xf] %v863
  %992 = vst [vmem:[%s3 + $0xa4] sm:$0xf] %v864
  %993 = vst [vmem:[%s3 + $0xa8] sm:$0xf] %v865
  %994 = vst [vmem:[%s3 + $0xac] sm:$0xf] %v866
  %995 = vst [vmem:[%s3 + $0xb0] sm:$0xf] %v867
  %996 = vst [vmem:[%s3 + $0xb4] sm:$0xf] %v868
  %997 = vst [vmem:[%s3 + $0xb8] sm:$0xf] %v869
  %998 = vst [vmem:[%s3 + $0xbc] sm:$0xf] %v870
  %999 = vst [vmem:[%s3 + $0xc0] sm:$0xf] %v871
  %1000 = vst [vmem:[%s3 + $0xc4] sm:$0xf] %v872
  %1001 = vst [vmem:[%s3 + $0xc8] sm:$0xf] %v873
  %1002 = vst [vmem:[%s3 + $0xcc] sm:$0xf] %v874
  %1003 = vst [vmem:[%s3 + $0xd0] sm:$0xf] %v875
  %1004 = vst [vmem:[%s3 + $0xd4] sm:$0xf] %v876
  %1005 = vst [vmem:[%s3 + $0xd8] sm:$0xf] %v877
  %1006 = vst [vmem:[%s3 + $0xdc] sm:$0xf] %v878
  %1007 = vst [vmem:[%s3 + $0xe0] sm:$0xf] %v879
  %1008 = vst [vmem:[%s3 + $0xe4] sm:$0xf] %v880
  %1009 = vst [vmem:[%s3 + $0xe8] sm:$0xf] %v881
  %1010 = vst [vmem:[%s3 + $0xec] sm:$0xf] %v882
  %1011 = vst [vmem:[%s3 + $0xf0] sm:$0xf] %v883
  %1012 = vst [vmem:[%s3 + $0xf4] sm:$0xf] %v884
  %1013 = vst [vmem:[%s3 + $0xf8] sm:$0xf] %v885
  %1014 = vst [vmem:[%s3 + $0xfc] sm:$0xf] %v886
  // Predicated region
  $region14: #{resnetx_feature_extractor_forward.5} parent=0 // pred_check
    _
  $region15: #{resnetx_feature_extractor_forward.5} parent=0 // pred_check_branch
    %1016 = sbr.rel (0) target = $region17
  $region16: #{resnetx_feature_extractor_forward.5} parent=0 // pred_region
    _
  $region17: #{resnetx_feature_extractor_forward.5} parent=0 // pred_fallthru
    _
  // Predicated region
  $region18: #{resnetx_feature_extractor_forward.5} parent=0 // pred_check
    _
  $region19: #{resnetx_feature_extractor_forward.5} parent=0 // pred_check_branch
    %1018 = sbr.rel (0) target = $region21
  $region20: #{resnetx_feature_extractor_forward.5} parent=0 // pred_region
    _
  $region21: #{resnetx_feature_extractor_forward.5} parent=0 // pred_fallthru
    _

// kernel: resnetx_feature_extractor_forward.6
$region0: #{resnetx_feature_extractor_forward.6}
  #allocation0 [shape = 'u32[]', space=smem, size = 0x4, offset = 0x4, fixed_abs, tag = 'smem constant byte address 0x4 - core index']
  #allocation1 [shape = 'u32[144,128]{1,0:T(1,128)}', space=vmem, size = 0x12000, scoped, tag = 'internal scratch']
  %s0 = inlined_call_operand.vmem [shape: bf16[512,384], index: 0, kind: input, shape index: {}]
  %s1 = inlined_call_operand.vmem [shape: bf16[384,128], index: 1, kind: input, shape index: {}]
  %s2 = inlined_call_operand.vmem [shape: f32[1,128], index: 2, kind: input, shape index: {}]
  %s3 = inlined_call_operand.vmem [shape: bf16[512,128], index: 3, kind: output, shape index: {}]
  %s4 = sld [smem:[#allocation0]]
  $region22: #{resnetx_feature_extractor_forward.6} parent=0
    _
  %s6 = ssub.s32 1, %s4
  %s7 = scalar_select 0, %s6, %s4
  // Predicated region
  $region2: #{resnetx_feature_extractor_forward.6} parent=0 // pred_check
    _
  $region3: #{resnetx_feature_extractor_forward.6} parent=0 // pred_check_branch
    %9 = sbr.rel (0) target = $region5
  $region4: #{resnetx_feature_extractor_forward.6} parent=0 // pred_region
    _
  $region5: #{resnetx_feature_extractor_forward.6} parent=0 // pred_fallthru
    _
  // Predicated region
  $region6: #{resnetx_feature_extractor_forward.6} parent=0 // pred_check
    _
  $region7: #{resnetx_feature_extractor_forward.6} parent=0 // pred_check_branch
    %11 = sbr.rel (0) target = $region9
  $region8: #{resnetx_feature_extractor_forward.6} parent=0 // pred_region
    _
  $region9: #{resnetx_feature_extractor_forward.6} parent=0 // pred_fallthru
    _
  // Predicated region
  $region10: #{resnetx_feature_extractor_forward.6} parent=0 // pred_check
    _
  $region11: #{resnetx_feature_extractor_forward.6} parent=0 // pred_check_branch
    %13 = sbr.rel (0) target = $region13
  $region12: #{resnetx_feature_extractor_forward.6} parent=0 // pred_region
    _
  $region13: #{resnetx_feature_extractor_forward.6} parent=0 // pred_fallthru
    _
  %v15 = vld [vmem:[%s0] sm:$0xff]
  %v16 = vld [vmem:[%s0 + $0x8] sm:$0xf]
  %v17 = vld [vmem:[%s0 + $0xc] sm:$0xff]
  %v18 = vld [vmem:[%s0 + $0x14] sm:$0xf]
  %v19 = vld [vmem:[%s0 + $0x18] sm:$0xff]
  %v20 = vld [vmem:[%s0 + $0x20] sm:$0xf]
  %v21 = vld [vmem:[%s0 + $0x24] sm:$0xff]
  %v22 = vld [vmem:[%s0 + $0x2c] sm:$0xf]
  %v23 = vld [vmem:[%s0 + $0x30] sm:$0xff]
  %v24 = vld [vmem:[%s0 + $0x38] sm:$0xf]
  %v25 = vld [vmem:[%s0 + $0x3c] sm:$0xff]
  %v26 = vld [vmem:[%s0 + $0x44] sm:$0xf]
  %v27 = vld [vmem:[%s0 + $0x48] sm:$0xff]
  %v28 = vld [vmem:[%s0 + $0x50] sm:$0xf]
  %v29 = vld [vmem:[%s0 + $0x54] sm:$0xff]
  %v30 = vld [vmem:[%s0 + $0x5c] sm:$0xf]
  %v31 = vld [vmem:[%s0 + $0x60] sm:$0xff]
  %v32 = vld [vmem:[%s0 + $0x68] sm:$0xf]
  %v33 = vld [vmem:[%s0 + $0x6c] sm:$0xff]
  %v34 = vld [vmem:[%s0 + $0x74] sm:$0xf]
  %v35 = vld [vmem:[%s0 + $0x78] sm:$0xff]
  %v36 = vld [vmem:[%s0 + $0x80] sm:$0xf]
  %v37 = vld [vmem:[%s0 + $0x84] sm:$0xff]
  %v38 = vld [vmem:[%s0 + $0x8c] sm:$0xf]
  %v39 = vld [vmem:[%s0 + $0x90] sm:$0xff]
  %v40 = vld [vmem:[%s0 + $0x98] sm:$0xf]
  %v41 = vld [vmem:[%s0 + $0x9c] sm:$0xff]
  %v42 = vld [vmem:[%s0 + $0xa4] sm:$0xf]
  %v43 = vld [vmem:[%s0 + $0xa8] sm:$0xff]
  %v44 = vld [vmem:[%s0 + $0xb0] sm:$0xf]
  %v45 = vld [vmem:[%s0 + $0xb4] sm:$0xff]
  %v46 = vld [vmem:[%s0 + $0xbc] sm:$0xf]
  %v47 = vld [vmem:[%s0 + $0xc0] sm:$0xff]
  %v48 = vld [vmem:[%s0 + $0xc8] sm:$0xf]
  %v49 = vld [vmem:[%s0 + $0xcc] sm:$0xff]
  %v50 = vld [vmem:[%s0 + $0xd4] sm:$0xf]
  %v51 = vld [vmem:[%s0 + $0xd8] sm:$0xff]
  %v52 = vld [vmem:[%s0 + $0xe0] sm:$0xf]
  %v53 = vld [vmem:[%s0 + $0xe4] sm:$0xff]
  %v54 = vld [vmem:[%s0 + $0xec] sm:$0xf]
  %v55 = vld [vmem:[%s0 + $0xf0] sm:$0xff]
  %v56 = vld [vmem:[%s0 + $0xf8] sm:$0xf]
  %v57 = vld [vmem:[%s0 + $0xfc] sm:$0xff]
  %v58 = vld [vmem:[%s0 + $0x104] sm:$0xf]
  %v59 = vld [vmem:[%s0 + $0x108] sm:$0xff]
  %v60 = vld [vmem:[%s0 + $0x110] sm:$0xf]
  %v61 = vld [vmem:[%s0 + $0x114] sm:$0xff]
  %v62 = vld [vmem:[%s0 + $0x11c] sm:$0xf]
  %v63 = vld [vmem:[%s0 + $0x120] sm:$0xff]
  %v64 = vld [vmem:[%s0 + $0x128] sm:$0xf]
  %v65 = vld [vmem:[%s0 + $0x12c] sm:$0xff]
  %v66 = vld [vmem:[%s0 + $0x134] sm:$0xf]
  %v67 = vld [vmem:[%s0 + $0x138] sm:$0xff]
  %v68 = vld [vmem:[%s0 + $0x140] sm:$0xf]
  %v69 = vld [vmem:[%s0 + $0x144] sm:$0xff]
  %v70 = vld [vmem:[%s0 + $0x14c] sm:$0xf]
  %v71 = vld [vmem:[%s0 + $0x150] sm:$0xff]
  %v72 = vld [vmem:[%s0 + $0x158] sm:$0xf]
  %v73 = vld [vmem:[%s0 + $0x15c] sm:$0xff]
  %v74 = vld [vmem:[%s0 + $0x164] sm:$0xf]
  %v75 = vld [vmem:[%s0 + $0x168] sm:$0xff]
  %v76 = vld [vmem:[%s0 + $0x170] sm:$0xf]
  %v77 = vld [vmem:[%s0 + $0x174] sm:$0xff]
  %v78 = vld [vmem:[%s0 + $0x17c] sm:$0xf]
  %v79 = vld [vmem:[%s0 + $0x180] sm:$0xff]
  %v80 = vld [vmem:[%s0 + $0x188] sm:$0xf]
  %v81 = vld [vmem:[%s0 + $0x18c] sm:$0xff]
  %v82 = vld [vmem:[%s0 + $0x194] sm:$0xf]
  %v83 = vld [vmem:[%s0 + $0x198] sm:$0xff]
  %v84 = vld [vmem:[%s0 + $0x1a0] sm:$0xf]
  %v85 = vld [vmem:[%s0 + $0x1a4] sm:$0xff]
  %v86 = vld [vmem:[%s0 + $0x1ac] sm:$0xf]
  %v87 = vld [vmem:[%s0 + $0x1b0] sm:$0xff]
  %v88 = vld [vmem:[%s0 + $0x1b8] sm:$0xf]
  %v89 = vld [vmem:[%s0 + $0x1bc] sm:$0xff]
  %v90 = vld [vmem:[%s0 + $0x1c4] sm:$0xf]
  %v91 = vld [vmem:[%s0 + $0x1c8] sm:$0xff]
  %v92 = vld [vmem:[%s0 + $0x1d0] sm:$0xf]
  %v93 = vld [vmem:[%s0 + $0x1d4] sm:$0xff]
  %v94 = vld [vmem:[%s0 + $0x1dc] sm:$0xf]
  %v95 = vld [vmem:[%s0 + $0x1e0] sm:$0xff]
  %v96 = vld [vmem:[%s0 + $0x1e8] sm:$0xf]
  %v97 = vld [vmem:[%s0 + $0x1ec] sm:$0xff]
  %v98 = vld [vmem:[%s0 + $0x1f4] sm:$0xf]
  %v99 = vld [vmem:[%s0 + $0x1f8] sm:$0xff]
  %v100 = vld [vmem:[%s0 + $0x200] sm:$0xf]
  %v101 = vld [vmem:[%s0 + $0x204] sm:$0xff]
  %v102 = vld [vmem:[%s0 + $0x20c] sm:$0xf]
  %v103 = vld [vmem:[%s0 + $0x210] sm:$0xff]
  %v104 = vld [vmem:[%s0 + $0x218] sm:$0xf]
  %v105 = vld [vmem:[%s0 + $0x21c] sm:$0xff]
  %v106 = vld [vmem:[%s0 + $0x224] sm:$0xf]
  %v107 = vld [vmem:[%s0 + $0x228] sm:$0xff]
  %v108 = vld [vmem:[%s0 + $0x230] sm:$0xf]
  %v109 = vld [vmem:[%s0 + $0x234] sm:$0xff]
  %v110 = vld [vmem:[%s0 + $0x23c] sm:$0xf]
  %v111 = vld [vmem:[%s0 + $0x240] sm:$0xff]
  %v112 = vld [vmem:[%s0 + $0x248] sm:$0xf]
  %v113 = vld [vmem:[%s0 + $0x24c] sm:$0xff]
  %v114 = vld [vmem:[%s0 + $0x254] sm:$0xf]
  %v115 = vld [vmem:[%s0 + $0x258] sm:$0xff]
  %v116 = vld [vmem:[%s0 + $0x260] sm:$0xf]
  %v117 = vld [vmem:[%s0 + $0x264] sm:$0xff]
  %v118 = vld [vmem:[%s0 + $0x26c] sm:$0xf]
  %v119 = vld [vmem:[%s0 + $0x270] sm:$0xff]
  %v120 = vld [vmem:[%s0 + $0x278] sm:$0xf]
  %v121 = vld [vmem:[%s0 + $0x27c] sm:$0xff]
  %v122 = vld [vmem:[%s0 + $0x284] sm:$0xf]
  %v123 = vld [vmem:[%s0 + $0x288] sm:$0xff]
  %v124 = vld [vmem:[%s0 + $0x290] sm:$0xf]
  %v125 = vld [vmem:[%s0 + $0x294] sm:$0xff]
  %v126 = vld [vmem:[%s0 + $0x29c] sm:$0xf]
  %v127 = vld [vmem:[%s0 + $0x2a0] sm:$0xff]
  %v128 = vld [vmem:[%s0 + $0x2a8] sm:$0xf]
  %v129 = vld [vmem:[%s0 + $0x2ac] sm:$0xff]
  %v130 = vld [vmem:[%s0 + $0x2b4] sm:$0xf]
  %v131 = vld [vmem:[%s0 + $0x2b8] sm:$0xff]
  %v132 = vld [vmem:[%s0 + $0x2c0] sm:$0xf]
  %v133 = vld [vmem:[%s0 + $0x2c4] sm:$0xff]
  %v134 = vld [vmem:[%s0 + $0x2cc] sm:$0xf]
  %v135 = vld [vmem:[%s0 + $0x2d0] sm:$0xff]
  %v136 = vld [vmem:[%s0 + $0x2d8] sm:$0xf]
  %v137 = vld [vmem:[%s0 + $0x2dc] sm:$0xff]
  %v138 = vld [vmem:[%s0 + $0x2e4] sm:$0xf]
  %v139 = vld [vmem:[%s0 + $0x2e8] sm:$0xff]
  %v140 = vld [vmem:[%s0 + $0x2f0] sm:$0xf]
  %v141 = vld [vmem:[%s0 + $0x2f4] sm:$0xff]
  %v142 = vld [vmem:[%s0 + $0x2fc] sm:$0xf]
  %v143 = vld [vmem:[%s1] sm:$0xf]
  %v144 = vld [vmem:[%s1 + $0x4] sm:$0xf]
  %v145 = vld [vmem:[%s1 + $0x8] sm:$0xf]
  %v146 = vld [vmem:[%s1 + $0xc] sm:$0xf]
  %v147 = vld [vmem:[%s1 + $0x10] sm:$0xf]
  %v148 = vld [vmem:[%s1 + $0x14] sm:$0xf]
  %v149 = vld [vmem:[%s1 + $0x18] sm:$0xf]
  %v150 = vld [vmem:[%s1 + $0x1c] sm:$0xf]
  %v151 = vld [vmem:[%s1 + $0x20] sm:$0xf]
  %v152 = vld [vmem:[%s1 + $0x24] sm:$0xf]
  %v153 = vld [vmem:[%s1 + $0x28] sm:$0xf]
  %v154 = vld [vmem:[%s1 + $0x2c] sm:$0xf]
  %v155 = vld [vmem:[%s1 + $0x30] sm:$0xf]
  %v156 = vld [vmem:[%s1 + $0x34] sm:$0xf]
  %v157 = vld [vmem:[%s1 + $0x38] sm:$0xf]
  %v158 = vld [vmem:[%s1 + $0x3c] sm:$0xf]
  %v159 = vld [vmem:[%s1 + $0x40] sm:$0xf]
  %v160 = vld [vmem:[%s1 + $0x44] sm:$0xf]
  %v161 = vld [vmem:[%s1 + $0x48] sm:$0xf]
  %v162 = vld [vmem:[%s1 + $0x4c] sm:$0xf]
  %v163 = vld [vmem:[%s1 + $0x50] sm:$0xf]
  %v164 = vld [vmem:[%s1 + $0x54] sm:$0xf]
  %v165 = vld [vmem:[%s1 + $0x58] sm:$0xf]
  %v166 = vld [vmem:[%s1 + $0x5c] sm:$0xf]
  %v167 = vld [vmem:[%s1 + $0x60] sm:$0xf]
  %v168 = vld [vmem:[%s1 + $0x64] sm:$0xf]
  %v169 = vld [vmem:[%s1 + $0x68] sm:$0xf]
  %v170 = vld [vmem:[%s1 + $0x6c] sm:$0xf]
  %v171 = vld [vmem:[%s1 + $0x70] sm:$0xf]
  %v172 = vld [vmem:[%s1 + $0x74] sm:$0xf]
  %v173 = vld [vmem:[%s1 + $0x78] sm:$0xf]
  %v174 = vld [vmem:[%s1 + $0x7c] sm:$0xf]
  %v175 = vld [vmem:[%s1 + $0x80] sm:$0xf]
  %v176 = vld [vmem:[%s1 + $0x84] sm:$0xf]
  %v177 = vld [vmem:[%s1 + $0x88] sm:$0xf]
  %v178 = vld [vmem:[%s1 + $0x8c] sm:$0xf]
  %v179 = vld [vmem:[%s1 + $0x90] sm:$0xf]
  %v180 = vld [vmem:[%s1 + $0x94] sm:$0xf]
  %v181 = vld [vmem:[%s1 + $0x98] sm:$0xf]
  %v182 = vld [vmem:[%s1 + $0x9c] sm:$0xf]
  %v183 = vld [vmem:[%s1 + $0xa0] sm:$0xf]
  %v184 = vld [vmem:[%s1 + $0xa4] sm:$0xf]
  %v185 = vld [vmem:[%s1 + $0xa8] sm:$0xf]
  %v186 = vld [vmem:[%s1 + $0xac] sm:$0xf]
  %v187 = vld [vmem:[%s1 + $0xb0] sm:$0xf]
  %v188 = vld [vmem:[%s1 + $0xb4] sm:$0xf]
  %v189 = vld [vmem:[%s1 + $0xb8] sm:$0xf]
  %v190 = vld [vmem:[%s1 + $0xbc] sm:$0xf]
  %v191 = vld [vmem:[%s2] sm:$0x1]
  %v193 = vlaneseq
  %v194 = vshrl.u32 %v193, 7
  %v195 = vsub.s32 0, %v194
  %v196 = vrot.slane %v191, %v195
  %v326 = vunpack.c.l.b16 %v15
  %v327 = vunpack.c.h.b16 %v15
  %v328 = vunpack.c.l.b16 %v16
  %v329 = vunpack.c.l.b16 %v17
  %v330 = vunpack.c.h.b16 %v17
  %v331 = vunpack.c.l.b16 %v18
  %v332 = vunpack.c.l.b16 %v19
  %v333 = vunpack.c.h.b16 %v19
  %v334 = vunpack.c.l.b16 %v20
  %v335 = vunpack.c.l.b16 %v21
  %v336 = vunpack.c.h.b16 %v21
  %v337 = vunpack.c.l.b16 %v22
  %v338 = vunpack.c.l.b16 %v23
  %v339 = vunpack.c.h.b16 %v23
  %v340 = vunpack.c.l.b16 %v24
  %v341 = vunpack.c.l.b16 %v25
  %v342 = vunpack.c.h.b16 %v25
  %v343 = vunpack.c.l.b16 %v26
  %v344 = vunpack.c.l.b16 %v27
  %v345 = vunpack.c.h.b16 %v27
  %v346 = vunpack.c.l.b16 %v28
  %v347 = vunpack.c.l.b16 %v29
  %v348 = vunpack.c.h.b16 %v29
  %v349 = vunpack.c.l.b16 %v30
  %v350 = vunpack.c.l.b16 %v31
  %v351 = vunpack.c.h.b16 %v31
  %v352 = vunpack.c.l.b16 %v32
  %v353 = vunpack.c.l.b16 %v33
  %v354 = vunpack.c.h.b16 %v33
  %v355 = vunpack.c.l.b16 %v34
  %v356 = vunpack.c.l.b16 %v35
  %v357 = vunpack.c.h.b16 %v35
  %v358 = vunpack.c.l.b16 %v36
  %v359 = vunpack.c.l.b16 %v37
  %v360 = vunpack.c.h.b16 %v37
  %v361 = vunpack.c.l.b16 %v38
  %v362 = vunpack.c.l.b16 %v39
  %v363 = vunpack.c.h.b16 %v39
  %v364 = vunpack.c.l.b16 %v40
  %v365 = vunpack.c.l.b16 %v41
  %v366 = vunpack.c.h.b16 %v41
  %v367 = vunpack.c.l.b16 %v42
  %v368 = vunpack.c.l.b16 %v43
  %v369 = vunpack.c.h.b16 %v43
  %v370 = vunpack.c.l.b16 %v44
  %v371 = vunpack.c.l.b16 %v45
  %v372 = vunpack.c.h.b16 %v45
  %v373 = vunpack.c.l.b16 %v46
  %v374 = vunpack.c.l.b16 %v47
  %v375 = vunpack.c.h.b16 %v47
  %v376 = vunpack.c.l.b16 %v48
  %v377 = vunpack.c.l.b16 %v49
  %v378 = vunpack.c.h.b16 %v49
  %v379 = vunpack.c.l.b16 %v50
  %v380 = vunpack.c.l.b16 %v51
  %v381 = vunpack.c.h.b16 %v51
  %v382 = vunpack.c.l.b16 %v52
  %v383 = vunpack.c.l.b16 %v53
  %v384 = vunpack.c.h.b16 %v53
  %v385 = vunpack.c.l.b16 %v54
  %v386 = vunpack.c.l.b16 %v55
  %v387 = vunpack.c.h.b16 %v55
  %v388 = vunpack.c.l.b16 %v56
  %v389 = vunpack.c.l.b16 %v57
  %v390 = vunpack.c.h.b16 %v57
  %v391 = vunpack.c.l.b16 %v58
  %v392 = vunpack.c.l.b16 %v59
  %v393 = vunpack.c.h.b16 %v59
  %v394 = vunpack.c.l.b16 %v60
  %v395 = vunpack.c.l.b16 %v61
  %v396 = vunpack.c.h.b16 %v61
  %v397 = vunpack.c.l.b16 %v62
  %v398 = vunpack.c.l.b16 %v63
  %v399 = vunpack.c.h.b16 %v63
  %v400 = vunpack.c.l.b16 %v64
  %v401 = vunpack.c.l.b16 %v65
  %v402 = vunpack.c.h.b16 %v65
  %v403 = vunpack.c.l.b16 %v66
  %v404 = vunpack.c.l.b16 %v67
  %v405 = vunpack.c.h.b16 %v67
  %v406 = vunpack.c.l.b16 %v68
  %v407 = vunpack.c.l.b16 %v69
  %v408 = vunpack.c.h.b16 %v69
  %v409 = vunpack.c.l.b16 %v70
  %v410 = vunpack.c.l.b16 %v71
  %v411 = vunpack.c.h.b16 %v71
  %v412 = vunpack.c.l.b16 %v72
  %v413 = vunpack.c.l.b16 %v73
  %v414 = vunpack.c.h.b16 %v73
  %v415 = vunpack.c.l.b16 %v74
  %v416 = vunpack.c.l.b16 %v75
  %v417 = vunpack.c.h.b16 %v75
  %v418 = vunpack.c.l.b16 %v76
  %v419 = vunpack.c.l.b16 %v77
  %v420 = vunpack.c.h.b16 %v77
  %v421 = vunpack.c.l.b16 %v78
  %v422 = vunpack.c.l.b16 %v79
  %v423 = vunpack.c.h.b16 %v79
  %v424 = vunpack.c.l.b16 %v80
  %v425 = vunpack.c.l.b16 %v81
  %v426 = vunpack.c.h.b16 %v81
  %v427 = vunpack.c.l.b16 %v82
  %v428 = vunpack.c.l.b16 %v83
  %v429 = vunpack.c.h.b16 %v83
  %v430 = vunpack.c.l.b16 %v84
  %v431 = vunpack.c.l.b16 %v85
  %v432 = vunpack.c.h.b16 %v85
  %v433 = vunpack.c.l.b16 %v86
  %v434 = vunpack.c.l.b16 %v87
  %v435 = vunpack.c.h.b16 %v87
  %v436 = vunpack.c.l.b16 %v88
  %v437 = vunpack.c.l.b16 %v89
  %v438 = vunpack.c.h.b16 %v89
  %v439 = vunpack.c.l.b16 %v90
  %v440 = vunpack.c.l.b16 %v91
  %v441 = vunpack.c.h.b16 %v91
  %v442 = vunpack.c.l.b16 %v92
  %v443 = vunpack.c.l.b16 %v93
  %v444 = vunpack.c.h.b16 %v93
  %v445 = vunpack.c.l.b16 %v94
  %v446 = vunpack.c.l.b16 %v95
  %v447 = vunpack.c.h.b16 %v95
  %v448 = vunpack.c.l.b16 %v96
  %v449 = vunpack.c.l.b16 %v97
  %v450 = vunpack.c.h.b16 %v97
  %v451 = vunpack.c.l.b16 %v98
  %v452 = vunpack.c.l.b16 %v99
  %v453 = vunpack.c.h.b16 %v99
  %v454 = vunpack.c.l.b16 %v100
  %v455 = vunpack.c.l.b16 %v101
  %v456 = vunpack.c.h.b16 %v101
  %v457 = vunpack.c.l.b16 %v102
  %v458 = vunpack.c.l.b16 %v103
  %v459 = vunpack.c.h.b16 %v103
  %v460 = vunpack.c.l.b16 %v104
  %v461 = vunpack.c.l.b16 %v105
  %v462 = vunpack.c.h.b16 %v105
  %v463 = vunpack.c.l.b16 %v106
  %v464 = vunpack.c.l.b16 %v107
  %v465 = vunpack.c.h.b16 %v107
  %v466 = vunpack.c.l.b16 %v108
  %v467 = vunpack.c.l.b16 %v109
  %v468 = vunpack.c.h.b16 %v109
  %v469 = vunpack.c.l.b16 %v110
  %v470 = vunpack.c.l.b16 %v111
  %v471 = vunpack.c.h.b16 %v111
  %v472 = vunpack.c.l.b16 %v112
  %v473 = vunpack.c.l.b16 %v113
  %v474 = vunpack.c.h.b16 %v113
  %v475 = vunpack.c.l.b16 %v114
  %v476 = vunpack.c.l.b16 %v115
  %v477 = vunpack.c.h.b16 %v115
  %v478 = vunpack.c.l.b16 %v116
  %v479 = vunpack.c.l.b16 %v117
  %v480 = vunpack.c.h.b16 %v117
  %v481 = vunpack.c.l.b16 %v118
  %v482 = vunpack.c.l.b16 %v119
  %v483 = vunpack.c.h.b16 %v119
  %v484 = vunpack.c.l.b16 %v120
  %v485 = vunpack.c.l.b16 %v121
  %v486 = vunpack.c.h.b16 %v121
  %v487 = vunpack.c.l.b16 %v122
  %v488 = vunpack.c.l.b16 %v123
  %v489 = vunpack.c.h.b16 %v123
  %v490 = vunpack.c.l.b16 %v124
  %v491 = vunpack.c.l.b16 %v125
  %v492 = vunpack.c.h.b16 %v125
  %v493 = vunpack.c.l.b16 %v126
  %v494 = vunpack.c.l.b16 %v127
  %v495 = vunpack.c.h.b16 %v127
  %v496 = vunpack.c.l.b16 %v128
  %v497 = vunpack.c.l.b16 %v129
  %v498 = vunpack.c.h.b16 %v129
  %v499 = vunpack.c.l.b16 %v130
  %v500 = vunpack.c.l.b16 %v131
  %v501 = vunpack.c.h.b16 %v131
  %v502 = vunpack.c.l.b16 %v132
  %v503 = vunpack.c.l.b16 %v133
  %v504 = vunpack.c.h.b16 %v133
  %v505 = vunpack.c.l.b16 %v134
  %v506 = vunpack.c.l.b16 %v135
  %v507 = vunpack.c.h.b16 %v135
  %v508 = vunpack.c.l.b16 %v136
  %v509 = vunpack.c.l.b16 %v137
  %v510 = vunpack.c.h.b16 %v137
  %v511 = vunpack.c.l.b16 %v138
  %v512 = vunpack.c.l.b16 %v139
  %v513 = vunpack.c.h.b16 %v139
  %v514 = vunpack.c.l.b16 %v140
  %v515 = vunpack.c.l.b16 %v141
  %v516 = vunpack.c.h.b16 %v141
  %v517 = vunpack.c.l.b16 %v142
  %v518 = vpack.c.b16 %v329, %v326
  %v519 = vpack.c.b16 %v330, %v327
  %v520 = vpack.c.b16 %v331, %v328
  %v521 = vpack.c.b16 %v335, %v332
  %v522 = vpack.c.b16 %v336, %v333
  %v523 = vpack.c.b16 %v337, %v334
  %v524 = vpack.c.b16 %v341, %v338
  %v525 = vpack.c.b16 %v342, %v339
  %v526 = vpack.c.b16 %v343, %v340
  %v527 = vpack.c.b16 %v347, %v344
  %v528 = vpack.c.b16 %v348, %v345
  %v529 = vpack.c.b16 %v349, %v346
  %v530 = vpack.c.b16 %v353, %v350
  %v531 = vpack.c.b16 %v354, %v351
  %v532 = vpack.c.b16 %v355, %v352
  %v533 = vpack.c.b16 %v359, %v356
  %v534 = vpack.c.b16 %v360, %v357
  %v535 = vpack.c.b16 %v361, %v358
  %v536 = vpack.c.b16 %v365, %v362
  %v537 = vpack.c.b16 %v366, %v363
  %v538 = vpack.c.b16 %v367, %v364
  %v539 = vpack.c.b16 %v371, %v368
  %v540 = vpack.c.b16 %v372, %v369
  %v541 = vpack.c.b16 %v373, %v370
  %v542 = vpack.c.b16 %v377, %v374
  %v543 = vpack.c.b16 %v378, %v375
  %v544 = vpack.c.b16 %v379, %v376
  %v545 = vpack.c.b16 %v383, %v380
  %v546 = vpack.c.b16 %v384, %v381
  %v547 = vpack.c.b16 %v385, %v382
  %v548 = vpack.c.b16 %v389, %v386
  %v549 = vpack.c.b16 %v390, %v387
  %v550 = vpack.c.b16 %v391, %v388
  %v551 = vpack.c.b16 %v395, %v392
  %v552 = vpack.c.b16 %v396, %v393
  %v553 = vpack.c.b16 %v397, %v394
  %v554 = vpack.c.b16 %v401, %v398
  %v555 = vpack.c.b16 %v402, %v399
  %v556 = vpack.c.b16 %v403, %v400
  %v557 = vpack.c.b16 %v407, %v404
  %v558 = vpack.c.b16 %v408, %v405
  %v559 = vpack.c.b16 %v409, %v406
  %v560 = vpack.c.b16 %v413, %v410
  %v561 = vpack.c.b16 %v414, %v411
  %v562 = vpack.c.b16 %v415, %v412
  %v563 = vpack.c.b16 %v419, %v416
  %v564 = vpack.c.b16 %v420, %v417
  %v565 = vpack.c.b16 %v421, %v418
  %v566 = vpack.c.b16 %v425, %v422
  %v567 = vpack.c.b16 %v426, %v423
  %v568 = vpack.c.b16 %v427, %v424
  %v569 = vpack.c.b16 %v431, %v428
  %v570 = vpack.c.b16 %v432, %v429
  %v571 = vpack.c.b16 %v433, %v430
  %v572 = vpack.c.b16 %v437, %v434
  %v573 = vpack.c.b16 %v438, %v435
  %v574 = vpack.c.b16 %v439, %v436
  %v575 = vpack.c.b16 %v443, %v440
  %v576 = vpack.c.b16 %v444, %v441
  %v577 = vpack.c.b16 %v445, %v442
  %v578 = vpack.c.b16 %v449, %v446
  %v579 = vpack.c.b16 %v450, %v447
  %v580 = vpack.c.b16 %v451, %v448
  %v581 = vpack.c.b16 %v455, %v452
  %v582 = vpack.c.b16 %v456, %v453
  %v583 = vpack.c.b16 %v457, %v454
  %v584 = vpack.c.b16 %v461, %v458
  %v585 = vpack.c.b16 %v462, %v459
  %v586 = vpack.c.b16 %v463, %v460
  %v587 = vpack.c.b16 %v467, %v464
  %v588 = vpack.c.b16 %v468, %v465
  %v589 = vpack.c.b16 %v469, %v466
  %v590 = vpack.c.b16 %v473, %v470
  %v591 = vpack.c.b16 %v474, %v471
  %v592 = vpack.c.b16 %v475, %v472
  %v593 = vpack.c.b16 %v479, %v476
  %v594 = vpack.c.b16 %v480, %v477
  %v595 = vpack.c.b16 %v481, %v478
  %v596 = vpack.c.b16 %v485, %v482
  %v597 = vpack.c.b16 %v486, %v483
  %v598 = vpack.c.b16 %v487, %v484
  %v599 = vpack.c.b16 %v491, %v488
  %v600 = vpack.c.b16 %v492, %v489
  %v601 = vpack.c.b16 %v493, %v490
  %v602 = vpack.c.b16 %v497, %v494
  %v603 = vpack.c.b16 %v498, %v495
  %v604 = vpack.c.b16 %v499, %v496
  %v605 = vpack.c.b16 %v503, %v500
  %v606 = vpack.c.b16 %v504, %v501
  %v607 = vpack.c.b16 %v505, %v502
  %v608 = vpack.c.b16 %v509, %v506
  %v609 = vpack.c.b16 %v510, %v507
  %v610 = vpack.c.b16 %v511, %v508
  %v611 = vpack.c.b16 %v515, %v512
  %v612 = vpack.c.b16 %v516, %v513
  %v613 = vpack.c.b16 %v517, %v514
  %v758 = vunpack.c.l.b16 %v143
  %v759 = vunpack.c.l.b16 %v144
  %v760 = vunpack.c.l.b16 %v145
  %v761 = vunpack.c.l.b16 %v146
  %v762 = vunpack.c.l.b16 %v147
  %v763 = vunpack.c.l.b16 %v148
  %v764 = vunpack.c.l.b16 %v149
  %v765 = vunpack.c.l.b16 %v150
  %v766 = vunpack.c.l.b16 %v151
  %v767 = vunpack.c.l.b16 %v152
  %v768 = vunpack.c.l.b16 %v153
  %v769 = vunpack.c.l.b16 %v154
  %v770 = vunpack.c.l.b16 %v155
  %v771 = vunpack.c.l.b16 %v156
  %v772 = vunpack.c.l.b16 %v157
  %v773 = vunpack.c.l.b16 %v158
  %v774 = vunpack.c.l.b16 %v159
  %v775 = vunpack.c.l.b16 %v160
  %v776 = vunpack.c.l.b16 %v161
  %v777 = vunpack.c.l.b16 %v162
  %v778 = vunpack.c.l.b16 %v163
  %v779 = vunpack.c.l.b16 %v164
  %v780 = vunpack.c.l.b16 %v165
  %v781 = vunpack.c.l.b16 %v166
  %v782 = vunpack.c.l.b16 %v167
  %v783 = vunpack.c.l.b16 %v168
  %v784 = vunpack.c.l.b16 %v169
  %v785 = vunpack.c.l.b16 %v170
  %v786 = vunpack.c.l.b16 %v171
  %v787 = vunpack.c.l.b16 %v172
  %v788 = vunpack.c.l.b16 %v173
  %v789 = vunpack.c.l.b16 %v174
  %v790 = vunpack.c.l.b16 %v175
  %v791 = vunpack.c.l.b16 %v176
  %v792 = vunpack.c.l.b16 %v177
  %v793 = vunpack.c.l.b16 %v178
  %v794 = vunpack.c.l.b16 %v179
  %v795 = vunpack.c.l.b16 %v180
  %v796 = vunpack.c.l.b16 %v181
  %v797 = vunpack.c.l.b16 %v182
  %v798 = vunpack.c.l.b16 %v183
  %v799 = vunpack.c.l.b16 %v184
  %v800 = vunpack.c.l.b16 %v185
  %v801 = vunpack.c.l.b16 %v186
  %v802 = vunpack.c.l.b16 %v187
  %v803 = vunpack.c.l.b16 %v188
  %v804 = vunpack.c.l.b16 %v189
  %v805 = vunpack.c.l.b16 %v190
  %v806 = vpack.c.b16 %v759, %v758
  %v807 = vpack.c.b16 %v761, %v760
  %v808 = vpack.c.b16 %v763, %v762
  %v809 = vpack.c.b16 %v765, %v764
  %v810 = vpack.c.b16 %v767, %v766
  %v811 = vpack.c.b16 %v769, %v768
  %v812 = vpack.c.b16 %v771, %v770
  %v813 = vpack.c.b16 %v773, %v772
  %v814 = vpack.c.b16 %v775, %v774
  %v815 = vpack.c.b16 %v777, %v776
  %v816 = vpack.c.b16 %v779, %v778
  %v817 = vpack.c.b16 %v781, %v780
  %v818 = vpack.c.b16 %v783, %v782
  %v819 = vpack.c.b16 %v785, %v784
  %v820 = vpack.c.b16 %v787, %v786
  %v821 = vpack.c.b16 %v789, %v788
  %v822 = vpack.c.b16 %v791, %v790
  %v823 = vpack.c.b16 %v793, %v792
  %v824 = vpack.c.b16 %v795, %v794
  %v825 = vpack.c.b16 %v797, %v796
  %v826 = vpack.c.b16 %v799, %v798
  %v827 = vpack.c.b16 %v801, %v800
  %v828 = vpack.c.b16 %v803, %v802
  %v829 = vpack.c.b16 %v805, %v804
  %854 = vmatprep.subr.bf16.mxu0 0
  %855 = vmatpush1.bf16.msra.mxu0 %v806
  %856 = vmatprep.subr.bf16.mxu0 0
  %857 = vmatpush1.bf16.msra.mxu0 %v807
  %858 = vmatprep.subr.bf16.mxu0 0
  %859 = vmatpush1.bf16.msra.mxu0 %v808
  %860 = vmatprep.subr.bf16.mxu0 0
  %861 = vmatpush1.bf16.msra.mxu0 %v809
  %862 = vmatprep.subr.bf16.mxu0 0
  %863 = vmatpush1.bf16.msra.mxu0 %v810
  %864 = vmatprep.subr.bf16.mxu0 0
  %865 = vmatpush1.bf16.msra.mxu0 %v811
  %866 = vmatprep.subr.bf16.mxu0 0
  %867 = vmatpush1.bf16.msra.mxu0 %v812
  %868 = vmatprep.subr.bf16.mxu0 0
  %869 = vmatpush1.bf16.msra.mxu0 %v813
  %870 = vmatprep.subr.bf16.mxu0 0
  %871 = vmatpush1.bf16.msra.mxu0 %v814
  %872 = vmatprep.subr.bf16.mxu0 0
  %873 = vmatpush1.bf16.msra.mxu0 %v815
  %874 = vmatprep.subr.bf16.mxu0 0
  %875 = vmatpush1.bf16.msra.mxu0 %v816
  %876 = vmatprep.subr.bf16.mxu0 0
  %877 = vmatpush1.bf16.msra.mxu0 %v817
  %878 = vmatprep.subr.bf16.mxu0 0
  %879 = vmatpush1.bf16.msra.mxu0 %v818
  %880 = vmatprep.subr.bf16.mxu0 0
  %881 = vmatpush1.bf16.msra.mxu0 %v819
  %882 = vmatprep.subr.bf16.mxu0 0
  %883 = vmatpush1.bf16.msra.mxu0 %v820
  %884 = vmatprep.subr.bf16.mxu0 0
  %885 = vmatpush1.bf16.msra.mxu0 %v821
  %886 = vmatprep.mubr.bf16.mxu0 %v519
  %887 = vmatmul.mubr.bf16.gmra.mrb[0].mxu0 %v518
  %v888 = vpop.f32.mrb[0].mxu0
  %v889 = vadd.f32 %v196, %v888
  %v890 = vpop.f32.mrb[0].mxu0
  %v891 = vpop.f32.mrb[0].mxu0
  %v892 = vadd.f32 %v196, %v891
  %v893 = vpop.f32.mrb[0].mxu0
  %894 = vmatprep.mubr.bf16.mxu0 %v522
  %895 = vmatmul.mubr.bf16.gmra.mrb[0].mxu0 %v521
  %v896 = vpop.f32.mrb[0].mxu0
  %v897 = vadd.f32 %v196, %v896
  %v898 = vpop.f32.mrb[0].mxu0
  %v899 = vpop.f32.mrb[0].mxu0
  %v900 = vadd.f32 %v196, %v899
  %v901 = vpop.f32.mrb[0].mxu0
  %902 = vmatprep.mubr.bf16.mxu0 %v525
  %903 = vmatmul.mubr.bf16.gmra.mrb[0].mxu0 %v524
  %v904 = vpop.f32.mrb[0].mxu0
  %v905 = vadd.f32 %v196, %v904
  %v906 = vpop.f32.mrb[0].mxu0
  %v907 = vpop.f32.mrb[0].mxu0
  %v908 = vadd.f32 %v196, %v907
  %v909 = vpop.f32.mrb[0].mxu0
  %910 = vmatprep.mubr.bf16.mxu0 %v528
  %911 = vmatmul.mubr.bf16.gmra.mrb[0].mxu0 %v527
  %v912 = vpop.f32.mrb[0].mxu0
  %v913 = vadd.f32 %v196, %v912
  %v914 = vpop.f32.mrb[0].mxu0
  %v915 = vpop.f32.mrb[0].mxu0
  %v916 = vadd.f32 %v196, %v915
  %v917 = vpop.f32.mrb[0].mxu0
  %918 = vmatprep.mubr.bf16.mxu0 %v531
  %919 = vmatmul.mubr.bf16.gmra.mrb[0].mxu0 %v530
  %v920 = vpop.f32.mrb[0].mxu0
  %v921 = vadd.f32 %v196, %v920
  %v922 = vpop.f32.mrb[0].mxu0
  %v923 = vpop.f32.mrb[0].mxu0
  %v924 = vadd.f32 %v196, %v923
  %v925 = vpop.f32.mrb[0].mxu0
  %926 = vmatprep.mubr.bf16.mxu0 %v534
  %927 = vmatmul.mubr.bf16.gmra.mrb[0].mxu0 %v533
  %v928 = vpop.f32.mrb[0].mxu0
  %v929 = vadd.f32 %v196, %v928
  %v930 = vpop.f32.mrb[0].mxu0
  %v931 = vpop.f32.mrb[0].mxu0
  %v932 = vadd.f32 %v196, %v931
  %v933 = vpop.f32.mrb[0].mxu0
  %934 = vmatprep.mubr.bf16.mxu0 %v537
  %935 = vmatmul.mubr.bf16.gmra.mrb[0].mxu0 %v536
  %v936 = vpop.f32.mrb[0].mxu0
  %v937 = vadd.f32 %v196, %v936
  %v938 = vpop.f32.mrb[0].mxu0
  %v939 = vpop.f32.mrb[0].mxu0
  %v940 = vadd.f32 %v196, %v939
  %v941 = vpop.f32.mrb[0].mxu0
  %942 = vmatprep.mubr.bf16.mxu0 %v540
  %943 = vmatmul.mubr.bf16.gmra.mrb[0].mxu0 %v539
  %v944 = vpop.f32.mrb[0].mxu0
  %v945 = vadd.f32 %v196, %v944
  %v946 = vpop.f32.mrb[0].mxu0
  %v947 = vpop.f32.mrb[0].mxu0
  %v948 = vadd.f32 %v196, %v947
  %v949 = vpop.f32.mrb[0].mxu0
  %950 = vmatprep.mubr.bf16.mxu0 %v543
  %951 = vmatmul.mubr.bf16.gmra.mrb[0].mxu0 %v542
  %v952 = vpop.f32.mrb[0].mxu0
  %v953 = vadd.f32 %v196, %v952
  %v954 = vpop.f32.mrb[0].mxu0
  %v955 = vpop.f32.mrb[0].mxu0
  %v956 = vadd.f32 %v196, %v955
  %v957 = vpop.f32.mrb[0].mxu0
  %958 = vmatprep.mubr.bf16.mxu0 %v546
  %959 = vmatmul.mubr.bf16.gmra.mrb[0].mxu0 %v545
  %v960 = vpop.f32.mrb[0].mxu0
  %v961 = vadd.f32 %v196, %v960
  %v962 = vpop.f32.mrb[0].mxu0
  %v963 = vpop.f32.mrb[0].mxu0
  %v964 = vadd.f32 %v196, %v963
  %v965 = vpop.f32.mrb[0].mxu0
  %966 = vmatprep.mubr.bf16.mxu0 %v549
  %967 = vmatmul.mubr.bf16.gmra.mrb[0].mxu0 %v548
  %v968 = vpop.f32.mrb[0].mxu0
  %v969 = vadd.f32 %v196, %v968
  %v970 = vpop.f32.mrb[0].mxu0
  %v971 = vpop.f32.mrb[0].mxu0
  %v972 = vadd.f32 %v196, %v971
  %v973 = vpop.f32.mrb[0].mxu0
  %974 = vmatprep.mubr.bf16.mxu0 %v552
  %975 = vmatmul.mubr.bf16.gmra.mrb[0].mxu0 %v551
  %v976 = vpop.f32.mrb[0].mxu0
  %v977 = vadd.f32 %v196, %v976
  %v978 = vpop.f32.mrb[0].mxu0
  %v979 = vpop.f32.mrb[0].mxu0
  %v980 = vadd.f32 %v196, %v979
  %v981 = vpop.f32.mrb[0].mxu0
  %982 = vmatprep.mubr.bf16.mxu0 %v555
  %983 = vmatmul.mubr.bf16.gmra.mrb[0].mxu0 %v554
  %v984 = vpop.f32.mrb[0].mxu0
  %v985 = vadd.f32 %v196, %v984
  %v986 = vpop.f32.mrb[0].mxu0
  %v987 = vpop.f32.mrb[0].mxu0
  %v988 = vadd.f32 %v196, %v987
  %v989 = vpop.f32.mrb[0].mxu0
  %990 = vmatprep.mubr.bf16.mxu0 %v558
  %991 = vmatmul.mubr.bf16.gmra.mrb[0].mxu0 %v557
  %v992 = vpop.f32.mrb[0].mxu0
  %v993 = vadd.f32 %v196, %v992
  %v994 = vpop.f32.mrb[0].mxu0
  %v995 = vpop.f32.mrb[0].mxu0
  %v996 = vadd.f32 %v196, %v995
  %v997 = vpop.f32.mrb[0].mxu0
  %998 = vmatprep.mubr.bf16.mxu0 %v561
  %999 = vmatmul.mubr.bf16.gmra.mrb[0].mxu0 %v560
  %v1000 = vpop.f32.mrb[0].mxu0
  %v1001 = vadd.f32 %v196, %v1000
  %v1002 = vpop.f32.mrb[0].mxu0
  %v1003 = vpop.f32.mrb[0].mxu0
  %v1004 = vadd.f32 %v196, %v1003
  %v1005 = vpop.f32.mrb[0].mxu0
  %1006 = vmatprep.mubr.bf16.mxu0 %v564
  %1007 = vmatmul.mubr.bf16.gmra.mrb[0].mxu0 %v563
  %v1008 = vpop.f32.mrb[0].mxu0
  %v1009 = vadd.f32 %v196, %v1008
  %v1010 = vpop.f32.mrb[0].mxu0
  %v1011 = vpop.f32.mrb[0].mxu0
  %v1012 = vadd.f32 %v196, %v1011
  %v1013 = vpop.f32.mrb[0].mxu0
  %1014 = vmatprep.mubr.bf16.mxu0 %v567
  %1015 = vmatmul.mubr.bf16.gmra.mrb[0].mxu0 %v566
  %v1016 = vpop.f32.mrb[0].mxu0
  %v1017 = vadd.f32 %v196, %v1016
  %v1018 = vpop.f32.mrb[0].mxu0
  %v1019 = vpop.f32.mrb[0].mxu0
  %v1020 = vadd.f32 %v196, %v1019
  %v1021 = vpop.f32.mrb[0].mxu0
  %1022 = vmatprep.mubr.bf16.mxu0 %v570
  %1023 = vmatmul.mubr.bf16.gmra.mrb[0].mxu0 %v569
  %v1024 = vpop.f32.mrb[0].mxu0
  %v1025 = vadd.f32 %v196, %v1024
  %v1026 = vpop.f32.mrb[0].mxu0
  %v1027 = vpop.f32.mrb[0].mxu0
  %v1028 = vadd.f32 %v196, %v1027
  %v1029 = vpop.f32.mrb[0].mxu0
  %1030 = vmatprep.mubr.bf16.mxu0 %v573
  %1031 = vmatmul.mubr.bf16.gmra.mrb[0].mxu0 %v572
  %v1032 = vpop.f32.mrb[0].mxu0
  %v1033 = vadd.f32 %v196, %v1032
  %v1034 = vpop.f32.mrb[0].mxu0
  %v1035 = vpop.f32.mrb[0].mxu0
  %v1036 = vadd.f32 %v196, %v1035
  %v1037 = vpop.f32.mrb[0].mxu0
  %1038 = vmatprep.mubr.bf16.mxu0 %v576
  %1039 = vmatmul.mubr.bf16.gmra.mrb[0].mxu0 %v575
  %v1040 = vpop.f32.mrb[0].mxu0
  %v1041 = vadd.f32 %v196, %v1040
  %v1042 = vpop.f32.mrb[0].mxu0
  %v1043 = vpop.f32.mrb[0].mxu0
  %v1044 = vadd.f32 %v196, %v1043
  %v1045 = vpop.f32.mrb[0].mxu0
  %1046 = vmatprep.mubr.bf16.mxu0 %v579
  %1047 = vmatmul.mubr.bf16.gmra.mrb[0].mxu0 %v578
  %v1048 = vpop.f32.mrb[0].mxu0
  %v1049 = vadd.f32 %v196, %v1048
  %v1050 = vpop.f32.mrb[0].mxu0
  %v1051 = vpop.f32.mrb[0].mxu0
  %v1052 = vadd.f32 %v196, %v1051
  %v1053 = vpop.f32.mrb[0].mxu0
  %1054 = vmatprep.mubr.bf16.mxu0 %v582
  %1055 = vmatmul.mubr.bf16.gmra.mrb[0].mxu0 %v581
  %v1056 = vpop.f32.mrb[0].mxu0
  %v1057 = vadd.f32 %v196, %v1056
  %v1058 = vpop.f32.mrb[0].mxu0
  %v1059 = vpop.f32.mrb[0].mxu0
  %v1060 = vadd.f32 %v196, %v1059
  %v1061 = vpop.f32.mrb[0].mxu0
  %1062 = vmatprep.mubr.bf16.mxu0 %v585
  %1063 = vmatmul.mubr.bf16.gmra.mrb[0].mxu0 %v584
  %v1064 = vpop.f32.mrb[0].mxu0
  %v1065 = vadd.f32 %v196, %v1064
  %v1066 = vpop.f32.mrb[0].mxu0
  %v1067 = vpop.f32.mrb[0].mxu0
  %v1068 = vadd.f32 %v196, %v1067
  %v1069 = vpop.f32.mrb[0].mxu0
  %1070 = vmatprep.mubr.bf16.mxu0 %v588
  %1071 = vmatmul.mubr.bf16.gmra.mrb[0].mxu0 %v587
  %v1072 = vpop.f32.mrb[0].mxu0
  %v1073 = vadd.f32 %v196, %v1072
  %v1074 = vpop.f32.mrb[0].mxu0
  %v1075 = vpop.f32.mrb[0].mxu0
  %v1076 = vadd.f32 %v196, %v1075
  %v1077 = vpop.f32.mrb[0].mxu0
  %1078 = vmatprep.mubr.bf16.mxu0 %v591
  %1079 = vmatmul.mubr.bf16.gmra.mrb[0].mxu0 %v590
  %v1080 = vpop.f32.mrb[0].mxu0
  %v1081 = vadd.f32 %v196, %v1080
  %v1082 = vpop.f32.mrb[0].mxu0
  %v1083 = vpop.f32.mrb[0].mxu0
  %v1084 = vadd.f32 %v196, %v1083
  %v1085 = vpop.f32.mrb[0].mxu0
  %1086 = vmatprep.mubr.bf16.mxu0 %v594
  %1087 = vmatmul.mubr.bf16.gmra.mrb[0].mxu0 %v593
  %v1088 = vpop.f32.mrb[0].mxu0
  %v1089 = vadd.f32 %v196, %v1088
  %v1090 = vpop.f32.mrb[0].mxu0
  %v1091 = vpop.f32.mrb[0].mxu0
  %v1092 = vadd.f32 %v196, %v1091
  %v1093 = vpop.f32.mrb[0].mxu0
  %1094 = vmatprep.mubr.bf16.mxu0 %v597
  %1095 = vmatmul.mubr.bf16.gmra.mrb[0].mxu0 %v596
  %v1096 = vpop.f32.mrb[0].mxu0
  %v1097 = vadd.f32 %v196, %v1096
  %v1098 = vpop.f32.mrb[0].mxu0
  %v1099 = vpop.f32.mrb[0].mxu0
  %v1100 = vadd.f32 %v196, %v1099
  %v1101 = vpop.f32.mrb[0].mxu0
  %1102 = vmatprep.mubr.bf16.mxu0 %v600
  %1103 = vmatmul.mubr.bf16.gmra.mrb[0].mxu0 %v599
  %v1104 = vpop.f32.mrb[0].mxu0
  %v1105 = vadd.f32 %v196, %v1104
  %v1106 = vpop.f32.mrb[0].mxu0
  %v1107 = vpop.f32.mrb[0].mxu0
  %v1108 = vadd.f32 %v196, %v1107
  %v1109 = vpop.f32.mrb[0].mxu0
  %1110 = vmatprep.mubr.bf16.mxu0 %v603
  %1111 = vmatmul.mubr.bf16.gmra.mrb[0].mxu0 %v602
  %v1112 = vpop.f32.mrb[0].mxu0
  %v1113 = vadd.f32 %v196, %v1112
  %v1114 = vpop.f32.mrb[0].mxu0
  %v1115 = vpop.f32.mrb[0].mxu0
  %v1116 = vadd.f32 %v196, %v1115
  %v1117 = vpop.f32.mrb[0].mxu0
  %1118 = vmatprep.mubr.bf16.mxu0 %v606
  %1119 = vmatmul.mubr.bf16.gmra.mrb[0].mxu0 %v605
  %v1120 = vpop.f32.mrb[0].mxu0
  %v1121 = vadd.f32 %v196, %v1120
  %v1122 = vpop.f32.mrb[0].mxu0
  %v1123 = vpop.f32.mrb[0].mxu0
  %v1124 = vadd.f32 %v196, %v1123
  %v1125 = vpop.f32.mrb[0].mxu0
  %1126 = vmatprep.mubr.bf16.mxu0 %v609
  %1127 = vmatmul.mubr.bf16.gmra.mrb[0].mxu0 %v608
  %v1128 = vpop.f32.mrb[0].mxu0
  %v1129 = vadd.f32 %v196, %v1128
  %v1130 = vpop.f32.mrb[0].mxu0
  %v1131 = vpop.f32.mrb[0].mxu0
  %v1132 = vadd.f32 %v196, %v1131
  %v1133 = vpop.f32.mrb[0].mxu0
  %1134 = vmatprep.mubr.bf16.mxu0 %v612
  %1135 = vmatmul.mubr.bf16.gmra.mrb[0].mxu0 %v611
  %v1136 = vpop.f32.mrb[0].mxu0
  %v1137 = vadd.f32 %v196, %v1136
  %v1138 = vpop.f32.mrb[0].mxu0
  %v1139 = vpop.f32.mrb[0].mxu0
  %v1140 = vadd.f32 %v196, %v1139
  %v1141 = vpop.f32.mrb[0].mxu0
  %1142 = vdwg.mxu0
  %1143 = vmatprep.subr.bf16.mxu0 0
  %1144 = vmatpush1.bf16.msra.mxu0 %v822
  %1145 = vmatprep.subr.bf16.mxu0 0
  %1146 = vmatpush1.bf16.msra.mxu0 %v823
  %1147 = vmatprep.subr.bf16.mxu0 0
  %1148 = vmatpush1.bf16.msra.mxu0 %v824
  %1149 = vmatprep.subr.bf16.mxu0 0
  %1150 = vmatpush1.bf16.msra.mxu0 %v825
  %1151 = vmatprep.subr.bf16.mxu0 0
  %1152 = vmatpush1.bf16.msra.mxu0 %v826
  %1153 = vmatprep.subr.bf16.mxu0 0
  %1154 = vmatpush1.bf16.msra.mxu0 %v827
  %1155 = vmatprep.subr.bf16.mxu0 0
  %1156 = vmatpush1.bf16.msra.mxu0 %v828
  %1157 = vmatprep.subr.bf16.mxu0 0
  %1158 = vmatpush1.bf16.msra.mxu0 %v829
  %1159 = vmatprep.subr.bf16.mxu0 0
  %1160 = vmatpush1.bf16.msra.mxu0 0
  %1161 = vmatprep.subr.bf16.mxu0 0
  %1162 = vmatpush1.bf16.msra.mxu0 0
  %1163 = vmatprep.subr.bf16.mxu0 0
  %1164 = vmatpush1.bf16.msra.mxu0 0
  %1165 = vmatprep.subr.bf16.mxu0 0
  %1166 = vmatpush1.bf16.msra.mxu0 0
  %1167 = vmatprep.subr.bf16.mxu0 0
  %1168 = vmatpush1.bf16.msra.mxu0 0
  %1169 = vmatprep.subr.bf16.mxu0 0
  %1170 = vmatpush1.bf16.msra.mxu0 0
  %1171 = vmatprep.subr.bf16.mxu0 0
  %1172 = vmatpush1.bf16.msra.mxu0 0
  %1173 = vmatprep.subr.bf16.mxu0 0
  %1174 = vmatpush1.bf16.msra.mxu0 0
  %1175 = vmatprep.mubr.bf16.mxu0 0
  %1176 = vmatmul.mubr.bf16.gmra.mrb[0].mxu0 %v520
  %v1177 = vpop.f32.mrb[0].mxu0
  %v1178 = vadd.f32 %v889, %v1177
  %v1179 = vpop.f32.mrb[0].mxu0
  %v1180 = vpop.f32.mrb[0].mxu0
  %v1181 = vadd.f32 %v892, %v1180
  %v1182 = vpop.f32.mrb[0].mxu0
  %1183 = vmatprep.mubr.bf16.mxu0 0
  %1184 = vmatmul.mubr.bf16.gmra.mrb[0].mxu0 %v523
  %v1185 = vpop.f32.mrb[0].mxu0
  %v1186 = vadd.f32 %v897, %v1185
  %v1187 = vpop.f32.mrb[0].mxu0
  %v1188 = vpop.f32.mrb[0].mxu0
  %v1189 = vadd.f32 %v900, %v1188
  %v1190 = vpop.f32.mrb[0].mxu0
  %1191 = vmatprep.mubr.bf16.mxu0 0
  %1192 = vmatmul.mubr.bf16.gmra.mrb[0].mxu0 %v526
  %v1193 = vpop.f32.mrb[0].mxu0
  %v1194 = vadd.f32 %v905, %v1193
  %v1195 = vpop.f32.mrb[0].mxu0
  %v1196 = vpop.f32.mrb[0].mxu0
  %v1197 = vadd.f32 %v908, %v1196
  %v1198 = vpop.f32.mrb[0].mxu0
  %1199 = vmatprep.mubr.bf16.mxu0 0
  %1200 = vmatmul.mubr.bf16.gmra.mrb[0].mxu0 %v529
  %v1201 = vpop.f32.mrb[0].mxu0
  %v1202 = vadd.f32 %v913, %v1201
  %v1203 = vpop.f32.mrb[0].mxu0
  %v1204 = vpop.f32.mrb[0].mxu0
  %v1205 = vadd.f32 %v916, %v1204
  %v1206 = vpop.f32.mrb[0].mxu0
  %1207 = vmatprep.mubr.bf16.mxu0 0
  %1208 = vmatmul.mubr.bf16.gmra.mrb[0].mxu0 %v532
  %v1209 = vpop.f32.mrb[0].mxu0
  %v1210 = vadd.f32 %v921, %v1209
  %v1211 = vpop.f32.mrb[0].mxu0
  %v1212 = vpop.f32.mrb[0].mxu0
  %v1213 = vadd.f32 %v924, %v1212
  %v1214 = vpop.f32.mrb[0].mxu0
  %1215 = vmatprep.mubr.bf16.mxu0 0
  %1216 = vmatmul.mubr.bf16.gmra.mrb[0].mxu0 %v535
  %v1217 = vpop.f32.mrb[0].mxu0
  %v1218 = vadd.f32 %v929, %v1217
  %v1219 = vpop.f32.mrb[0].mxu0
  %v1220 = vpop.f32.mrb[0].mxu0
  %v1221 = vadd.f32 %v932, %v1220
  %v1222 = vpop.f32.mrb[0].mxu0
  %1223 = vmatprep.mubr.bf16.mxu0 0
  %1224 = vmatmul.mubr.bf16.gmra.mrb[0].mxu0 %v538
  %v1225 = vpop.f32.mrb[0].mxu0
  %v1226 = vadd.f32 %v937, %v1225
  %v1227 = vpop.f32.mrb[0].mxu0
  %v1228 = vpop.f32.mrb[0].mxu0
  %v1229 = vadd.f32 %v940, %v1228
  %v1230 = vpop.f32.mrb[0].mxu0
  %1231 = vmatprep.mubr.bf16.mxu0 0
  %1232 = vmatmul.mubr.bf16.gmra.mrb[0].mxu0 %v541
  %v1233 = vpop.f32.mrb[0].mxu0
  %v1234 = vadd.f32 %v945, %v1233
  %v1235 = vpop.f32.mrb[0].mxu0
  %v1236 = vpop.f32.mrb[0].mxu0
  %v1237 = vadd.f32 %v948, %v1236
  %v1238 = vpop.f32.mrb[0].mxu0
  %1239 = vmatprep.mubr.bf16.mxu0 0
  %1240 = vmatmul.mubr.bf16.gmra.mrb[0].mxu0 %v544
  %v1241 = vpop.f32.mrb[0].mxu0
  %v1242 = vadd.f32 %v953, %v1241
  %v1243 = vpop.f32.mrb[0].mxu0
  %v1244 = vpop.f32.mrb[0].mxu0
  %v1245 = vadd.f32 %v956, %v1244
  %v1246 = vpop.f32.mrb[0].mxu0
  %1247 = vmatprep.mubr.bf16.mxu0 0
  %1248 = vmatmul.mubr.bf16.gmra.mrb[0].mxu0 %v547
  %v1249 = vpop.f32.mrb[0].mxu0
  %v1250 = vadd.f32 %v961, %v1249
  %v1251 = vpop.f32.mrb[0].mxu0
  %v1252 = vpop.f32.mrb[0].mxu0
  %v1253 = vadd.f32 %v964, %v1252
  %v1254 = vpop.f32.mrb[0].mxu0
  %1255 = vmatprep.mubr.bf16.mxu0 0
  %1256 = vmatmul.mubr.bf16.gmra.mrb[0].mxu0 %v550
  %v1257 = vpop.f32.mrb[0].mxu0
  %v1258 = vadd.f32 %v969, %v1257
  %v1259 = vpop.f32.mrb[0].mxu0
  %v1260 = vpop.f32.mrb[0].mxu0
  %v1261 = vadd.f32 %v972, %v1260
  %v1262 = vpop.f32.mrb[0].mxu0
  %1263 = vmatprep.mubr.bf16.mxu0 0
  %1264 = vmatmul.mubr.bf16.gmra.mrb[0].mxu0 %v553
  %v1265 = vpop.f32.mrb[0].mxu0
  %v1266 = vadd.f32 %v977, %v1265
  %v1267 = vpop.f32.mrb[0].mxu0
  %v1268 = vpop.f32.mrb[0].mxu0
  %v1269 = vadd.f32 %v980, %v1268
  %v1270 = vpop.f32.mrb[0].mxu0
  %1271 = vmatprep.mubr.bf16.mxu0 0
  %1272 = vmatmul.mubr.bf16.gmra.mrb[0].mxu0 %v556
  %v1273 = vpop.f32.mrb[0].mxu0
  %v1274 = vadd.f32 %v985, %v1273
  %v1275 = vpop.f32.mrb[0].mxu0
  %v1276 = vpop.f32.mrb[0].mxu0
  %v1277 = vadd.f32 %v988, %v1276
  %v1278 = vpop.f32.mrb[0].mxu0
  %1279 = vmatprep.mubr.bf16.mxu0 0
  %1280 = vmatmul.mubr.bf16.gmra.mrb[0].mxu0 %v559
  %v1281 = vpop.f32.mrb[0].mxu0
  %v1282 = vadd.f32 %v993, %v1281
  %v1283 = vpop.f32.mrb[0].mxu0
  %v1284 = vpop.f32.mrb[0].mxu0
  %v1285 = vadd.f32 %v996, %v1284
  %v1286 = vpop.f32.mrb[0].mxu0
  %1287 = vmatprep.mubr.bf16.mxu0 0
  %1288 = vmatmul.mubr.bf16.gmra.mrb[0].mxu0 %v562
  %v1289 = vpop.f32.mrb[0].mxu0
  %v1290 = vadd.f32 %v1001, %v1289
  %v1291 = vpop.f32.mrb[0].mxu0
  %v1292 = vpop.f32.mrb[0].mxu0
  %v1293 = vadd.f32 %v1004, %v1292
  %v1294 = vpop.f32.mrb[0].mxu0
  %1295 = vmatprep.mubr.bf16.mxu0 0
  %1296 = vmatmul.mubr.bf16.gmra.mrb[0].mxu0 %v565
  %v1297 = vpop.f32.mrb[0].mxu0
  %v1298 = vadd.f32 %v1009, %v1297
  %v1299 = vpop.f32.mrb[0].mxu0
  %v1300 = vpop.f32.mrb[0].mxu0
  %v1301 = vadd.f32 %v1012, %v1300
  %v1302 = vpop.f32.mrb[0].mxu0
  %1303 = vmatprep.mubr.bf16.mxu0 0
  %1304 = vmatmul.mubr.bf16.gmra.mrb[0].mxu0 %v568
  %v1305 = vpop.f32.mrb[0].mxu0
  %v1306 = vadd.f32 %v1017, %v1305
  %v1307 = vpop.f32.mrb[0].mxu0
  %v1308 = vpop.f32.mrb[0].mxu0
  %v1309 = vadd.f32 %v1020, %v1308
  %v1310 = vpop.f32.mrb[0].mxu0
  %1311 = vmatprep.mubr.bf16.mxu0 0
  %1312 = vmatmul.mubr.bf16.gmra.mrb[0].mxu0 %v571
  %v1313 = vpop.f32.mrb[0].mxu0
  %v1314 = vadd.f32 %v1025, %v1313
  %v1315 = vpop.f32.mrb[0].mxu0
  %v1316 = vpop.f32.mrb[0].mxu0
  %v1317 = vadd.f32 %v1028, %v1316
  %v1318 = vpop.f32.mrb[0].mxu0
  %1319 = vmatprep.mubr.bf16.mxu0 0
  %1320 = vmatmul.mubr.bf16.gmra.mrb[0].mxu0 %v574
  %v1321 = vpop.f32.mrb[0].mxu0
  %v1322 = vadd.f32 %v1033, %v1321
  %v1323 = vpop.f32.mrb[0].mxu0
  %v1324 = vpop.f32.mrb[0].mxu0
  %v1325 = vadd.f32 %v1036, %v1324
  %v1326 = vpop.f32.mrb[0].mxu0
  %1327 = vmatprep.mubr.bf16.mxu0 0
  %1328 = vmatmul.mubr.bf16.gmra.mrb[0].mxu0 %v577
  %v1329 = vpop.f32.mrb[0].mxu0
  %v1330 = vadd.f32 %v1041, %v1329
  %v1331 = vpop.f32.mrb[0].mxu0
  %v1332 = vpop.f32.mrb[0].mxu0
  %v1333 = vadd.f32 %v1044, %v1332
  %v1334 = vpop.f32.mrb[0].mxu0
  %1335 = vmatprep.mubr.bf16.mxu0 0
  %1336 = vmatmul.mubr.bf16.gmra.mrb[0].mxu0 %v580
  %v1337 = vpop.f32.mrb[0].mxu0
  %v1338 = vadd.f32 %v1049, %v1337
  %v1339 = vpop.f32.mrb[0].mxu0
  %v1340 = vpop.f32.mrb[0].mxu0
  %v1341 = vadd.f32 %v1052, %v1340
  %v1342 = vpop.f32.mrb[0].mxu0
  %1343 = vmatprep.mubr.bf16.mxu0 0
  %1344 = vmatmul.mubr.bf16.gmra.mrb[0].mxu0 %v583
  %v1345 = vpop.f32.mrb[0].mxu0
  %v1346 = vadd.f32 %v1057, %v1345
  %v1347 = vpop.f32.mrb[0].mxu0
  %v1348 = vpop.f32.mrb[0].mxu0
  %v1349 = vadd.f32 %v1060, %v1348
  %v1350 = vpop.f32.mrb[0].mxu0
  %1351 = vmatprep.mubr.bf16.mxu0 0
  %1352 = vmatmul.mubr.bf16.gmra.mrb[0].mxu0 %v586
  %v1353 = vpop.f32.mrb[0].mxu0
  %v1354 = vadd.f32 %v1065, %v1353
  %v1355 = vpop.f32.mrb[0].mxu0
  %v1356 = vpop.f32.mrb[0].mxu0
  %v1357 = vadd.f32 %v1068, %v1356
  %v1358 = vpop.f32.mrb[0].mxu0
  %1359 = vmatprep.mubr.bf16.mxu0 0
  %1360 = vmatmul.mubr.bf16.gmra.mrb[0].mxu0 %v589
  %v1361 = vpop.f32.mrb[0].mxu0
  %v1362 = vadd.f32 %v1073, %v1361
  %v1363 = vpop.f32.mrb[0].mxu0
  %v1364 = vpop.f32.mrb[0].mxu0
  %v1365 = vadd.f32 %v1076, %v1364
  %v1366 = vpop.f32.mrb[0].mxu0
  %1367 = vmatprep.mubr.bf16.mxu0 0
  %1368 = vmatmul.mubr.bf16.gmra.mrb[0].mxu0 %v592
  %v1369 = vpop.f32.mrb[0].mxu0
  %v1370 = vadd.f32 %v1081, %v1369
  %v1371 = vpop.f32.mrb[0].mxu0
  %v1372 = vpop.f32.mrb[0].mxu0
  %v1373 = vadd.f32 %v1084, %v1372
  %v1374 = vpop.f32.mrb[0].mxu0
  %1375 = vmatprep.mubr.bf16.mxu0 0
  %1376 = vmatmul.mubr.bf16.gmra.mrb[0].mxu0 %v595
  %v1377 = vpop.f32.mrb[0].mxu0
  %v1378 = vadd.f32 %v1089, %v1377
  %v1379 = vpop.f32.mrb[0].mxu0
  %v1380 = vpop.f32.mrb[0].mxu0
  %v1381 = vadd.f32 %v1092, %v1380
  %v1382 = vpop.f32.mrb[0].mxu0
  %1383 = vmatprep.mubr.bf16.mxu0 0
  %1384 = vmatmul.mubr.bf16.gmra.mrb[0].mxu0 %v598
  %v1385 = vpop.f32.mrb[0].mxu0
  %v1386 = vadd.f32 %v1097, %v1385
  %v1387 = vpop.f32.mrb[0].mxu0
  %v1388 = vpop.f32.mrb[0].mxu0
  %v1389 = vadd.f32 %v1100, %v1388
  %v1390 = vpop.f32.mrb[0].mxu0
  %1391 = vmatprep.mubr.bf16.mxu0 0
  %1392 = vmatmul.mubr.bf16.gmra.mrb[0].mxu0 %v601
  %v1393 = vpop.f32.mrb[0].mxu0
  %v1394 = vadd.f32 %v1105, %v1393
  %v1395 = vpop.f32.mrb[0].mxu0
  %v1396 = vpop.f32.mrb[0].mxu0
  %v1397 = vadd.f32 %v1108, %v1396
  %v1398 = vpop.f32.mrb[0].mxu0
  %1399 = vmatprep.mubr.bf16.mxu0 0
  %1400 = vmatmul.mubr.bf16.gmra.mrb[0].mxu0 %v604
  %v1401 = vpop.f32.mrb[0].mxu0
  %v1402 = vadd.f32 %v1113, %v1401
  %v1403 = vpop.f32.mrb[0].mxu0
  %v1404 = vpop.f32.mrb[0].mxu0
  %v1405 = vadd.f32 %v1116, %v1404
  %v1406 = vpop.f32.mrb[0].mxu0
  %1407 = vmatprep.mubr.bf16.mxu0 0
  %1408 = vmatmul.mubr.bf16.gmra.mrb[0].mxu0 %v607
  %v1409 = vpop.f32.mrb[0].mxu0
  %v1410 = vadd.f32 %v1121, %v1409
  %v1411 = vpop.f32.mrb[0].mxu0
  %v1412 = vpop.f32.mrb[0].mxu0
  %v1413 = vadd.f32 %v1124, %v1412
  %v1414 = vpop.f32.mrb[0].mxu0
  %1415 = vmatprep.mubr.bf16.mxu0 0
  %1416 = vmatmul.mubr.bf16.gmra.mrb[0].mxu0 %v610
  %v1417 = vpop.f32.mrb[0].mxu0
  %v1418 = vadd.f32 %v1129, %v1417
  %v1419 = vpop.f32.mrb[0].mxu0
  %v1420 = vpop.f32.mrb[0].mxu0
  %v1421 = vadd.f32 %v1132, %v1420
  %v1422 = vpop.f32.mrb[0].mxu0
  %1423 = vmatprep.mubr.bf16.mxu0 0
  %1424 = vmatmul.mubr.bf16.gmra.mrb[0].mxu0 %v613
  %v1425 = vpop.f32.mrb[0].mxu0
  %v1426 = vadd.f32 %v1137, %v1425
  %v1427 = vpop.f32.mrb[0].mxu0
  %v1428 = vpop.f32.mrb[0].mxu0
  %v1429 = vadd.f32 %v1140, %v1428
  %v1430 = vpop.f32.mrb[0].mxu0
  %1431 = vdwg.mxu0
  %v1432 = vmax.f32 %v1178, 0.0
  %v1433 = vmax.f32 %v1181, 0.0
  %v1434 = vmax.f32 %v1186, 0.0
  %v1435 = vmax.f32 %v1189, 0.0
  %v1436 = vmax.f32 %v1194, 0.0
  %v1437 = vmax.f32 %v1197, 0.0
  %v1438 = vmax.f32 %v1202, 0.0
  %v1439 = vmax.f32 %v1205, 0.0
  %v1440 = vmax.f32 %v1210, 0.0
  %v1441 = vmax.f32 %v1213, 0.0
  %v1442 = vmax.f32 %v1218, 0.0
  %v1443 = vmax.f32 %v1221, 0.0
  %v1444 = vmax.f32 %v1226, 0.0
  %v1445 = vmax.f32 %v1229, 0.0
  %v1446 = vmax.f32 %v1234, 0.0
  %v1447 = vmax.f32 %v1237, 0.0
  %v1448 = vmax.f32 %v1242, 0.0
  %v1449 = vmax.f32 %v1245, 0.0
  %v1450 = vmax.f32 %v1250, 0.0
  %v1451 = vmax.f32 %v1253, 0.0
  %v1452 = vmax.f32 %v1258, 0.0
  %v1453 = vmax.f32 %v1261, 0.0
  %v1454 = vmax.f32 %v1266, 0.0
  %v1455 = vmax.f32 %v1269, 0.0
  %v1456 = vmax.f32 %v1274, 0.0
  %v1457 = vmax.f32 %v1277, 0.0
  %v1458 = vmax.f32 %v1282, 0.0
  %v1459 = vmax.f32 %v1285, 0.0
  %v1460 = vmax.f32 %v1290, 0.0
  %v1461 = vmax.f32 %v1293, 0.0
  %v1462 = vmax.f32 %v1298, 0.0
  %v1463 = vmax.f32 %v1301, 0.0
  %v1464 = vmax.f32 %v1306, 0.0
  %v1465 = vmax.f32 %v1309, 0.0
  %v1466 = vmax.f32 %v1314, 0.0
  %v1467 = vmax.f32 %v1317, 0.0
  %v1468 = vmax.f32 %v1322, 0.0
  %v1469 = vmax.f32 %v1325, 0.0
  %v1470 = vmax.f32 %v1330, 0.0
  %v1471 = vmax.f32 %v1333, 0.0
  %v1472 = vmax.f32 %v1338, 0.0
  %v1473 = vmax.f32 %v1341, 0.0
  %v1474 = vmax.f32 %v1346, 0.0
  %v1475 = vmax.f32 %v1349, 0.0
  %v1476 = vmax.f32 %v1354, 0.0
  %v1477 = vmax.f32 %v1357, 0.0
  %v1478 = vmax.f32 %v1362, 0.0
  %v1479 = vmax.f32 %v1365, 0.0
  %v1480 = vmax.f32 %v1370, 0.0
  %v1481 = vmax.f32 %v1373, 0.0
  %v1482 = vmax.f32 %v1378, 0.0
  %v1483 = vmax.f32 %v1381, 0.0
  %v1484 = vmax.f32 %v1386, 0.0
  %v1485 = vmax.f32 %v1389, 0.0
  %v1486 = vmax.f32 %v1394, 0.0
  %v1487 = vmax.f32 %v1397, 0.0
  %v1488 = vmax.f32 %v1402, 0.0
  %v1489 = vmax.f32 %v1405, 0.0
  %v1490 = vmax.f32 %v1410, 0.0
  %v1491 = vmax.f32 %v1413, 0.0
  %v1492 = vmax.f32 %v1418, 0.0
  %v1493 = vmax.f32 %v1421, 0.0
  %v1494 = vmax.f32 %v1426, 0.0
  %v1495 = vmax.f32 %v1429, 0.0
  %v1496 = vpack.c.bf16 %v1433, %v1432
  %v1497 = vpack.c.bf16 %v1435, %v1434
  %v1498 = vpack.c.bf16 %v1437, %v1436
  %v1499 = vpack.c.bf16 %v1439, %v1438
  %v1500 = vpack.c.bf16 %v1441, %v1440
  %v1501 = vpack.c.bf16 %v1443, %v1442
  %v1502 = vpack.c.bf16 %v1445, %v1444
  %v1503 = vpack.c.bf16 %v1447, %v1446
  %v1504 = vpack.c.bf16 %v1449, %v1448
  %v1505 = vpack.c.bf16 %v1451, %v1450
  %v1506 = vpack.c.bf16 %v1453, %v1452
  %v1507 = vpack.c.bf16 %v1455, %v1454
  %v1508 = vpack.c.bf16 %v1457, %v1456
  %v1509 = vpack.c.bf16 %v1459, %v1458
  %v1510 = vpack.c.bf16 %v1461, %v1460
  %v1511 = vpack.c.bf16 %v1463, %v1462
  %v1512 = vpack.c.bf16 %v1465, %v1464
  %v1513 = vpack.c.bf16 %v1467, %v1466
  %v1514 = vpack.c.bf16 %v1469, %v1468
  %v1515 = vpack.c.bf16 %v1471, %v1470
  %v1516 = vpack.c.bf16 %v1473, %v1472
  %v1517 = vpack.c.bf16 %v1475, %v1474
  %v1518 = vpack.c.bf16 %v1477, %v1476
  %v1519 = vpack.c.bf16 %v1479, %v1478
  %v1520 = vpack.c.bf16 %v1481, %v1480
  %v1521 = vpack.c.bf16 %v1483, %v1482
  %v1522 = vpack.c.bf16 %v1485, %v1484
  %v1523 = vpack.c.bf16 %v1487, %v1486
  %v1524 = vpack.c.bf16 %v1489, %v1488
  %v1525 = vpack.c.bf16 %v1491, %v1490
  %v1526 = vpack.c.bf16 %v1493, %v1492
  %v1527 = vpack.c.bf16 %v1495, %v1494
  %v1560 = vunpack.c.l.b16 %v1496
  %v1561 = vunpack.c.h.b16 %v1496
  %v1562 = vunpack.c.l.b16 %v1497
  %v1563 = vunpack.c.h.b16 %v1497
  %v1564 = vunpack.c.l.b16 %v1498
  %v1565 = vunpack.c.h.b16 %v1498
  %v1566 = vunpack.c.l.b16 %v1499
  %v1567 = vunpack.c.h.b16 %v1499
  %v1568 = vunpack.c.l.b16 %v1500
  %v1569 = vunpack.c.h.b16 %v1500
  %v1570 = vunpack.c.l.b16 %v1501
  %v1571 = vunpack.c.h.b16 %v1501
  %v1572 = vunpack.c.l.b16 %v1502
  %v1573 = vunpack.c.h.b16 %v1502
  %v1574 = vunpack.c.l.b16 %v1503
  %v1575 = vunpack.c.h.b16 %v1503
  %v1576 = vunpack.c.l.b16 %v1504
  %v1577 = vunpack.c.h.b16 %v1504
  %v1578 = vunpack.c.l.b16 %v1505
  %v1579 = vunpack.c.h.b16 %v1505
  %v1580 = vunpack.c.l.b16 %v1506
  %v1581 = vunpack.c.h.b16 %v1506
  %v1582 = vunpack.c.l.b16 %v1507
  %v1583 = vunpack.c.h.b16 %v1507
  %v1584 = vunpack.c.l.b16 %v1508
  %v1585 = vunpack.c.h.b16 %v1508
  %v1586 = vunpack.c.l.b16 %v1509
  %v1587 = vunpack.c.h.b16 %v1509
  %v1588 = vunpack.c.l.b16 %v1510
  %v1589 = vunpack.c.h.b16 %v1510
  %v1590 = vunpack.c.l.b16 %v1511
  %v1591 = vunpack.c.h.b16 %v1511
  %v1592 = vunpack.c.l.b16 %v1512
  %v1593 = vunpack.c.h.b16 %v1512
  %v1594 = vunpack.c.l.b16 %v1513
  %v1595 = vunpack.c.h.b16 %v1513
  %v1596 = vunpack.c.l.b16 %v1514
  %v1597 = vunpack.c.h.b16 %v1514
  %v1598 = vunpack.c.l.b16 %v1515
  %v1599 = vunpack.c.h.b16 %v1515
  %v1600 = vunpack.c.l.b16 %v1516
  %v1601 = vunpack.c.h.b16 %v1516
  %v1602 = vunpack.c.l.b16 %v1517
  %v1603 = vunpack.c.h.b16 %v1517
  %v1604 = vunpack.c.l.b16 %v1518
  %v1605 = vunpack.c.h.b16 %v1518
  %v1606 = vunpack.c.l.b16 %v1519
  %v1607 = vunpack.c.h.b16 %v1519
  %v1608 = vunpack.c.l.b16 %v1520
  %v1609 = vunpack.c.h.b16 %v1520
  %v1610 = vunpack.c.l.b16 %v1521
  %v1611 = vunpack.c.h.b16 %v1521
  %v1612 = vunpack.c.l.b16 %v1522
  %v1613 = vunpack.c.h.b16 %v1522
  %v1614 = vunpack.c.l.b16 %v1523
  %v1615 = vunpack.c.h.b16 %v1523
  %v1616 = vunpack.c.l.b16 %v1524
  %v1617 = vunpack.c.h.b16 %v1524
  %v1618 = vunpack.c.l.b16 %v1525
  %v1619 = vunpack.c.h.b16 %v1525
  %v1620 = vunpack.c.l.b16 %v1526
  %v1621 = vunpack.c.h.b16 %v1526
  %v1622 = vunpack.c.l.b16 %v1527
  %v1623 = vunpack.c.h.b16 %v1527
  %v1624 = vpack.c.b16 %v1560, %v1560
  %v1625 = vpack.c.b16 %v1561, %v1561
  %v1626 = vpack.c.b16 %v1562, %v1562
  %v1627 = vpack.c.b16 %v1563, %v1563
  %v1628 = vpack.c.b16 %v1564, %v1564
  %v1629 = vpack.c.b16 %v1565, %v1565
  %v1630 = vpack.c.b16 %v1566, %v1566
  %v1631 = vpack.c.b16 %v1567, %v1567
  %v1632 = vpack.c.b16 %v1568, %v1568
  %v1633 = vpack.c.b16 %v1569, %v1569
  %v1634 = vpack.c.b16 %v1570, %v1570
  %v1635 = vpack.c.b16 %v1571, %v1571
  %v1636 = vpack.c.b16 %v1572, %v1572
  %v1637 = vpack.c.b16 %v1573, %v1573
  %v1638 = vpack.c.b16 %v1574, %v1574
  %v1639 = vpack.c.b16 %v1575, %v1575
  %v1640 = vpack.c.b16 %v1576, %v1576
  %v1641 = vpack.c.b16 %v1577, %v1577
  %v1642 = vpack.c.b16 %v1578, %v1578
  %v1643 = vpack.c.b16 %v1579, %v1579
  %v1644 = vpack.c.b16 %v1580, %v1580
  %v1645 = vpack.c.b16 %v1581, %v1581
  %v1646 = vpack.c.b16 %v1582, %v1582
  %v1647 = vpack.c.b16 %v1583, %v1583
  %v1648 = vpack.c.b16 %v1584, %v1584
  %v1649 = vpack.c.b16 %v1585, %v1585
  %v1650 = vpack.c.b16 %v1586, %v1586
  %v1651 = vpack.c.b16 %v1587, %v1587
  %v1652 = vpack.c.b16 %v1588, %v1588
  %v1653 = vpack.c.b16 %v1589, %v1589
  %v1654 = vpack.c.b16 %v1590, %v1590
  %v1655 = vpack.c.b16 %v1591, %v1591
  %v1656 = vpack.c.b16 %v1592, %v1592
  %v1657 = vpack.c.b16 %v1593, %v1593
  %v1658 = vpack.c.b16 %v1594, %v1594
  %v1659 = vpack.c.b16 %v1595, %v1595
  %v1660 = vpack.c.b16 %v1596, %v1596
  %v1661 = vpack.c.b16 %v1597, %v1597
  %v1662 = vpack.c.b16 %v1598, %v1598
  %v1663 = vpack.c.b16 %v1599, %v1599
  %v1664 = vpack.c.b16 %v1600, %v1600
  %v1665 = vpack.c.b16 %v1601, %v1601
  %v1666 = vpack.c.b16 %v1602, %v1602
  %v1667 = vpack.c.b16 %v1603, %v1603
  %v1668 = vpack.c.b16 %v1604, %v1604
  %v1669 = vpack.c.b16 %v1605, %v1605
  %v1670 = vpack.c.b16 %v1606, %v1606
  %v1671 = vpack.c.b16 %v1607, %v1607
  %v1672 = vpack.c.b16 %v1608, %v1608
  %v1673 = vpack.c.b16 %v1609, %v1609
  %v1674 = vpack.c.b16 %v1610, %v1610
  %v1675 = vpack.c.b16 %v1611, %v1611
  %v1676 = vpack.c.b16 %v1612, %v1612
  %v1677 = vpack.c.b16 %v1613, %v1613
  %v1678 = vpack.c.b16 %v1614, %v1614
  %v1679 = vpack.c.b16 %v1615, %v1615
  %v1680 = vpack.c.b16 %v1616, %v1616
  %v1681 = vpack.c.b16 %v1617, %v1617
  %v1682 = vpack.c.b16 %v1618, %v1618
  %v1683 = vpack.c.b16 %v1619, %v1619
  %v1684 = vpack.c.b16 %v1620, %v1620
  %v1685 = vpack.c.b16 %v1621, %v1621
  %v1686 = vpack.c.b16 %v1622, %v1622
  %v1687 = vpack.c.b16 %v1623, %v1623
  %1752 = vst [vmem:[%s3] sm:$0xf] %v1624
  %1753 = vst [vmem:[%s3 + $0x4] sm:$0xf] %v1625
  %1754 = vst [vmem:[%s3 + $0x8] sm:$0xf] %v1626
  %1755 = vst [vmem:[%s3 + $0xc] sm:$0xf] %v1627
  %1756 = vst [vmem:[%s3 + $0x10] sm:$0xf] %v1628
  %1757 = vst [vmem:[%s3 + $0x14] sm:$0xf] %v1629
  %1758 = vst [vmem:[%s3 + $0x18] sm:$0xf] %v1630
  %1759 = vst [vmem:[%s3 + $0x1c] sm:$0xf] %v1631
  %1760 = vst [vmem:[%s3 + $0x20] sm:$0xf] %v1632
  %1761 = vst [vmem:[%s3 + $0x24] sm:$0xf] %v1633
  %1762 = vst [vmem:[%s3 + $0x28] sm:$0xf] %v1634
  %1763 = vst [vmem:[%s3 + $0x2c] sm:$0xf] %v1635
  %1764 = vst [vmem:[%s3 + $0x30] sm:$0xf] %v1636
  %1765 = vst [vmem:[%s3 + $0x34] sm:$0xf] %v1637
  %1766 = vst [vmem:[%s3 + $0x38] sm:$0xf] %v1638
  %1767 = vst [vmem:[%s3 + $0x3c] sm:$0xf] %v1639
  %1768 = vst [vmem:[%s3 + $0x40] sm:$0xf] %v1640
  %1769 = vst [vmem:[%s3 + $0x44] sm:$0xf] %v1641
  %1770 = vst [vmem:[%s3 + $0x48] sm:$0xf] %v1642
  %1771 = vst [vmem:[%s3 + $0x4c] sm:$0xf] %v1643
  %1772 = vst [vmem:[%s3 + $0x50] sm:$0xf] %v1644
  %1773 = vst [vmem:[%s3 + $0x54] sm:$0xf] %v1645
  %1774 = vst [vmem:[%s3 + $0x58] sm:$0xf] %v1646
  %1775 = vst [vmem:[%s3 + $0x5c] sm:$0xf] %v1647
  %1776 = vst [vmem:[%s3 + $0x60] sm:$0xf] %v1648
  %1777 = vst [vmem:[%s3 + $0x64] sm:$0xf] %v1649
  %1778 = vst [vmem:[%s3 + $0x68] sm:$0xf] %v1650
  %1779 = vst [vmem:[%s3 + $0x6c] sm:$0xf] %v1651
  %1780 = vst [vmem:[%s3 + $0x70] sm:$0xf] %v1652
  %1781 = vst [vmem:[%s3 + $0x74] sm:$0xf] %v1653
  %1782 = vst [vmem:[%s3 + $0x78] sm:$0xf] %v1654
  %1783 = vst [vmem:[%s3 + $0x7c] sm:$0xf] %v1655
  %1784 = vst [vmem:[%s3 + $0x80] sm:$0xf] %v1656
  %1785 = vst [vmem:[%s3 + $0x84] sm:$0xf] %v1657
  %1786 = vst [vmem:[%s3 + $0x88] sm:$0xf] %v1658
  %1787 = vst [vmem:[%s3 + $0x8c] sm:$0xf] %v1659
  %1788 = vst [vmem:[%s3 + $0x90] sm:$0xf] %v1660
  %1789 = vst [vmem:[%s3 + $0x94] sm:$0xf] %v1661
  %1790 = vst [vmem:[%s3 + $0x98] sm:$0xf] %v1662
  %1791 = vst [vmem:[%s3 + $0x9c] sm:$0xf] %v1663
  %1792 = vst [vmem:[%s3 + $0xa0] sm:$0xf] %v1664
  %1793 = vst [vmem:[%s3 + $0xa4] sm:$0xf] %v1665
  %1794 = vst [vmem:[%s3 + $0xa8] sm:$0xf] %v1666
  %1795 = vst [vmem:[%s3 + $0xac] sm:$0xf] %v1667
  %1796 = vst [vmem:[%s3 + $0xb0] sm:$0xf] %v1668
  %1797 = vst [vmem:[%s3 + $0xb4] sm:$0xf] %v1669
  %1798 = vst [vmem:[%s3 + $0xb8] sm:$0xf] %v1670
  %1799 = vst [vmem:[%s3 + $0xbc] sm:$0xf] %v1671
  %1800 = vst [vmem:[%s3 + $0xc0] sm:$0xf] %v1672
  %1801 = vst [vmem:[%s3 + $0xc4] sm:$0xf] %v1673
  %1802 = vst [vmem:[%s3 + $0xc8] sm:$0xf] %v1674
  %1803 = vst [vmem:[%s3 + $0xcc] sm:$0xf] %v1675
  %1804 = vst [vmem:[%s3 + $0xd0] sm:$0xf] %v1676
  %1805 = vst [vmem:[%s3 + $0xd4] sm:$0xf] %v1677
  %1806 = vst [vmem:[%s3 + $0xd8] sm:$0xf] %v1678
  %1807 = vst [vmem:[%s3 + $0xdc] sm:$0xf] %v1679
  %1808 = vst [vmem:[%s3 + $0xe0] sm:$0xf] %v1680
  %1809 = vst [vmem:[%s3 + $0xe4] sm:$0xf] %v1681
  %1810 = vst [vmem:[%s3 + $0xe8] sm:$0xf] %v1682
  %1811 = vst [vmem:[%s3 + $0xec] sm:$0xf] %v1683
  %1812 = vst [vmem:[%s3 + $0xf0] sm:$0xf] %v1684
  %1813 = vst [vmem:[%s3 + $0xf4] sm:$0xf] %v1685
  %1814 = vst [vmem:[%s3 + $0xf8] sm:$0xf] %v1686
  %1815 = vst [vmem:[%s3 + $0xfc] sm:$0xf] %v1687
  // Predicated region
  $region14: #{resnetx_feature_extractor_forward.6} parent=0 // pred_check
    _
  $region15: #{resnetx_feature_extractor_forward.6} parent=0 // pred_check_branch
    %1817 = sbr.rel (0) target = $region17
  $region16: #{resnetx_feature_extractor_forward.6} parent=0 // pred_region
    _
  $region17: #{resnetx_feature_extractor_forward.6} parent=0 // pred_fallthru
    _
  // Predicated region
  $region18: #{resnetx_feature_extractor_forward.6} parent=0 // pred_check
    _
  $region19: #{resnetx_feature_extractor_forward.6} parent=0 // pred_check_branch
    %1819 = sbr.rel (0) target = $region21
  $region20: #{resnetx_feature_extractor_forward.6} parent=0 // pred_region
    _
  $region21: #{resnetx_feature_extractor_forward.6} parent=0 // pred_fallthru
    _

// kernel: resnetx_feature_extractor_forward.7
$region0: #{resnetx_feature_extractor_forward.7}
  #allocation0 [shape = 'u32[]', space=smem, size = 0x4, offset = 0x4, fixed_abs, tag = 'smem constant byte address 0x4 - core index']
  #allocation1 [shape = 'u32[144,128]{1,0:T(1,128)}', space=vmem, size = 0x12000, scoped, tag = 'internal scratch']
  %s0 = inlined_call_operand.vmem [shape: bf16[512,384], index: 0, kind: input, shape index: {}]
  %s1 = inlined_call_operand.vmem [shape: bf16[384,128], index: 1, kind: input, shape index: {}]
  %s2 = inlined_call_operand.vmem [shape: f32[1,128], index: 2, kind: input, shape index: {}]
  %s3 = inlined_call_operand.vmem [shape: bf16[512,128], index: 3, kind: input, shape index: {}]
  %s4 = inlined_call_operand.vmem [shape: bf16[512,128], index: 4, kind: output, shape index: {}]
  %s5 = sld [smem:[#allocation0]]
  $region26: #{resnetx_feature_extractor_forward.7} parent=0
    _
  %s7 = ssub.s32 1, %s5
  %s8 = scalar_select 0, %s7, %s5
  // Predicated region
  $region2: #{resnetx_feature_extractor_forward.7} parent=0 // pred_check
    _
  $region3: #{resnetx_feature_extractor_forward.7} parent=0 // pred_check_branch
    %10 = sbr.rel (0) target = $region5
  $region4: #{resnetx_feature_extractor_forward.7} parent=0 // pred_region
    _
  $region5: #{resnetx_feature_extractor_forward.7} parent=0 // pred_fallthru
    _
  // Predicated region
  $region6: #{resnetx_feature_extractor_forward.7} parent=0 // pred_check
    _
  $region7: #{resnetx_feature_extractor_forward.7} parent=0 // pred_check_branch
    %12 = sbr.rel (0) target = $region9
  $region8: #{resnetx_feature_extractor_forward.7} parent=0 // pred_region
    _
  $region9: #{resnetx_feature_extractor_forward.7} parent=0 // pred_fallthru
    _
  // Predicated region
  $region10: #{resnetx_feature_extractor_forward.7} parent=0 // pred_check
    _
  $region11: #{resnetx_feature_extractor_forward.7} parent=0 // pred_check_branch
    %14 = sbr.rel (0) target = $region13
  $region12: #{resnetx_feature_extractor_forward.7} parent=0 // pred_region
    _
  $region13: #{resnetx_feature_extractor_forward.7} parent=0 // pred_fallthru
    _
  // Predicated region
  $region14: #{resnetx_feature_extractor_forward.7} parent=0 // pred_check
    _
  $region15: #{resnetx_feature_extractor_forward.7} parent=0 // pred_check_branch
    %16 = sbr.rel (0) target = $region17
  $region16: #{resnetx_feature_extractor_forward.7} parent=0 // pred_region
    _
  $region17: #{resnetx_feature_extractor_forward.7} parent=0 // pred_fallthru
    _
  %v18 = vld [vmem:[%s0] sm:$0xff]
  %v19 = vld [vmem:[%s0 + $0x8] sm:$0xf]
  %v20 = vld [vmem:[%s0 + $0xc] sm:$0xff]
  %v21 = vld [vmem:[%s0 + $0x14] sm:$0xf]
  %v22 = vld [vmem:[%s0 + $0x18] sm:$0xff]
  %v23 = vld [vmem:[%s0 + $0x20] sm:$0xf]
  %v24 = vld [vmem:[%s0 + $0x24] sm:$0xff]
  %v25 = vld [vmem:[%s0 + $0x2c] sm:$0xf]
  %v26 = vld [vmem:[%s0 + $0x30] sm:$0xff]
  %v27 = vld [vmem:[%s0 + $0x38] sm:$0xf]
  %v28 = vld [vmem:[%s0 + $0x3c] sm:$0xff]
  %v29 = vld [vmem:[%s0 + $0x44] sm:$0xf]
  %v30 = vld [vmem:[%s0 + $0x48] sm:$0xff]
  %v31 = vld [vmem:[%s0 + $0x50] sm:$0xf]
  %v32 = vld [vmem:[%s0 + $0x54] sm:$0xff]
  %v33 = vld [vmem:[%s0 + $0x5c] sm:$0xf]
  %v34 = vld [vmem:[%s0 + $0x60] sm:$0xff]
  %v35 = vld [vmem:[%s0 + $0x68] sm:$0xf]
  %v36 = vld [vmem:[%s0 + $0x6c] sm:$0xff]
  %v37 = vld [vmem:[%s0 + $0x74] sm:$0xf]
  %v38 = vld [vmem:[%s0 + $0x78] sm:$0xff]
  %v39 = vld [vmem:[%s0 + $0x80] sm:$0xf]
  %v40 = vld [vmem:[%s0 + $0x84] sm:$0xff]
  %v41 = vld [vmem:[%s0 + $0x8c] sm:$0xf]
  %v42 = vld [vmem:[%s0 + $0x90] sm:$0xff]
  %v43 = vld [vmem:[%s0 + $0x98] sm:$0xf]
  %v44 = vld [vmem:[%s0 + $0x9c] sm:$0xff]
  %v45 = vld [vmem:[%s0 + $0xa4] sm:$0xf]
  %v46 = vld [vmem:[%s0 + $0xa8] sm:$0xff]
  %v47 = vld [vmem:[%s0 + $0xb0] sm:$0xf]
  %v48 = vld [vmem:[%s0 + $0xb4] sm:$0xff]
  %v49 = vld [vmem:[%s0 + $0xbc] sm:$0xf]
  %v50 = vld [vmem:[%s0 + $0xc0] sm:$0xff]
  %v51 = vld [vmem:[%s0 + $0xc8] sm:$0xf]
  %v52 = vld [vmem:[%s0 + $0xcc] sm:$0xff]
  %v53 = vld [vmem:[%s0 + $0xd4] sm:$0xf]
  %v54 = vld [vmem:[%s0 + $0xd8] sm:$0xff]
  %v55 = vld [vmem:[%s0 + $0xe0] sm:$0xf]
  %v56 = vld [vmem:[%s0 + $0xe4] sm:$0xff]
  %v57 = vld [vmem:[%s0 + $0xec] sm:$0xf]
  %v58 = vld [vmem:[%s0 + $0xf0] sm:$0xff]
  %v59 = vld [vmem:[%s0 + $0xf8] sm:$0xf]
  %v60 = vld [vmem:[%s0 + $0xfc] sm:$0xff]
  %v61 = vld [vmem:[%s0 + $0x104] sm:$0xf]
  %v62 = vld [vmem:[%s0 + $0x108] sm:$0xff]
  %v63 = vld [vmem:[%s0 + $0x110] sm:$0xf]
  %v64 = vld [vmem:[%s0 + $0x114] sm:$0xff]
  %v65 = vld [vmem:[%s0 + $0x11c] sm:$0xf]
  %v66 = vld [vmem:[%s0 + $0x120] sm:$0xff]
  %v67 = vld [vmem:[%s0 + $0x128] sm:$0xf]
  %v68 = vld [vmem:[%s0 + $0x12c] sm:$0xff]
  %v69 = vld [vmem:[%s0 + $0x134] sm:$0xf]
  %v70 = vld [vmem:[%s0 + $0x138] sm:$0xff]
  %v71 = vld [vmem:[%s0 + $0x140] sm:$0xf]
  %v72 = vld [vmem:[%s0 + $0x144] sm:$0xff]
  %v73 = vld [vmem:[%s0 + $0x14c] sm:$0xf]
  %v74 = vld [vmem:[%s0 + $0x150] sm:$0xff]
  %v75 = vld [vmem:[%s0 + $0x158] sm:$0xf]
  %v76 = vld [vmem:[%s0 + $0x15c] sm:$0xff]
  %v77 = vld [vmem:[%s0 + $0x164] sm:$0xf]
  %v78 = vld [vmem:[%s0 + $0x168] sm:$0xff]
  %v79 = vld [vmem:[%s0 + $0x170] sm:$0xf]
  %v80 = vld [vmem:[%s0 + $0x174] sm:$0xff]
  %v81 = vld [vmem:[%s0 + $0x17c] sm:$0xf]
  %v82 = vld [vmem:[%s0 + $0x180] sm:$0xff]
  %v83 = vld [vmem:[%s0 + $0x188] sm:$0xf]
  %v84 = vld [vmem:[%s0 + $0x18c] sm:$0xff]
  %v85 = vld [vmem:[%s0 + $0x194] sm:$0xf]
  %v86 = vld [vmem:[%s0 + $0x198] sm:$0xff]
  %v87 = vld [vmem:[%s0 + $0x1a0] sm:$0xf]
  %v88 = vld [vmem:[%s0 + $0x1a4] sm:$0xff]
  %v89 = vld [vmem:[%s0 + $0x1ac] sm:$0xf]
  %v90 = vld [vmem:[%s0 + $0x1b0] sm:$0xff]
  %v91 = vld [vmem:[%s0 + $0x1b8] sm:$0xf]
  %v92 = vld [vmem:[%s0 + $0x1bc] sm:$0xff]
  %v93 = vld [vmem:[%s0 + $0x1c4] sm:$0xf]
  %v94 = vld [vmem:[%s0 + $0x1c8] sm:$0xff]
  %v95 = vld [vmem:[%s0 + $0x1d0] sm:$0xf]
  %v96 = vld [vmem:[%s0 + $0x1d4] sm:$0xff]
  %v97 = vld [vmem:[%s0 + $0x1dc] sm:$0xf]
  %v98 = vld [vmem:[%s0 + $0x1e0] sm:$0xff]
  %v99 = vld [vmem:[%s0 + $0x1e8] sm:$0xf]
  %v100 = vld [vmem:[%s0 + $0x1ec] sm:$0xff]
  %v101 = vld [vmem:[%s0 + $0x1f4] sm:$0xf]
  %v102 = vld [vmem:[%s0 + $0x1f8] sm:$0xff]
  %v103 = vld [vmem:[%s0 + $0x200] sm:$0xf]
  %v104 = vld [vmem:[%s0 + $0x204] sm:$0xff]
  %v105 = vld [vmem:[%s0 + $0x20c] sm:$0xf]
  %v106 = vld [vmem:[%s0 + $0x210] sm:$0xff]
  %v107 = vld [vmem:[%s0 + $0x218] sm:$0xf]
  %v108 = vld [vmem:[%s0 + $0x21c] sm:$0xff]
  %v109 = vld [vmem:[%s0 + $0x224] sm:$0xf]
  %v110 = vld [vmem:[%s0 + $0x228] sm:$0xff]
  %v111 = vld [vmem:[%s0 + $0x230] sm:$0xf]
  %v112 = vld [vmem:[%s0 + $0x234] sm:$0xff]
  %v113 = vld [vmem:[%s0 + $0x23c] sm:$0xf]
  %v114 = vld [vmem:[%s0 + $0x240] sm:$0xff]
  %v115 = vld [vmem:[%s0 + $0x248] sm:$0xf]
  %v116 = vld [vmem:[%s0 + $0x24c] sm:$0xff]
  %v117 = vld [vmem:[%s0 + $0x254] sm:$0xf]
  %v118 = vld [vmem:[%s0 + $0x258] sm:$0xff]
  %v119 = vld [vmem:[%s0 + $0x260] sm:$0xf]
  %v120 = vld [vmem:[%s0 + $0x264] sm:$0xff]
  %v121 = vld [vmem:[%s0 + $0x26c] sm:$0xf]
  %v122 = vld [vmem:[%s0 + $0x270] sm:$0xff]
  %v123 = vld [vmem:[%s0 + $0x278] sm:$0xf]
  %v124 = vld [vmem:[%s0 + $0x27c] sm:$0xff]
  %v125 = vld [vmem:[%s0 + $0x284] sm:$0xf]
  %v126 = vld [vmem:[%s0 + $0x288] sm:$0xff]
  %v127 = vld [vmem:[%s0 + $0x290] sm:$0xf]
  %v128 = vld [vmem:[%s0 + $0x294] sm:$0xff]
  %v129 = vld [vmem:[%s0 + $0x29c] sm:$0xf]
  %v130 = vld [vmem:[%s0 + $0x2a0] sm:$0xff]
  %v131 = vld [vmem:[%s0 + $0x2a8] sm:$0xf]
  %v132 = vld [vmem:[%s0 + $0x2ac] sm:$0xff]
  %v133 = vld [vmem:[%s0 + $0x2b4] sm:$0xf]
  %v134 = vld [vmem:[%s0 + $0x2b8] sm:$0xff]
  %v135 = vld [vmem:[%s0 + $0x2c0] sm:$0xf]
  %v136 = vld [vmem:[%s0 + $0x2c4] sm:$0xff]
  %v137 = vld [vmem:[%s0 + $0x2cc] sm:$0xf]
  %v138 = vld [vmem:[%s0 + $0x2d0] sm:$0xff]
  %v139 = vld [vmem:[%s0 + $0x2d8] sm:$0xf]
  %v140 = vld [vmem:[%s0 + $0x2dc] sm:$0xff]
  %v141 = vld [vmem:[%s0 + $0x2e4] sm:$0xf]
  %v142 = vld [vmem:[%s0 + $0x2e8] sm:$0xff]
  %v143 = vld [vmem:[%s0 + $0x2f0] sm:$0xf]
  %v144 = vld [vmem:[%s0 + $0x2f4] sm:$0xff]
  %v145 = vld [vmem:[%s0 + $0x2fc] sm:$0xf]
  %v146 = vld [vmem:[%s1] sm:$0xf]
  %v147 = vld [vmem:[%s1 + $0x4] sm:$0xf]
  %v148 = vld [vmem:[%s1 + $0x8] sm:$0xf]
  %v149 = vld [vmem:[%s1 + $0xc] sm:$0xf]
  %v150 = vld [vmem:[%s1 + $0x10] sm:$0xf]
  %v151 = vld [vmem:[%s1 + $0x14] sm:$0xf]
  %v152 = vld [vmem:[%s1 + $0x18] sm:$0xf]
  %v153 = vld [vmem:[%s1 + $0x1c] sm:$0xf]
  %v154 = vld [vmem:[%s1 + $0x20] sm:$0xf]
  %v155 = vld [vmem:[%s1 + $0x24] sm:$0xf]
  %v156 = vld [vmem:[%s1 + $0x28] sm:$0xf]
  %v157 = vld [vmem:[%s1 + $0x2c] sm:$0xf]
  %v158 = vld [vmem:[%s1 + $0x30] sm:$0xf]
  %v159 = vld [vmem:[%s1 + $0x34] sm:$0xf]
  %v160 = vld [vmem:[%s1 + $0x38] sm:$0xf]
  %v161 = vld [vmem:[%s1 + $0x3c] sm:$0xf]
  %v162 = vld [vmem:[%s1 + $0x40] sm:$0xf]
  %v163 = vld [vmem:[%s1 + $0x44] sm:$0xf]
  %v164 = vld [vmem:[%s1 + $0x48] sm:$0xf]
  %v165 = vld [vmem:[%s1 + $0x4c] sm:$0xf]
  %v166 = vld [vmem:[%s1 + $0x50] sm:$0xf]
  %v167 = vld [vmem:[%s1 + $0x54] sm:$0xf]
  %v168 = vld [vmem:[%s1 + $0x58] sm:$0xf]
  %v169 = vld [vmem:[%s1 + $0x5c] sm:$0xf]
  %v170 = vld [vmem:[%s1 + $0x60] sm:$0xf]
  %v171 = vld [vmem:[%s1 + $0x64] sm:$0xf]
  %v172 = vld [vmem:[%s1 + $0x68] sm:$0xf]
  %v173 = vld [vmem:[%s1 + $0x6c] sm:$0xf]
  %v174 = vld [vmem:[%s1 + $0x70] sm:$0xf]
  %v175 = vld [vmem:[%s1 + $0x74] sm:$0xf]
  %v176 = vld [vmem:[%s1 + $0x78] sm:$0xf]
  %v177 = vld [vmem:[%s1 + $0x7c] sm:$0xf]
  %v178 = vld [vmem:[%s1 + $0x80] sm:$0xf]
  %v179 = vld [vmem:[%s1 + $0x84] sm:$0xf]
  %v180 = vld [vmem:[%s1 + $0x88] sm:$0xf]
  %v181 = vld [vmem:[%s1 + $0x8c] sm:$0xf]
  %v182 = vld [vmem:[%s1 + $0x90] sm:$0xf]
  %v183 = vld [vmem:[%s1 + $0x94] sm:$0xf]
  %v184 = vld [vmem:[%s1 + $0x98] sm:$0xf]
  %v185 = vld [vmem:[%s1 + $0x9c] sm:$0xf]
  %v186 = vld [vmem:[%s1 + $0xa0] sm:$0xf]
  %v187 = vld [vmem:[%s1 + $0xa4] sm:$0xf]
  %v188 = vld [vmem:[%s1 + $0xa8] sm:$0xf]
  %v189 = vld [vmem:[%s1 + $0xac] sm:$0xf]
  %v190 = vld [vmem:[%s1 + $0xb0] sm:$0xf]
  %v191 = vld [vmem:[%s1 + $0xb4] sm:$0xf]
  %v192 = vld [vmem:[%s1 + $0xb8] sm:$0xf]
  %v193 = vld [vmem:[%s1 + $0xbc] sm:$0xf]
  %v194 = vld [vmem:[%s2] sm:$0x1]
  %v196 = vlaneseq
  %v197 = vshrl.u32 %v196, 7
  %v198 = vsub.s32 0, %v197
  %v199 = vrot.slane %v194, %v198
  %v329 = vunpack.c.l.b16 %v18
  %v330 = vunpack.c.h.b16 %v18
  %v331 = vunpack.c.l.b16 %v19
  %v332 = vunpack.c.l.b16 %v20
  %v333 = vunpack.c.h.b16 %v20
  %v334 = vunpack.c.l.b16 %v21
  %v335 = vunpack.c.l.b16 %v22
  %v336 = vunpack.c.h.b16 %v22
  %v337 = vunpack.c.l.b16 %v23
  %v338 = vunpack.c.l.b16 %v24
  %v339 = vunpack.c.h.b16 %v24
  %v340 = vunpack.c.l.b16 %v25
  %v341 = vunpack.c.l.b16 %v26
  %v342 = vunpack.c.h.b16 %v26
  %v343 = vunpack.c.l.b16 %v27
  %v344 = vunpack.c.l.b16 %v28
  %v345 = vunpack.c.h.b16 %v28
  %v346 = vunpack.c.l.b16 %v29
  %v347 = vunpack.c.l.b16 %v30
  %v348 = vunpack.c.h.b16 %v30
  %v349 = vunpack.c.l.b16 %v31
  %v350 = vunpack.c.l.b16 %v32
  %v351 = vunpack.c.h.b16 %v32
  %v352 = vunpack.c.l.b16 %v33
  %v353 = vunpack.c.l.b16 %v34
  %v354 = vunpack.c.h.b16 %v34
  %v355 = vunpack.c.l.b16 %v35
  %v356 = vunpack.c.l.b16 %v36
  %v357 = vunpack.c.h.b16 %v36
  %v358 = vunpack.c.l.b16 %v37
  %v359 = vunpack.c.l.b16 %v38
  %v360 = vunpack.c.h.b16 %v38
  %v361 = vunpack.c.l.b16 %v39
  %v362 = vunpack.c.l.b16 %v40
  %v363 = vunpack.c.h.b16 %v40
  %v364 = vunpack.c.l.b16 %v41
  %v365 = vunpack.c.l.b16 %v42
  %v366 = vunpack.c.h.b16 %v42
  %v367 = vunpack.c.l.b16 %v43
  %v368 = vunpack.c.l.b16 %v44
  %v369 = vunpack.c.h.b16 %v44
  %v370 = vunpack.c.l.b16 %v45
  %v371 = vunpack.c.l.b16 %v46
  %v372 = vunpack.c.h.b16 %v46
  %v373 = vunpack.c.l.b16 %v47
  %v374 = vunpack.c.l.b16 %v48
  %v375 = vunpack.c.h.b16 %v48
  %v376 = vunpack.c.l.b16 %v49
  %v377 = vunpack.c.l.b16 %v50
  %v378 = vunpack.c.h.b16 %v50
  %v379 = vunpack.c.l.b16 %v51
  %v380 = vunpack.c.l.b16 %v52
  %v381 = vunpack.c.h.b16 %v52
  %v382 = vunpack.c.l.b16 %v53
  %v383 = vunpack.c.l.b16 %v54
  %v384 = vunpack.c.h.b16 %v54
  %v385 = vunpack.c.l.b16 %v55
  %v386 = vunpack.c.l.b16 %v56
  %v387 = vunpack.c.h.b16 %v56
  %v388 = vunpack.c.l.b16 %v57
  %v389 = vunpack.c.l.b16 %v58
  %v390 = vunpack.c.h.b16 %v58
  %v391 = vunpack.c.l.b16 %v59
  %v392 = vunpack.c.l.b16 %v60
  %v393 = vunpack.c.h.b16 %v60
  %v394 = vunpack.c.l.b16 %v61
  %v395 = vunpack.c.l.b16 %v62
  %v396 = vunpack.c.h.b16 %v62
  %v397 = vunpack.c.l.b16 %v63
  %v398 = vunpack.c.l.b16 %v64
  %v399 = vunpack.c.h.b16 %v64
  %v400 = vunpack.c.l.b16 %v65
  %v401 = vunpack.c.l.b16 %v66
  %v402 = vunpack.c.h.b16 %v66
  %v403 = vunpack.c.l.b16 %v67
  %v404 = vunpack.c.l.b16 %v68
  %v405 = vunpack.c.h.b16 %v68
  %v406 = vunpack.c.l.b16 %v69
  %v407 = vunpack.c.l.b16 %v70
  %v408 = vunpack.c.h.b16 %v70
  %v409 = vunpack.c.l.b16 %v71
  %v410 = vunpack.c.l.b16 %v72
  %v411 = vunpack.c.h.b16 %v72
  %v412 = vunpack.c.l.b16 %v73
  %v413 = vunpack.c.l.b16 %v74
  %v414 = vunpack.c.h.b16 %v74
  %v415 = vunpack.c.l.b16 %v75
  %v416 = vunpack.c.l.b16 %v76
  %v417 = vunpack.c.h.b16 %v76
  %v418 = vunpack.c.l.b16 %v77
  %v419 = vunpack.c.l.b16 %v78
  %v420 = vunpack.c.h.b16 %v78
  %v421 = vunpack.c.l.b16 %v79
  %v422 = vunpack.c.l.b16 %v80
  %v423 = vunpack.c.h.b16 %v80
  %v424 = vunpack.c.l.b16 %v81
  %v425 = vunpack.c.l.b16 %v82
  %v426 = vunpack.c.h.b16 %v82
  %v427 = vunpack.c.l.b16 %v83
  %v428 = vunpack.c.l.b16 %v84
  %v429 = vunpack.c.h.b16 %v84
  %v430 = vunpack.c.l.b16 %v85
  %v431 = vunpack.c.l.b16 %v86
  %v432 = vunpack.c.h.b16 %v86
  %v433 = vunpack.c.l.b16 %v87
  %v434 = vunpack.c.l.b16 %v88
  %v435 = vunpack.c.h.b16 %v88
  %v436 = vunpack.c.l.b16 %v89
  %v437 = vunpack.c.l.b16 %v90
  %v438 = vunpack.c.h.b16 %v90
  %v439 = vunpack.c.l.b16 %v91
  %v440 = vunpack.c.l.b16 %v92
  %v441 = vunpack.c.h.b16 %v92
  %v442 = vunpack.c.l.b16 %v93
  %v443 = vunpack.c.l.b16 %v94
  %v444 = vunpack.c.h.b16 %v94
  %v445 = vunpack.c.l.b16 %v95
  %v446 = vunpack.c.l.b16 %v96
  %v447 = vunpack.c.h.b16 %v96
  %v448 = vunpack.c.l.b16 %v97
  %v449 = vunpack.c.l.b16 %v98
  %v450 = vunpack.c.h.b16 %v98
  %v451 = vunpack.c.l.b16 %v99
  %v452 = vunpack.c.l.b16 %v100
  %v453 = vunpack.c.h.b16 %v100
  %v454 = vunpack.c.l.b16 %v101
  %v455 = vunpack.c.l.b16 %v102
  %v456 = vunpack.c.h.b16 %v102
  %v457 = vunpack.c.l.b16 %v103
  %v458 = vunpack.c.l.b16 %v104
  %v459 = vunpack.c.h.b16 %v104
  %v460 = vunpack.c.l.b16 %v105
  %v461 = vunpack.c.l.b16 %v106
  %v462 = vunpack.c.h.b16 %v106
  %v463 = vunpack.c.l.b16 %v107
  %v464 = vunpack.c.l.b16 %v108
  %v465 = vunpack.c.h.b16 %v108
  %v466 = vunpack.c.l.b16 %v109
  %v467 = vunpack.c.l.b16 %v110
  %v468 = vunpack.c.h.b16 %v110
  %v469 = vunpack.c.l.b16 %v111
  %v470 = vunpack.c.l.b16 %v112
  %v471 = vunpack.c.h.b16 %v112
  %v472 = vunpack.c.l.b16 %v113
  %v473 = vunpack.c.l.b16 %v114
  %v474 = vunpack.c.h.b16 %v114
  %v475 = vunpack.c.l.b16 %v115
  %v476 = vunpack.c.l.b16 %v116
  %v477 = vunpack.c.h.b16 %v116
  %v478 = vunpack.c.l.b16 %v117
  %v479 = vunpack.c.l.b16 %v118
  %v480 = vunpack.c.h.b16 %v118
  %v481 = vunpack.c.l.b16 %v119
  %v482 = vunpack.c.l.b16 %v120
  %v483 = vunpack.c.h.b16 %v120
  %v484 = vunpack.c.l.b16 %v121
  %v485 = vunpack.c.l.b16 %v122
  %v486 = vunpack.c.h.b16 %v122
  %v487 = vunpack.c.l.b16 %v123
  %v488 = vunpack.c.l.b16 %v124
  %v489 = vunpack.c.h.b16 %v124
  %v490 = vunpack.c.l.b16 %v125
  %v491 = vunpack.c.l.b16 %v126
  %v492 = vunpack.c.h.b16 %v126
  %v493 = vunpack.c.l.b16 %v127
  %v494 = vunpack.c.l.b16 %v128
  %v495 = vunpack.c.h.b16 %v128
  %v496 = vunpack.c.l.b16 %v129
  %v497 = vunpack.c.l.b16 %v130
  %v498 = vunpack.c.h.b16 %v130
  %v499 = vunpack.c.l.b16 %v131
  %v500 = vunpack.c.l.b16 %v132
  %v501 = vunpack.c.h.b16 %v132
  %v502 = vunpack.c.l.b16 %v133
  %v503 = vunpack.c.l.b16 %v134
  %v504 = vunpack.c.h.b16 %v134
  %v505 = vunpack.c.l.b16 %v135
  %v506 = vunpack.c.l.b16 %v136
  %v507 = vunpack.c.h.b16 %v136
  %v508 = vunpack.c.l.b16 %v137
  %v509 = vunpack.c.l.b16 %v138
  %v510 = vunpack.c.h.b16 %v138
  %v511 = vunpack.c.l.b16 %v139
  %v512 = vunpack.c.l.b16 %v140
  %v513 = vunpack.c.h.b16 %v140
  %v514 = vunpack.c.l.b16 %v141
  %v515 = vunpack.c.l.b16 %v142
  %v516 = vunpack.c.h.b16 %v142
  %v517 = vunpack.c.l.b16 %v143
  %v518 = vunpack.c.l.b16 %v144
  %v519 = vunpack.c.h.b16 %v144
  %v520 = vunpack.c.l.b16 %v145
  %v521 = vpack.c.b16 %v332, %v329
  %v522 = vpack.c.b16 %v333, %v330
  %v523 = vpack.c.b16 %v334, %v331
  %v524 = vpack.c.b16 %v338, %v335
  %v525 = vpack.c.b16 %v339, %v336
  %v526 = vpack.c.b16 %v340, %v337
  %v527 = vpack.c.b16 %v344, %v341
  %v528 = vpack.c.b16 %v345, %v342
  %v529 = vpack.c.b16 %v346, %v343
  %v530 = vpack.c.b16 %v350, %v347
  %v531 = vpack.c.b16 %v351, %v348
  %v532 = vpack.c.b16 %v352, %v349
  %v533 = vpack.c.b16 %v356, %v353
  %v534 = vpack.c.b16 %v357, %v354
  %v535 = vpack.c.b16 %v358, %v355
  %v536 = vpack.c.b16 %v362, %v359
  %v537 = vpack.c.b16 %v363, %v360
  %v538 = vpack.c.b16 %v364, %v361
  %v539 = vpack.c.b16 %v368, %v365
  %v540 = vpack.c.b16 %v369, %v366
  %v541 = vpack.c.b16 %v370, %v367
  %v542 = vpack.c.b16 %v374, %v371
  %v543 = vpack.c.b16 %v375, %v372
  %v544 = vpack.c.b16 %v376, %v373
  %v545 = vpack.c.b16 %v380, %v377
  %v546 = vpack.c.b16 %v381, %v378
  %v547 = vpack.c.b16 %v382, %v379
  %v548 = vpack.c.b16 %v386, %v383
  %v549 = vpack.c.b16 %v387, %v384
  %v550 = vpack.c.b16 %v388, %v385
  %v551 = vpack.c.b16 %v392, %v389
  %v552 = vpack.c.b16 %v393, %v390
  %v553 = vpack.c.b16 %v394, %v391
  %v554 = vpack.c.b16 %v398, %v395
  %v555 = vpack.c.b16 %v399, %v396
  %v556 = vpack.c.b16 %v400, %v397
  %v557 = vpack.c.b16 %v404, %v401
  %v558 = vpack.c.b16 %v405, %v402
  %v559 = vpack.c.b16 %v406, %v403
  %v560 = vpack.c.b16 %v410, %v407
  %v561 = vpack.c.b16 %v411, %v408
  %v562 = vpack.c.b16 %v412, %v409
  %v563 = vpack.c.b16 %v416, %v413
  %v564 = vpack.c.b16 %v417, %v414
  %v565 = vpack.c.b16 %v418, %v415
  %v566 = vpack.c.b16 %v422, %v419
  %v567 = vpack.c.b16 %v423, %v420
  %v568 = vpack.c.b16 %v424, %v421
  %v569 = vpack.c.b16 %v428, %v425
  %v570 = vpack.c.b16 %v429, %v426
  %v571 = vpack.c.b16 %v430, %v427
  %v572 = vpack.c.b16 %v434, %v431
  %v573 = vpack.c.b16 %v435, %v432
  %v574 = vpack.c.b16 %v436, %v433
  %v575 = vpack.c.b16 %v440, %v437
  %v576 = vpack.c.b16 %v441, %v438
  %v577 = vpack.c.b16 %v442, %v439
  %v578 = vpack.c.b16 %v446, %v443
  %v579 = vpack.c.b16 %v447, %v444
  %v580 = vpack.c.b16 %v448, %v445
  %v581 = vpack.c.b16 %v452, %v449
  %v582 = vpack.c.b16 %v453, %v450
  %v583 = vpack.c.b16 %v454, %v451
  %v584 = vpack.c.b16 %v458, %v455
  %v585 = vpack.c.b16 %v459, %v456
  %v586 = vpack.c.b16 %v460, %v457
  %v587 = vpack.c.b16 %v464, %v461
  %v588 = vpack.c.b16 %v465, %v462
  %v589 = vpack.c.b16 %v466, %v463
  %v590 = vpack.c.b16 %v470, %v467
  %v591 = vpack.c.b16 %v471, %v468
  %v592 = vpack.c.b16 %v472, %v469
  %v593 = vpack.c.b16 %v476, %v473
  %v594 = vpack.c.b16 %v477, %v474
  %v595 = vpack.c.b16 %v478, %v475
  %v596 = vpack.c.b16 %v482, %v479
  %v597 = vpack.c.b16 %v483, %v480
  %v598 = vpack.c.b16 %v484, %v481
  %v599 = vpack.c.b16 %v488, %v485
  %v600 = vpack.c.b16 %v489, %v486
  %v601 = vpack.c.b16 %v490, %v487
  %v602 = vpack.c.b16 %v494, %v491
  %v603 = vpack.c.b16 %v495, %v492
  %v604 = vpack.c.b16 %v496, %v493
  %v605 = vpack.c.b16 %v500, %v497
  %v606 = vpack.c.b16 %v501, %v498
  %v607 = vpack.c.b16 %v502, %v499
  %v608 = vpack.c.b16 %v506, %v503
  %v609 = vpack.c.b16 %v507, %v504
  %v610 = vpack.c.b16 %v508, %v505
  %v611 = vpack.c.b16 %v512, %v509
  %v612 = vpack.c.b16 %v513, %v510
  %v613 = vpack.c.b16 %v514, %v511
  %v614 = vpack.c.b16 %v518, %v515
  %v615 = vpack.c.b16 %v519, %v516
  %v616 = vpack.c.b16 %v520, %v517
  %v761 = vunpack.c.l.b16 %v146
  %v762 = vunpack.c.l.b16 %v147
  %v763 = vunpack.c.l.b16 %v148
  %v764 = vunpack.c.l.b16 %v149
  %v765 = vunpack.c.l.b16 %v150
  %v766 = vunpack.c.l.b16 %v151
  %v767 = vunpack.c.l.b16 %v152
  %v768 = vunpack.c.l.b16 %v153
  %v769 = vunpack.c.l.b16 %v154
  %v770 = vunpack.c.l.b16 %v155
  %v771 = vunpack.c.l.b16 %v156
  %v772 = vunpack.c.l.b16 %v157
  %v773 = vunpack.c.l.b16 %v158
  %v774 = vunpack.c.l.b16 %v159
  %v775 = vunpack.c.l.b16 %v160
  %v776 = vunpack.c.l.b16 %v161
  %v777 = vunpack.c.l.b16 %v162
  %v778 = vunpack.c.l.b16 %v163
  %v779 = vunpack.c.l.b16 %v164
  %v780 = vunpack.c.l.b16 %v165
  %v781 = vunpack.c.l.b16 %v166
  %v782 = vunpack.c.l.b16 %v167
  %v783 = vunpack.c.l.b16 %v168
  %v784 = vunpack.c.l.b16 %v169
  %v785 = vunpack.c.l.b16 %v170
  %v786 = vunpack.c.l.b16 %v171
  %v787 = vunpack.c.l.b16 %v172
  %v788 = vunpack.c.l.b16 %v173
  %v789 = vunpack.c.l.b16 %v174
  %v790 = vunpack.c.l.b16 %v175
  %v791 = vunpack.c.l.b16 %v176
  %v792 = vunpack.c.l.b16 %v177
  %v793 = vunpack.c.l.b16 %v178
  %v794 = vunpack.c.l.b16 %v179
  %v795 = vunpack.c.l.b16 %v180
  %v796 = vunpack.c.l.b16 %v181
  %v797 = vunpack.c.l.b16 %v182
  %v798 = vunpack.c.l.b16 %v183
  %v799 = vunpack.c.l.b16 %v184
  %v800 = vunpack.c.l.b16 %v185
  %v801 = vunpack.c.l.b16 %v186
  %v802 = vunpack.c.l.b16 %v187
  %v803 = vunpack.c.l.b16 %v188
  %v804 = vunpack.c.l.b16 %v189
  %v805 = vunpack.c.l.b16 %v190
  %v806 = vunpack.c.l.b16 %v191
  %v807 = vunpack.c.l.b16 %v192
  %v808 = vunpack.c.l.b16 %v193
  %v809 = vpack.c.b16 %v762, %v761
  %v810 = vpack.c.b16 %v764, %v763
  %v811 = vpack.c.b16 %v766, %v765
  %v812 = vpack.c.b16 %v768, %v767
  %v813 = vpack.c.b16 %v770, %v769
  %v814 = vpack.c.b16 %v772, %v771
  %v815 = vpack.c.b16 %v774, %v773
  %v816 = vpack.c.b16 %v776, %v775
  %v817 = vpack.c.b16 %v778, %v777
  %v818 = vpack.c.b16 %v780, %v779
  %v819 = vpack.c.b16 %v782, %v781
  %v820 = vpack.c.b16 %v784, %v783
  %v821 = vpack.c.b16 %v786, %v785
  %v822 = vpack.c.b16 %v788, %v787
  %v823 = vpack.c.b16 %v790, %v789
  %v824 = vpack.c.b16 %v792, %v791
  %v825 = vpack.c.b16 %v794, %v793
  %v826 = vpack.c.b16 %v796, %v795
  %v827 = vpack.c.b16 %v798, %v797
  %v828 = vpack.c.b16 %v800, %v799
  %v829 = vpack.c.b16 %v802, %v801
  %v830 = vpack.c.b16 %v804, %v803
  %v831 = vpack.c.b16 %v806, %v805
  %v832 = vpack.c.b16 %v808, %v807
  %857 = vmatprep.subr.bf16.mxu0 0
  %858 = vmatpush1.bf16.msra.mxu0 %v809
  %859 = vmatprep.subr.bf16.mxu0 0
  %860 = vmatpush1.bf16.msra.mxu0 %v810
  %861 = vmatprep.subr.bf16.mxu0 0
  %862 = vmatpush1.bf16.msra.mxu0 %v811
  %863 = vmatprep.subr.bf16.mxu0 0
  %864 = vmatpush1.bf16.msra.mxu0 %v812
  %865 = vmatprep.subr.bf16.mxu0 0
  %866 = vmatpush1.bf16.msra.mxu0 %v813
  %867 = vmatprep.subr.bf16.mxu0 0
  %868 = vmatpush1.bf16.msra.mxu0 %v814
  %869 = vmatprep.subr.bf16.mxu0 0
  %870 = vmatpush1.bf16.msra.mxu0 %v815
  %871 = vmatprep.subr.bf16.mxu0 0
  %872 = vmatpush1.bf16.msra.mxu0 %v816
  %873 = vmatprep.subr.bf16.mxu0 0
  %874 = vmatpush1.bf16.msra.mxu0 %v817
  %875 = vmatprep.subr.bf16.mxu0 0
  %876 = vmatpush1.bf16.msra.mxu0 %v818
  %877 = vmatprep.subr.bf16.mxu0 0
  %878 = vmatpush1.bf16.msra.mxu0 %v819
  %879 = vmatprep.subr.bf16.mxu0 0
  %880 = vmatpush1.bf16.msra.mxu0 %v820
  %881 = vmatprep.subr.bf16.mxu0 0
  %882 = vmatpush1.bf16.msra.mxu0 %v821
  %883 = vmatprep.subr.bf16.mxu0 0
  %884 = vmatpush1.bf16.msra.mxu0 %v822
  %885 = vmatprep.subr.bf16.mxu0 0
  %886 = vmatpush1.bf16.msra.mxu0 %v823
  %887 = vmatprep.subr.bf16.mxu0 0
  %888 = vmatpush1.bf16.msra.mxu0 %v824
  %889 = vmatprep.mubr.bf16.mxu0 %v522
  %890 = vmatmul.mubr.bf16.gmra.mrb[0].mxu0 %v521
  %v891 = vpop.f32.mrb[0].mxu0
  %v892 = vadd.f32 %v199, %v891
  %v893 = vpop.f32.mrb[0].mxu0
  %v894 = vpop.f32.mrb[0].mxu0
  %v895 = vadd.f32 %v199, %v894
  %v896 = vpop.f32.mrb[0].mxu0
  %897 = vmatprep.mubr.bf16.mxu0 %v525
  %898 = vmatmul.mubr.bf16.gmra.mrb[0].mxu0 %v524
  %v899 = vpop.f32.mrb[0].mxu0
  %v900 = vadd.f32 %v199, %v899
  %v901 = vpop.f32.mrb[0].mxu0
  %v902 = vpop.f32.mrb[0].mxu0
  %v903 = vadd.f32 %v199, %v902
  %v904 = vpop.f32.mrb[0].mxu0
  %905 = vmatprep.mubr.bf16.mxu0 %v528
  %906 = vmatmul.mubr.bf16.gmra.mrb[0].mxu0 %v527
  %v907 = vpop.f32.mrb[0].mxu0
  %v908 = vadd.f32 %v199, %v907
  %v909 = vpop.f32.mrb[0].mxu0
  %v910 = vpop.f32.mrb[0].mxu0
  %v911 = vadd.f32 %v199, %v910
  %v912 = vpop.f32.mrb[0].mxu0
  %913 = vmatprep.mubr.bf16.mxu0 %v531
  %914 = vmatmul.mubr.bf16.gmra.mrb[0].mxu0 %v530
  %v915 = vpop.f32.mrb[0].mxu0
  %v916 = vadd.f32 %v199, %v915
  %v917 = vpop.f32.mrb[0].mxu0
  %v918 = vpop.f32.mrb[0].mxu0
  %v919 = vadd.f32 %v199, %v918
  %v920 = vpop.f32.mrb[0].mxu0
  %921 = vmatprep.mubr.bf16.mxu0 %v534
  %922 = vmatmul.mubr.bf16.gmra.mrb[0].mxu0 %v533
  %v923 = vpop.f32.mrb[0].mxu0
  %v924 = vadd.f32 %v199, %v923
  %v925 = vpop.f32.mrb[0].mxu0
  %v926 = vpop.f32.mrb[0].mxu0
  %v927 = vadd.f32 %v199, %v926
  %v928 = vpop.f32.mrb[0].mxu0
  %929 = vmatprep.mubr.bf16.mxu0 %v537
  %930 = vmatmul.mubr.bf16.gmra.mrb[0].mxu0 %v536
  %v931 = vpop.f32.mrb[0].mxu0
  %v932 = vadd.f32 %v199, %v931
  %v933 = vpop.f32.mrb[0].mxu0
  %v934 = vpop.f32.mrb[0].mxu0
  %v935 = vadd.f32 %v199, %v934
  %v936 = vpop.f32.mrb[0].mxu0
  %937 = vmatprep.mubr.bf16.mxu0 %v540
  %938 = vmatmul.mubr.bf16.gmra.mrb[0].mxu0 %v539
  %v939 = vpop.f32.mrb[0].mxu0
  %v940 = vadd.f32 %v199, %v939
  %v941 = vpop.f32.mrb[0].mxu0
  %v942 = vpop.f32.mrb[0].mxu0
  %v943 = vadd.f32 %v199, %v942
  %v944 = vpop.f32.mrb[0].mxu0
  %945 = vmatprep.mubr.bf16.mxu0 %v543
  %946 = vmatmul.mubr.bf16.gmra.mrb[0].mxu0 %v542
  %v947 = vpop.f32.mrb[0].mxu0
  %v948 = vadd.f32 %v199, %v947
  %v949 = vpop.f32.mrb[0].mxu0
  %v950 = vpop.f32.mrb[0].mxu0
  %v951 = vadd.f32 %v199, %v950
  %v952 = vpop.f32.mrb[0].mxu0
  %953 = vmatprep.mubr.bf16.mxu0 %v546
  %954 = vmatmul.mubr.bf16.gmra.mrb[0].mxu0 %v545
  %v955 = vpop.f32.mrb[0].mxu0
  %v956 = vadd.f32 %v199, %v955
  %v957 = vpop.f32.mrb[0].mxu0
  %v958 = vpop.f32.mrb[0].mxu0
  %v959 = vadd.f32 %v199, %v958
  %v960 = vpop.f32.mrb[0].mxu0
  %961 = vmatprep.mubr.bf16.mxu0 %v549
  %962 = vmatmul.mubr.bf16.gmra.mrb[0].mxu0 %v548
  %v963 = vpop.f32.mrb[0].mxu0
  %v964 = vadd.f32 %v199, %v963
  %v965 = vpop.f32.mrb[0].mxu0
  %v966 = vpop.f32.mrb[0].mxu0
  %v967 = vadd.f32 %v199, %v966
  %v968 = vpop.f32.mrb[0].mxu0
  %969 = vmatprep.mubr.bf16.mxu0 %v552
  %970 = vmatmul.mubr.bf16.gmra.mrb[0].mxu0 %v551
  %v971 = vpop.f32.mrb[0].mxu0
  %v972 = vadd.f32 %v199, %v971
  %v973 = vpop.f32.mrb[0].mxu0
  %v974 = vpop.f32.mrb[0].mxu0
  %v975 = vadd.f32 %v199, %v974
  %v976 = vpop.f32.mrb[0].mxu0
  %977 = vmatprep.mubr.bf16.mxu0 %v555
  %978 = vmatmul.mubr.bf16.gmra.mrb[0].mxu0 %v554
  %v979 = vpop.f32.mrb[0].mxu0
  %v980 = vadd.f32 %v199, %v979
  %v981 = vpop.f32.mrb[0].mxu0
  %v982 = vpop.f32.mrb[0].mxu0
  %v983 = vadd.f32 %v199, %v982
  %v984 = vpop.f32.mrb[0].mxu0
  %985 = vmatprep.mubr.bf16.mxu0 %v558
  %986 = vmatmul.mubr.bf16.gmra.mrb[0].mxu0 %v557
  %v987 = vpop.f32.mrb[0].mxu0
  %v988 = vadd.f32 %v199, %v987
  %v989 = vpop.f32.mrb[0].mxu0
  %v990 = vpop.f32.mrb[0].mxu0
  %v991 = vadd.f32 %v199, %v990
  %v992 = vpop.f32.mrb[0].mxu0
  %993 = vmatprep.mubr.bf16.mxu0 %v561
  %994 = vmatmul.mubr.bf16.gmra.mrb[0].mxu0 %v560
  %v995 = vpop.f32.mrb[0].mxu0
  %v996 = vadd.f32 %v199, %v995
  %v997 = vpop.f32.mrb[0].mxu0
  %v998 = vpop.f32.mrb[0].mxu0
  %v999 = vadd.f32 %v199, %v998
  %v1000 = vpop.f32.mrb[0].mxu0
  %1001 = vmatprep.mubr.bf16.mxu0 %v564
  %1002 = vmatmul.mubr.bf16.gmra.mrb[0].mxu0 %v563
  %v1003 = vpop.f32.mrb[0].mxu0
  %v1004 = vadd.f32 %v199, %v1003
  %v1005 = vpop.f32.mrb[0].mxu0
  %v1006 = vpop.f32.mrb[0].mxu0
  %v1007 = vadd.f32 %v199, %v1006
  %v1008 = vpop.f32.mrb[0].mxu0
  %1009 = vmatprep.mubr.bf16.mxu0 %v567
  %1010 = vmatmul.mubr.bf16.gmra.mrb[0].mxu0 %v566
  %v1011 = vpop.f32.mrb[0].mxu0
  %v1012 = vadd.f32 %v199, %v1011
  %v1013 = vpop.f32.mrb[0].mxu0
  %v1014 = vpop.f32.mrb[0].mxu0
  %v1015 = vadd.f32 %v199, %v1014
  %v1016 = vpop.f32.mrb[0].mxu0
  %1017 = vmatprep.mubr.bf16.mxu0 %v570
  %1018 = vmatmul.mubr.bf16.gmra.mrb[0].mxu0 %v569
  %v1019 = vpop.f32.mrb[0].mxu0
  %v1020 = vadd.f32 %v199, %v1019
  %v1021 = vpop.f32.mrb[0].mxu0
  %v1022 = vpop.f32.mrb[0].mxu0
  %v1023 = vadd.f32 %v199, %v1022
  %v1024 = vpop.f32.mrb[0].mxu0
  %1025 = vmatprep.mubr.bf16.mxu0 %v573
  %1026 = vmatmul.mubr.bf16.gmra.mrb[0].mxu0 %v572
  %v1027 = vpop.f32.mrb[0].mxu0
  %v1028 = vadd.f32 %v199, %v1027
  %v1029 = vpop.f32.mrb[0].mxu0
  %v1030 = vpop.f32.mrb[0].mxu0
  %v1031 = vadd.f32 %v199, %v1030
  %v1032 = vpop.f32.mrb[0].mxu0
  %1033 = vmatprep.mubr.bf16.mxu0 %v576
  %1034 = vmatmul.mubr.bf16.gmra.mrb[0].mxu0 %v575
  %v1035 = vpop.f32.mrb[0].mxu0
  %v1036 = vadd.f32 %v199, %v1035
  %v1037 = vpop.f32.mrb[0].mxu0
  %v1038 = vpop.f32.mrb[0].mxu0
  %v1039 = vadd.f32 %v199, %v1038
  %v1040 = vpop.f32.mrb[0].mxu0
  %1041 = vmatprep.mubr.bf16.mxu0 %v579
  %1042 = vmatmul.mubr.bf16.gmra.mrb[0].mxu0 %v578
  %v1043 = vpop.f32.mrb[0].mxu0
  %v1044 = vadd.f32 %v199, %v1043
  %v1045 = vpop.f32.mrb[0].mxu0
  %v1046 = vpop.f32.mrb[0].mxu0
  %v1047 = vadd.f32 %v199, %v1046
  %v1048 = vpop.f32.mrb[0].mxu0
  %1049 = vmatprep.mubr.bf16.mxu0 %v582
  %1050 = vmatmul.mubr.bf16.gmra.mrb[0].mxu0 %v581
  %v1051 = vpop.f32.mrb[0].mxu0
  %v1052 = vadd.f32 %v199, %v1051
  %v1053 = vpop.f32.mrb[0].mxu0
  %v1054 = vpop.f32.mrb[0].mxu0
  %v1055 = vadd.f32 %v199, %v1054
  %v1056 = vpop.f32.mrb[0].mxu0
  %1057 = vmatprep.mubr.bf16.mxu0 %v585
  %1058 = vmatmul.mubr.bf16.gmra.mrb[0].mxu0 %v584
  %v1059 = vpop.f32.mrb[0].mxu0
  %v1060 = vadd.f32 %v199, %v1059
  %v1061 = vpop.f32.mrb[0].mxu0
  %v1062 = vpop.f32.mrb[0].mxu0
  %v1063 = vadd.f32 %v199, %v1062
  %v1064 = vpop.f32.mrb[0].mxu0
  %1065 = vmatprep.mubr.bf16.mxu0 %v588
  %1066 = vmatmul.mubr.bf16.gmra.mrb[0].mxu0 %v587
  %v1067 = vpop.f32.mrb[0].mxu0
  %v1068 = vadd.f32 %v199, %v1067
  %v1069 = vpop.f32.mrb[0].mxu0
  %v1070 = vpop.f32.mrb[0].mxu0
  %v1071 = vadd.f32 %v199, %v1070
  %v1072 = vpop.f32.mrb[0].mxu0
  %1073 = vmatprep.mubr.bf16.mxu0 %v591
  %1074 = vmatmul.mubr.bf16.gmra.mrb[0].mxu0 %v590
  %v1075 = vpop.f32.mrb[0].mxu0
  %v1076 = vadd.f32 %v199, %v1075
  %v1077 = vpop.f32.mrb[0].mxu0
  %v1078 = vpop.f32.mrb[0].mxu0
  %v1079 = vadd.f32 %v199, %v1078
  %v1080 = vpop.f32.mrb[0].mxu0
  %1081 = vmatprep.mubr.bf16.mxu0 %v594
  %1082 = vmatmul.mubr.bf16.gmra.mrb[0].mxu0 %v593
  %v1083 = vpop.f32.mrb[0].mxu0
  %v1084 = vadd.f32 %v199, %v1083
  %v1085 = vpop.f32.mrb[0].mxu0
  %v1086 = vpop.f32.mrb[0].mxu0
  %v1087 = vadd.f32 %v199, %v1086
  %v1088 = vpop.f32.mrb[0].mxu0
  %1089 = vmatprep.mubr.bf16.mxu0 %v597
  %1090 = vmatmul.mubr.bf16.gmra.mrb[0].mxu0 %v596
  %v1091 = vpop.f32.mrb[0].mxu0
  %v1092 = vadd.f32 %v199, %v1091
  %v1093 = vpop.f32.mrb[0].mxu0
  %v1094 = vpop.f32.mrb[0].mxu0
  %v1095 = vadd.f32 %v199, %v1094
  %v1096 = vpop.f32.mrb[0].mxu0
  %1097 = vmatprep.mubr.bf16.mxu0 %v600
  %1098 = vmatmul.mubr.bf16.gmra.mrb[0].mxu0 %v599
  %v1099 = vpop.f32.mrb[0].mxu0
  %v1100 = vadd.f32 %v199, %v1099
  %v1101 = vpop.f32.mrb[0].mxu0
  %v1102 = vpop.f32.mrb[0].mxu0
  %v1103 = vadd.f32 %v199, %v1102
  %v1104 = vpop.f32.mrb[0].mxu0
  %1105 = vmatprep.mubr.bf16.mxu0 %v603
  %1106 = vmatmul.mubr.bf16.gmra.mrb[0].mxu0 %v602
  %v1107 = vpop.f32.mrb[0].mxu0
  %v1108 = vadd.f32 %v199, %v1107
  %v1109 = vpop.f32.mrb[0].mxu0
  %v1110 = vpop.f32.mrb[0].mxu0
  %v1111 = vadd.f32 %v199, %v1110
  %v1112 = vpop.f32.mrb[0].mxu0
  %1113 = vmatprep.mubr.bf16.mxu0 %v606
  %1114 = vmatmul.mubr.bf16.gmra.mrb[0].mxu0 %v605
  %v1115 = vpop.f32.mrb[0].mxu0
  %v1116 = vadd.f32 %v199, %v1115
  %v1117 = vpop.f32.mrb[0].mxu0
  %v1118 = vpop.f32.mrb[0].mxu0
  %v1119 = vadd.f32 %v199, %v1118
  %v1120 = vpop.f32.mrb[0].mxu0
  %1121 = vmatprep.mubr.bf16.mxu0 %v609
  %1122 = vmatmul.mubr.bf16.gmra.mrb[0].mxu0 %v608
  %v1123 = vpop.f32.mrb[0].mxu0
  %v1124 = vadd.f32 %v199, %v1123
  %v1125 = vpop.f32.mrb[0].mxu0
  %v1126 = vpop.f32.mrb[0].mxu0
  %v1127 = vadd.f32 %v199, %v1126
  %v1128 = vpop.f32.mrb[0].mxu0
  %1129 = vmatprep.mubr.bf16.mxu0 %v612
  %1130 = vmatmul.mubr.bf16.gmra.mrb[0].mxu0 %v611
  %v1131 = vpop.f32.mrb[0].mxu0
  %v1132 = vadd.f32 %v199, %v1131
  %v1133 = vpop.f32.mrb[0].mxu0
  %v1134 = vpop.f32.mrb[0].mxu0
  %v1135 = vadd.f32 %v199, %v1134
  %v1136 = vpop.f32.mrb[0].mxu0
  %1137 = vmatprep.mubr.bf16.mxu0 %v615
  %1138 = vmatmul.mubr.bf16.gmra.mrb[0].mxu0 %v614
  %v1139 = vpop.f32.mrb[0].mxu0
  %v1140 = vadd.f32 %v199, %v1139
  %v1141 = vpop.f32.mrb[0].mxu0
  %v1142 = vpop.f32.mrb[0].mxu0
  %v1143 = vadd.f32 %v199, %v1142
  %v1144 = vpop.f32.mrb[0].mxu0
  %1145 = vdwg.mxu0
  %1146 = vmatprep.subr.bf16.mxu0 0
  %1147 = vmatpush1.bf16.msra.mxu0 %v825
  %1148 = vmatprep.subr.bf16.mxu0 0
  %1149 = vmatpush1.bf16.msra.mxu0 %v826
  %1150 = vmatprep.subr.bf16.mxu0 0
  %1151 = vmatpush1.bf16.msra.mxu0 %v827
  %1152 = vmatprep.subr.bf16.mxu0 0
  %1153 = vmatpush1.bf16.msra.mxu0 %v828
  %1154 = vmatprep.subr.bf16.mxu0 0
  %1155 = vmatpush1.bf16.msra.mxu0 %v829
  %1156 = vmatprep.subr.bf16.mxu0 0
  %1157 = vmatpush1.bf16.msra.mxu0 %v830
  %1158 = vmatprep.subr.bf16.mxu0 0
  %1159 = vmatpush1.bf16.msra.mxu0 %v831
  %1160 = vmatprep.subr.bf16.mxu0 0
  %1161 = vmatpush1.bf16.msra.mxu0 %v832
  %1162 = vmatprep.subr.bf16.mxu0 0
  %1163 = vmatpush1.bf16.msra.mxu0 0
  %1164 = vmatprep.subr.bf16.mxu0 0
  %1165 = vmatpush1.bf16.msra.mxu0 0
  %1166 = vmatprep.subr.bf16.mxu0 0
  %1167 = vmatpush1.bf16.msra.mxu0 0
  %1168 = vmatprep.subr.bf16.mxu0 0
  %1169 = vmatpush1.bf16.msra.mxu0 0
  %1170 = vmatprep.subr.bf16.mxu0 0
  %1171 = vmatpush1.bf16.msra.mxu0 0
  %1172 = vmatprep.subr.bf16.mxu0 0
  %1173 = vmatpush1.bf16.msra.mxu0 0
  %1174 = vmatprep.subr.bf16.mxu0 0
  %1175 = vmatpush1.bf16.msra.mxu0 0
  %1176 = vmatprep.subr.bf16.mxu0 0
  %1177 = vmatpush1.bf16.msra.mxu0 0
  %1178 = vmatprep.mubr.bf16.mxu0 0
  %1179 = vmatmul.mubr.bf16.gmra.mrb[0].mxu0 %v523
  %v1180 = vpop.f32.mrb[0].mxu0
  %v1181 = vadd.f32 %v892, %v1180
  %v1182 = vpop.f32.mrb[0].mxu0
  %v1183 = vpop.f32.mrb[0].mxu0
  %v1184 = vadd.f32 %v895, %v1183
  %v1185 = vpop.f32.mrb[0].mxu0
  %1186 = vmatprep.mubr.bf16.mxu0 0
  %1187 = vmatmul.mubr.bf16.gmra.mrb[0].mxu0 %v526
  %v1188 = vpop.f32.mrb[0].mxu0
  %v1189 = vadd.f32 %v900, %v1188
  %v1190 = vpop.f32.mrb[0].mxu0
  %v1191 = vpop.f32.mrb[0].mxu0
  %v1192 = vadd.f32 %v903, %v1191
  %v1193 = vpop.f32.mrb[0].mxu0
  %1194 = vmatprep.mubr.bf16.mxu0 0
  %1195 = vmatmul.mubr.bf16.gmra.mrb[0].mxu0 %v529
  %v1196 = vpop.f32.mrb[0].mxu0
  %v1197 = vadd.f32 %v908, %v1196
  %v1198 = vpop.f32.mrb[0].mxu0
  %v1199 = vpop.f32.mrb[0].mxu0
  %v1200 = vadd.f32 %v911, %v1199
  %v1201 = vpop.f32.mrb[0].mxu0
  %1202 = vmatprep.mubr.bf16.mxu0 0
  %1203 = vmatmul.mubr.bf16.gmra.mrb[0].mxu0 %v532
  %v1204 = vpop.f32.mrb[0].mxu0
  %v1205 = vadd.f32 %v916, %v1204
  %v1206 = vpop.f32.mrb[0].mxu0
  %v1207 = vpop.f32.mrb[0].mxu0
  %v1208 = vadd.f32 %v919, %v1207
  %v1209 = vpop.f32.mrb[0].mxu0
  %1210 = vmatprep.mubr.bf16.mxu0 0
  %1211 = vmatmul.mubr.bf16.gmra.mrb[0].mxu0 %v535
  %v1212 = vpop.f32.mrb[0].mxu0
  %v1213 = vadd.f32 %v924, %v1212
  %v1214 = vpop.f32.mrb[0].mxu0
  %v1215 = vpop.f32.mrb[0].mxu0
  %v1216 = vadd.f32 %v927, %v1215
  %v1217 = vpop.f32.mrb[0].mxu0
  %1218 = vmatprep.mubr.bf16.mxu0 0
  %1219 = vmatmul.mubr.bf16.gmra.mrb[0].mxu0 %v538
  %v1220 = vpop.f32.mrb[0].mxu0
  %v1221 = vadd.f32 %v932, %v1220
  %v1222 = vpop.f32.mrb[0].mxu0
  %v1223 = vpop.f32.mrb[0].mxu0
  %v1224 = vadd.f32 %v935, %v1223
  %v1225 = vpop.f32.mrb[0].mxu0
  %1226 = vmatprep.mubr.bf16.mxu0 0
  %1227 = vmatmul.mubr.bf16.gmra.mrb[0].mxu0 %v541
  %v1228 = vpop.f32.mrb[0].mxu0
  %v1229 = vadd.f32 %v940, %v1228
  %v1230 = vpop.f32.mrb[0].mxu0
  %v1231 = vpop.f32.mrb[0].mxu0
  %v1232 = vadd.f32 %v943, %v1231
  %v1233 = vpop.f32.mrb[0].mxu0
  %1234 = vmatprep.mubr.bf16.mxu0 0
  %1235 = vmatmul.mubr.bf16.gmra.mrb[0].mxu0 %v544
  %v1236 = vpop.f32.mrb[0].mxu0
  %v1237 = vadd.f32 %v948, %v1236
  %v1238 = vpop.f32.mrb[0].mxu0
  %v1239 = vpop.f32.mrb[0].mxu0
  %v1240 = vadd.f32 %v951, %v1239
  %v1241 = vpop.f32.mrb[0].mxu0
  %1242 = vmatprep.mubr.bf16.mxu0 0
  %1243 = vmatmul.mubr.bf16.gmra.mrb[0].mxu0 %v547
  %v1244 = vpop.f32.mrb[0].mxu0
  %v1245 = vadd.f32 %v956, %v1244
  %v1246 = vpop.f32.mrb[0].mxu0
  %v1247 = vpop.f32.mrb[0].mxu0
  %v1248 = vadd.f32 %v959, %v1247
  %v1249 = vpop.f32.mrb[0].mxu0
  %1250 = vmatprep.mubr.bf16.mxu0 0
  %1251 = vmatmul.mubr.bf16.gmra.mrb[0].mxu0 %v550
  %v1252 = vpop.f32.mrb[0].mxu0
  %v1253 = vadd.f32 %v964, %v1252
  %v1254 = vpop.f32.mrb[0].mxu0
  %v1255 = vpop.f32.mrb[0].mxu0
  %v1256 = vadd.f32 %v967, %v1255
  %v1257 = vpop.f32.mrb[0].mxu0
  %1258 = vmatprep.mubr.bf16.mxu0 0
  %1259 = vmatmul.mubr.bf16.gmra.mrb[0].mxu0 %v553
  %v1260 = vpop.f32.mrb[0].mxu0
  %v1261 = vadd.f32 %v972, %v1260
  %v1262 = vpop.f32.mrb[0].mxu0
  %v1263 = vpop.f32.mrb[0].mxu0
  %v1264 = vadd.f32 %v975, %v1263
  %v1265 = vpop.f32.mrb[0].mxu0
  %1266 = vmatprep.mubr.bf16.mxu0 0
  %1267 = vmatmul.mubr.bf16.gmra.mrb[0].mxu0 %v556
  %v1268 = vpop.f32.mrb[0].mxu0
  %v1269 = vadd.f32 %v980, %v1268
  %v1270 = vpop.f32.mrb[0].mxu0
  %v1271 = vpop.f32.mrb[0].mxu0
  %v1272 = vadd.f32 %v983, %v1271
  %v1273 = vpop.f32.mrb[0].mxu0
  %1274 = vmatprep.mubr.bf16.mxu0 0
  %1275 = vmatmul.mubr.bf16.gmra.mrb[0].mxu0 %v559
  %v1276 = vpop.f32.mrb[0].mxu0
  %v1277 = vadd.f32 %v988, %v1276
  %v1278 = vpop.f32.mrb[0].mxu0
  %v1279 = vpop.f32.mrb[0].mxu0
  %v1280 = vadd.f32 %v991, %v1279
  %v1281 = vpop.f32.mrb[0].mxu0
  %1282 = vmatprep.mubr.bf16.mxu0 0
  %1283 = vmatmul.mubr.bf16.gmra.mrb[0].mxu0 %v562
  %v1284 = vpop.f32.mrb[0].mxu0
  %v1285 = vadd.f32 %v996, %v1284
  %v1286 = vpop.f32.mrb[0].mxu0
  %v1287 = vpop.f32.mrb[0].mxu0
  %v1288 = vadd.f32 %v999, %v1287
  %v1289 = vpop.f32.mrb[0].mxu0
  %1290 = vmatprep.mubr.bf16.mxu0 0
  %1291 = vmatmul.mubr.bf16.gmra.mrb[0].mxu0 %v565
  %v1292 = vpop.f32.mrb[0].mxu0
  %v1293 = vadd.f32 %v1004, %v1292
  %v1294 = vpop.f32.mrb[0].mxu0
  %v1295 = vpop.f32.mrb[0].mxu0
  %v1296 = vadd.f32 %v1007, %v1295
  %v1297 = vpop.f32.mrb[0].mxu0
  %1298 = vmatprep.mubr.bf16.mxu0 0
  %1299 = vmatmul.mubr.bf16.gmra.mrb[0].mxu0 %v568
  %v1300 = vpop.f32.mrb[0].mxu0
  %v1301 = vadd.f32 %v1012, %v1300
  %v1302 = vpop.f32.mrb[0].mxu0
  %v1303 = vpop.f32.mrb[0].mxu0
  %v1304 = vadd.f32 %v1015, %v1303
  %v1305 = vpop.f32.mrb[0].mxu0
  %1306 = vmatprep.mubr.bf16.mxu0 0
  %1307 = vmatmul.mubr.bf16.gmra.mrb[0].mxu0 %v571
  %v1308 = vpop.f32.mrb[0].mxu0
  %v1309 = vadd.f32 %v1020, %v1308
  %v1310 = vpop.f32.mrb[0].mxu0
  %v1311 = vpop.f32.mrb[0].mxu0
  %v1312 = vadd.f32 %v1023, %v1311
  %v1313 = vpop.f32.mrb[0].mxu0
  %1314 = vmatprep.mubr.bf16.mxu0 0
  %1315 = vmatmul.mubr.bf16.gmra.mrb[0].mxu0 %v574
  %v1316 = vpop.f32.mrb[0].mxu0
  %v1317 = vadd.f32 %v1028, %v1316
  %v1318 = vpop.f32.mrb[0].mxu0
  %v1319 = vpop.f32.mrb[0].mxu0
  %v1320 = vadd.f32 %v1031, %v1319
  %v1321 = vpop.f32.mrb[0].mxu0
  %1322 = vmatprep.mubr.bf16.mxu0 0
  %1323 = vmatmul.mubr.bf16.gmra.mrb[0].mxu0 %v577
  %v1324 = vpop.f32.mrb[0].mxu0
  %v1325 = vadd.f32 %v1036, %v1324
  %v1326 = vpop.f32.mrb[0].mxu0
  %v1327 = vpop.f32.mrb[0].mxu0
  %v1328 = vadd.f32 %v1039, %v1327
  %v1329 = vpop.f32.mrb[0].mxu0
  %1330 = vmatprep.mubr.bf16.mxu0 0
  %1331 = vmatmul.mubr.bf16.gmra.mrb[0].mxu0 %v580
  %v1332 = vpop.f32.mrb[0].mxu0
  %v1333 = vadd.f32 %v1044, %v1332
  %v1334 = vpop.f32.mrb[0].mxu0
  %v1335 = vpop.f32.mrb[0].mxu0
  %v1336 = vadd.f32 %v1047, %v1335
  %v1337 = vpop.f32.mrb[0].mxu0
  %1338 = vmatprep.mubr.bf16.mxu0 0
  %1339 = vmatmul.mubr.bf16.gmra.mrb[0].mxu0 %v583
  %v1340 = vpop.f32.mrb[0].mxu0
  %v1341 = vadd.f32 %v1052, %v1340
  %v1342 = vpop.f32.mrb[0].mxu0
  %v1343 = vpop.f32.mrb[0].mxu0
  %v1344 = vadd.f32 %v1055, %v1343
  %v1345 = vpop.f32.mrb[0].mxu0
  %1346 = vmatprep.mubr.bf16.mxu0 0
  %1347 = vmatmul.mubr.bf16.gmra.mrb[0].mxu0 %v586
  %v1348 = vpop.f32.mrb[0].mxu0
  %v1349 = vadd.f32 %v1060, %v1348
  %v1350 = vpop.f32.mrb[0].mxu0
  %v1351 = vpop.f32.mrb[0].mxu0
  %v1352 = vadd.f32 %v1063, %v1351
  %v1353 = vpop.f32.mrb[0].mxu0
  %1354 = vmatprep.mubr.bf16.mxu0 0
  %1355 = vmatmul.mubr.bf16.gmra.mrb[0].mxu0 %v589
  %v1356 = vpop.f32.mrb[0].mxu0
  %v1357 = vadd.f32 %v1068, %v1356
  %v1358 = vpop.f32.mrb[0].mxu0
  %v1359 = vpop.f32.mrb[0].mxu0
  %v1360 = vadd.f32 %v1071, %v1359
  %v1361 = vpop.f32.mrb[0].mxu0
  %1362 = vmatprep.mubr.bf16.mxu0 0
  %1363 = vmatmul.mubr.bf16.gmra.mrb[0].mxu0 %v592
  %v1364 = vpop.f32.mrb[0].mxu0
  %v1365 = vadd.f32 %v1076, %v1364
  %v1366 = vpop.f32.mrb[0].mxu0
  %v1367 = vpop.f32.mrb[0].mxu0
  %v1368 = vadd.f32 %v1079, %v1367
  %v1369 = vpop.f32.mrb[0].mxu0
  %1370 = vmatprep.mubr.bf16.mxu0 0
  %1371 = vmatmul.mubr.bf16.gmra.mrb[0].mxu0 %v595
  %v1372 = vpop.f32.mrb[0].mxu0
  %v1373 = vadd.f32 %v1084, %v1372
  %v1374 = vpop.f32.mrb[0].mxu0
  %v1375 = vpop.f32.mrb[0].mxu0
  %v1376 = vadd.f32 %v1087, %v1375
  %v1377 = vpop.f32.mrb[0].mxu0
  %1378 = vmatprep.mubr.bf16.mxu0 0
  %1379 = vmatmul.mubr.bf16.gmra.mrb[0].mxu0 %v598
  %v1380 = vpop.f32.mrb[0].mxu0
  %v1381 = vadd.f32 %v1092, %v1380
  %v1382 = vpop.f32.mrb[0].mxu0
  %v1383 = vpop.f32.mrb[0].mxu0
  %v1384 = vadd.f32 %v1095, %v1383
  %v1385 = vpop.f32.mrb[0].mxu0
  %1386 = vmatprep.mubr.bf16.mxu0 0
  %1387 = vmatmul.mubr.bf16.gmra.mrb[0].mxu0 %v601
  %v1388 = vpop.f32.mrb[0].mxu0
  %v1389 = vadd.f32 %v1100, %v1388
  %v1390 = vpop.f32.mrb[0].mxu0
  %v1391 = vpop.f32.mrb[0].mxu0
  %v1392 = vadd.f32 %v1103, %v1391
  %v1393 = vpop.f32.mrb[0].mxu0
  %1394 = vmatprep.mubr.bf16.mxu0 0
  %1395 = vmatmul.mubr.bf16.gmra.mrb[0].mxu0 %v604
  %v1396 = vpop.f32.mrb[0].mxu0
  %v1397 = vadd.f32 %v1108, %v1396
  %v1398 = vpop.f32.mrb[0].mxu0
  %v1399 = vpop.f32.mrb[0].mxu0
  %v1400 = vadd.f32 %v1111, %v1399
  %v1401 = vpop.f32.mrb[0].mxu0
  %1402 = vmatprep.mubr.bf16.mxu0 0
  %1403 = vmatmul.mubr.bf16.gmra.mrb[0].mxu0 %v607
  %v1404 = vpop.f32.mrb[0].mxu0
  %v1405 = vadd.f32 %v1116, %v1404
  %v1406 = vpop.f32.mrb[0].mxu0
  %v1407 = vpop.f32.mrb[0].mxu0
  %v1408 = vadd.f32 %v1119, %v1407
  %v1409 = vpop.f32.mrb[0].mxu0
  %1410 = vmatprep.mubr.bf16.mxu0 0
  %1411 = vmatmul.mubr.bf16.gmra.mrb[0].mxu0 %v610
  %v1412 = vpop.f32.mrb[0].mxu0
  %v1413 = vadd.f32 %v1124, %v1412
  %v1414 = vpop.f32.mrb[0].mxu0
  %v1415 = vpop.f32.mrb[0].mxu0
  %v1416 = vadd.f32 %v1127, %v1415
  %v1417 = vpop.f32.mrb[0].mxu0
  %1418 = vmatprep.mubr.bf16.mxu0 0
  %1419 = vmatmul.mubr.bf16.gmra.mrb[0].mxu0 %v613
  %v1420 = vpop.f32.mrb[0].mxu0
  %v1421 = vadd.f32 %v1132, %v1420
  %v1422 = vpop.f32.mrb[0].mxu0
  %v1423 = vpop.f32.mrb[0].mxu0
  %v1424 = vadd.f32 %v1135, %v1423
  %v1425 = vpop.f32.mrb[0].mxu0
  %1426 = vmatprep.mubr.bf16.mxu0 0
  %1427 = vmatmul.mubr.bf16.gmra.mrb[0].mxu0 %v616
  %v1428 = vpop.f32.mrb[0].mxu0
  %v1429 = vadd.f32 %v1140, %v1428
  %v1430 = vpop.f32.mrb[0].mxu0
  %v1431 = vpop.f32.mrb[0].mxu0
  %v1432 = vadd.f32 %v1143, %v1431
  %v1433 = vpop.f32.mrb[0].mxu0
  %1434 = vdwg.mxu0
  %v1435 = vld [vmem:[%s3] sm:$0xf]
  %v1436 = vld [vmem:[%s3 + $0x4] sm:$0xf]
  %v1437 = vld [vmem:[%s3 + $0x8] sm:$0xf]
  %v1438 = vld [vmem:[%s3 + $0xc] sm:$0xf]
  %v1439 = vld [vmem:[%s3 + $0x10] sm:$0xf]
  %v1440 = vld [vmem:[%s3 + $0x14] sm:$0xf]
  %v1441 = vld [vmem:[%s3 + $0x18] sm:$0xf]
  %v1442 = vld [vmem:[%s3 + $0x1c] sm:$0xf]
  %v1443 = vld [vmem:[%s3 + $0x20] sm:$0xf]
  %v1444 = vld [vmem:[%s3 + $0x24] sm:$0xf]
  %v1445 = vld [vmem:[%s3 + $0x28] sm:$0xf]
  %v1446 = vld [vmem:[%s3 + $0x2c] sm:$0xf]
  %v1447 = vld [vmem:[%s3 + $0x30] sm:$0xf]
  %v1448 = vld [vmem:[%s3 + $0x34] sm:$0xf]
  %v1449 = vld [vmem:[%s3 + $0x38] sm:$0xf]
  %v1450 = vld [vmem:[%s3 + $0x3c] sm:$0xf]
  %v1451 = vld [vmem:[%s3 + $0x40] sm:$0xf]
  %v1452 = vld [vmem:[%s3 + $0x44] sm:$0xf]
  %v1453 = vld [vmem:[%s3 + $0x48] sm:$0xf]
  %v1454 = vld [vmem:[%s3 + $0x4c] sm:$0xf]
  %v1455 = vld [vmem:[%s3 + $0x50] sm:$0xf]
  %v1456 = vld [vmem:[%s3 + $0x54] sm:$0xf]
  %v1457 = vld [vmem:[%s3 + $0x58] sm:$0xf]
  %v1458 = vld [vmem:[%s3 + $0x5c] sm:$0xf]
  %v1459 = vld [vmem:[%s3 + $0x60] sm:$0xf]
  %v1460 = vld [vmem:[%s3 + $0x64] sm:$0xf]
  %v1461 = vld [vmem:[%s3 + $0x68] sm:$0xf]
  %v1462 = vld [vmem:[%s3 + $0x6c] sm:$0xf]
  %v1463 = vld [vmem:[%s3 + $0x70] sm:$0xf]
  %v1464 = vld [vmem:[%s3 + $0x74] sm:$0xf]
  %v1465 = vld [vmem:[%s3 + $0x78] sm:$0xf]
  %v1466 = vld [vmem:[%s3 + $0x7c] sm:$0xf]
  %v1467 = vld [vmem:[%s3 + $0x80] sm:$0xf]
  %v1468 = vld [vmem:[%s3 + $0x84] sm:$0xf]
  %v1469 = vld [vmem:[%s3 + $0x88] sm:$0xf]
  %v1470 = vld [vmem:[%s3 + $0x8c] sm:$0xf]
  %v1471 = vld [vmem:[%s3 + $0x90] sm:$0xf]
  %v1472 = vld [vmem:[%s3 + $0x94] sm:$0xf]
  %v1473 = vld [vmem:[%s3 + $0x98] sm:$0xf]
  %v1474 = vld [vmem:[%s3 + $0x9c] sm:$0xf]
  %v1475 = vld [vmem:[%s3 + $0xa0] sm:$0xf]
  %v1476 = vld [vmem:[%s3 + $0xa4] sm:$0xf]
  %v1477 = vld [vmem:[%s3 + $0xa8] sm:$0xf]
  %v1478 = vld [vmem:[%s3 + $0xac] sm:$0xf]
  %v1479 = vld [vmem:[%s3 + $0xb0] sm:$0xf]
  %v1480 = vld [vmem:[%s3 + $0xb4] sm:$0xf]
  %v1481 = vld [vmem:[%s3 + $0xb8] sm:$0xf]
  %v1482 = vld [vmem:[%s3 + $0xbc] sm:$0xf]
  %v1483 = vld [vmem:[%s3 + $0xc0] sm:$0xf]
  %v1484 = vld [vmem:[%s3 + $0xc4] sm:$0xf]
  %v1485 = vld [vmem:[%s3 + $0xc8] sm:$0xf]
  %v1486 = vld [vmem:[%s3 + $0xcc] sm:$0xf]
  %v1487 = vld [vmem:[%s3 + $0xd0] sm:$0xf]
  %v1488 = vld [vmem:[%s3 + $0xd4] sm:$0xf]
  %v1489 = vld [vmem:[%s3 + $0xd8] sm:$0xf]
  %v1490 = vld [vmem:[%s3 + $0xdc] sm:$0xf]
  %v1491 = vld [vmem:[%s3 + $0xe0] sm:$0xf]
  %v1492 = vld [vmem:[%s3 + $0xe4] sm:$0xf]
  %v1493 = vld [vmem:[%s3 + $0xe8] sm:$0xf]
  %v1494 = vld [vmem:[%s3 + $0xec] sm:$0xf]
  %v1495 = vld [vmem:[%s3 + $0xf0] sm:$0xf]
  %v1496 = vld [vmem:[%s3 + $0xf4] sm:$0xf]
  %v1497 = vld [vmem:[%s3 + $0xf8] sm:$0xf]
  %v1498 = vld [vmem:[%s3 + $0xfc] sm:$0xf]
  %v1499 = vunpack.c.l.bf16 %v1435
  %v1500 = vunpack.c.l.bf16 %v1436
  %v1501 = vunpack.c.l.bf16 %v1437
  %v1502 = vunpack.c.l.bf16 %v1438
  %v1503 = vunpack.c.l.bf16 %v1439
  %v1504 = vunpack.c.l.bf16 %v1440
  %v1505 = vunpack.c.l.bf16 %v1441
  %v1506 = vunpack.c.l.bf16 %v1442
  %v1507 = vunpack.c.l.bf16 %v1443
  %v1508 = vunpack.c.l.bf16 %v1444
  %v1509 = vunpack.c.l.bf16 %v1445
  %v1510 = vunpack.c.l.bf16 %v1446
  %v1511 = vunpack.c.l.bf16 %v1447
  %v1512 = vunpack.c.l.bf16 %v1448
  %v1513 = vunpack.c.l.bf16 %v1449
  %v1514 = vunpack.c.l.bf16 %v1450
  %v1515 = vunpack.c.l.bf16 %v1451
  %v1516 = vunpack.c.l.bf16 %v1452
  %v1517 = vunpack.c.l.bf16 %v1453
  %v1518 = vunpack.c.l.bf16 %v1454
  %v1519 = vunpack.c.l.bf16 %v1455
  %v1520 = vunpack.c.l.bf16 %v1456
  %v1521 = vunpack.c.l.bf16 %v1457
  %v1522 = vunpack.c.l.bf16 %v1458
  %v1523 = vunpack.c.l.bf16 %v1459
  %v1524 = vunpack.c.l.bf16 %v1460
  %v1525 = vunpack.c.l.bf16 %v1461
  %v1526 = vunpack.c.l.bf16 %v1462
  %v1527 = vunpack.c.l.bf16 %v1463
  %v1528 = vunpack.c.l.bf16 %v1464
  %v1529 = vunpack.c.l.bf16 %v1465
  %v1530 = vunpack.c.l.bf16 %v1466
  %v1531 = vunpack.c.l.bf16 %v1467
  %v1532 = vunpack.c.l.bf16 %v1468
  %v1533 = vunpack.c.l.bf16 %v1469
  %v1534 = vunpack.c.l.bf16 %v1470
  %v1535 = vunpack.c.l.bf16 %v1471
  %v1536 = vunpack.c.l.bf16 %v1472
  %v1537 = vunpack.c.l.bf16 %v1473
  %v1538 = vunpack.c.l.bf16 %v1474
  %v1539 = vunpack.c.l.bf16 %v1475
  %v1540 = vunpack.c.l.bf16 %v1476
  %v1541 = vunpack.c.l.bf16 %v1477
  %v1542 = vunpack.c.l.bf16 %v1478
  %v1543 = vunpack.c.l.bf16 %v1479
  %v1544 = vunpack.c.l.bf16 %v1480
  %v1545 = vunpack.c.l.bf16 %v1481
  %v1546 = vunpack.c.l.bf16 %v1482
  %v1547 = vunpack.c.l.bf16 %v1483
  %v1548 = vunpack.c.l.bf16 %v1484
  %v1549 = vunpack.c.l.bf16 %v1485
  %v1550 = vunpack.c.l.bf16 %v1486
  %v1551 = vunpack.c.l.bf16 %v1487
  %v1552 = vunpack.c.l.bf16 %v1488
  %v1553 = vunpack.c.l.bf16 %v1489
  %v1554 = vunpack.c.l.bf16 %v1490
  %v1555 = vunpack.c.l.bf16 %v1491
  %v1556 = vunpack.c.l.bf16 %v1492
  %v1557 = vunpack.c.l.bf16 %v1493
  %v1558 = vunpack.c.l.bf16 %v1494
  %v1559 = vunpack.c.l.bf16 %v1495
  %v1560 = vunpack.c.l.bf16 %v1496
  %v1561 = vunpack.c.l.bf16 %v1497
  %v1562 = vunpack.c.l.bf16 %v1498
  %v1563 = vadd.f32 %v1181, %v1499
  %v1564 = vadd.f32 %v1184, %v1500
  %v1565 = vadd.f32 %v1189, %v1501
  %v1566 = vadd.f32 %v1192, %v1502
  %v1567 = vadd.f32 %v1197, %v1503
  %v1568 = vadd.f32 %v1200, %v1504
  %v1569 = vadd.f32 %v1205, %v1505
  %v1570 = vadd.f32 %v1208, %v1506
  %v1571 = vadd.f32 %v1213, %v1507
  %v1572 = vadd.f32 %v1216, %v1508
  %v1573 = vadd.f32 %v1221, %v1509
  %v1574 = vadd.f32 %v1224, %v1510
  %v1575 = vadd.f32 %v1229, %v1511
  %v1576 = vadd.f32 %v1232, %v1512
  %v1577 = vadd.f32 %v1237, %v1513
  %v1578 = vadd.f32 %v1240, %v1514
  %v1579 = vadd.f32 %v1245, %v1515
  %v1580 = vadd.f32 %v1248, %v1516
  %v1581 = vadd.f32 %v1253, %v1517
  %v1582 = vadd.f32 %v1256, %v1518
  %v1583 = vadd.f32 %v1261, %v1519
  %v1584 = vadd.f32 %v1264, %v1520
  %v1585 = vadd.f32 %v1269, %v1521
  %v1586 = vadd.f32 %v1272, %v1522
  %v1587 = vadd.f32 %v1277, %v1523
  %v1588 = vadd.f32 %v1280, %v1524
  %v1589 = vadd.f32 %v1285, %v1525
  %v1590 = vadd.f32 %v1288, %v1526
  %v1591 = vadd.f32 %v1293, %v1527
  %v1592 = vadd.f32 %v1296, %v1528
  %v1593 = vadd.f32 %v1301, %v1529
  %v1594 = vadd.f32 %v1304, %v1530
  %v1595 = vadd.f32 %v1309, %v1531
  %v1596 = vadd.f32 %v1312, %v1532
  %v1597 = vadd.f32 %v1317, %v1533
  %v1598 = vadd.f32 %v1320, %v1534
  %v1599 = vadd.f32 %v1325, %v1535
  %v1600 = vadd.f32 %v1328, %v1536
  %v1601 = vadd.f32 %v1333, %v1537
  %v1602 = vadd.f32 %v1336, %v1538
  %v1603 = vadd.f32 %v1341, %v1539
  %v1604 = vadd.f32 %v1344, %v1540
  %v1605 = vadd.f32 %v1349, %v1541
  %v1606 = vadd.f32 %v1352, %v1542
  %v1607 = vadd.f32 %v1357, %v1543
  %v1608 = vadd.f32 %v1360, %v1544
  %v1609 = vadd.f32 %v1365, %v1545
  %v1610 = vadd.f32 %v1368, %v1546
  %v1611 = vadd.f32 %v1373, %v1547
  %v1612 = vadd.f32 %v1376, %v1548
  %v1613 = vadd.f32 %v1381, %v1549
  %v1614 = vadd.f32 %v1384, %v1550
  %v1615 = vadd.f32 %v1389, %v1551
  %v1616 = vadd.f32 %v1392, %v1552
  %v1617 = vadd.f32 %v1397, %v1553
  %v1618 = vadd.f32 %v1400, %v1554
  %v1619 = vadd.f32 %v1405, %v1555
  %v1620 = vadd.f32 %v1408, %v1556
  %v1621 = vadd.f32 %v1413, %v1557
  %v1622 = vadd.f32 %v1416, %v1558
  %v1623 = vadd.f32 %v1421, %v1559
  %v1624 = vadd.f32 %v1424, %v1560
  %v1625 = vadd.f32 %v1429, %v1561
  %v1626 = vadd.f32 %v1432, %v1562
  %v1627 = vmax.f32 %v1563, 0.0
  %v1628 = vmax.f32 %v1564, 0.0
  %v1629 = vmax.f32 %v1565, 0.0
  %v1630 = vmax.f32 %v1566, 0.0
  %v1631 = vmax.f32 %v1567, 0.0
  %v1632 = vmax.f32 %v1568, 0.0
  %v1633 = vmax.f32 %v1569, 0.0
  %v1634 = vmax.f32 %v1570, 0.0
  %v1635 = vmax.f32 %v1571, 0.0
  %v1636 = vmax.f32 %v1572, 0.0
  %v1637 = vmax.f32 %v1573, 0.0
  %v1638 = vmax.f32 %v1574, 0.0
  %v1639 = vmax.f32 %v1575, 0.0
  %v1640 = vmax.f32 %v1576, 0.0
  %v1641 = vmax.f32 %v1577, 0.0
  %v1642 = vmax.f32 %v1578, 0.0
  %v1643 = vmax.f32 %v1579, 0.0
  %v1644 = vmax.f32 %v1580, 0.0
  %v1645 = vmax.f32 %v1581, 0.0
  %v1646 = vmax.f32 %v1582, 0.0
  %v1647 = vmax.f32 %v1583, 0.0
  %v1648 = vmax.f32 %v1584, 0.0
  %v1649 = vmax.f32 %v1585, 0.0
  %v1650 = vmax.f32 %v1586, 0.0
  %v1651 = vmax.f32 %v1587, 0.0
  %v1652 = vmax.f32 %v1588, 0.0
  %v1653 = vmax.f32 %v1589, 0.0
  %v1654 = vmax.f32 %v1590, 0.0
  %v1655 = vmax.f32 %v1591, 0.0
  %v1656 = vmax.f32 %v1592, 0.0
  %v1657 = vmax.f32 %v1593, 0.0
  %v1658 = vmax.f32 %v1594, 0.0
  %v1659 = vmax.f32 %v1595, 0.0
  %v1660 = vmax.f32 %v1596, 0.0
  %v1661 = vmax.f32 %v1597, 0.0
  %v1662 = vmax.f32 %v1598, 0.0
  %v1663 = vmax.f32 %v1599, 0.0
  %v1664 = vmax.f32 %v1600, 0.0
  %v1665 = vmax.f32 %v1601, 0.0
  %v1666 = vmax.f32 %v1602, 0.0
  %v1667 = vmax.f32 %v1603, 0.0
  %v1668 = vmax.f32 %v1604, 0.0
  %v1669 = vmax.f32 %v1605, 0.0
  %v1670 = vmax.f32 %v1606, 0.0
  %v1671 = vmax.f32 %v1607, 0.0
  %v1672 = vmax.f32 %v1608, 0.0
  %v1673 = vmax.f32 %v1609, 0.0
  %v1674 = vmax.f32 %v1610, 0.0
  %v1675 = vmax.f32 %v1611, 0.0
  %v1676 = vmax.f32 %v1612, 0.0
  %v1677 = vmax.f32 %v1613, 0.0
  %v1678 = vmax.f32 %v1614, 0.0
  %v1679 = vmax.f32 %v1615, 0.0
  %v1680 = vmax.f32 %v1616, 0.0
  %v1681 = vmax.f32 %v1617, 0.0
  %v1682 = vmax.f32 %v1618, 0.0
  %v1683 = vmax.f32 %v1619, 0.0
  %v1684 = vmax.f32 %v1620, 0.0
  %v1685 = vmax.f32 %v1621, 0.0
  %v1686 = vmax.f32 %v1622, 0.0
  %v1687 = vmax.f32 %v1623, 0.0
  %v1688 = vmax.f32 %v1624, 0.0
  %v1689 = vmax.f32 %v1625, 0.0
  %v1690 = vmax.f32 %v1626, 0.0
  %v1691 = vpack.c.bf16 %v1628, %v1627
  %v1692 = vpack.c.bf16 %v1630, %v1629
  %v1693 = vpack.c.bf16 %v1632, %v1631
  %v1694 = vpack.c.bf16 %v1634, %v1633
  %v1695 = vpack.c.bf16 %v1636, %v1635
  %v1696 = vpack.c.bf16 %v1638, %v1637
  %v1697 = vpack.c.bf16 %v1640, %v1639
  %v1698 = vpack.c.bf16 %v1642, %v1641
  %v1699 = vpack.c.bf16 %v1644, %v1643
  %v1700 = vpack.c.bf16 %v1646, %v1645
  %v1701 = vpack.c.bf16 %v1648, %v1647
  %v1702 = vpack.c.bf16 %v1650, %v1649
  %v1703 = vpack.c.bf16 %v1652, %v1651
  %v1704 = vpack.c.bf16 %v1654, %v1653
  %v1705 = vpack.c.bf16 %v1656, %v1655
  %v1706 = vpack.c.bf16 %v1658, %v1657
  %v1707 = vpack.c.bf16 %v1660, %v1659
  %v1708 = vpack.c.bf16 %v1662, %v1661
  %v1709 = vpack.c.bf16 %v1664, %v1663
  %v1710 = vpack.c.bf16 %v1666, %v1665
  %v1711 = vpack.c.bf16 %v1668, %v1667
  %v1712 = vpack.c.bf16 %v1670, %v1669
  %v1713 = vpack.c.bf16 %v1672, %v1671
  %v1714 = vpack.c.bf16 %v1674, %v1673
  %v1715 = vpack.c.bf16 %v1676, %v1675
  %v1716 = vpack.c.bf16 %v1678, %v1677
  %v1717 = vpack.c.bf16 %v1680, %v1679
  %v1718 = vpack.c.bf16 %v1682, %v1681
  %v1719 = vpack.c.bf16 %v1684, %v1683
  %v1720 = vpack.c.bf16 %v1686, %v1685
  %v1721 = vpack.c.bf16 %v1688, %v1687
  %v1722 = vpack.c.bf16 %v1690, %v1689
  %v1755 = vunpack.c.l.b16 %v1691
  %v1756 = vunpack.c.h.b16 %v1691
  %v1757 = vunpack.c.l.b16 %v1692
  %v1758 = vunpack.c.h.b16 %v1692
  %v1759 = vunpack.c.l.b16 %v1693
  %v1760 = vunpack.c.h.b16 %v1693
  %v1761 = vunpack.c.l.b16 %v1694
  %v1762 = vunpack.c.h.b16 %v1694
  %v1763 = vunpack.c.l.b16 %v1695
  %v1764 = vunpack.c.h.b16 %v1695
  %v1765 = vunpack.c.l.b16 %v1696
  %v1766 = vunpack.c.h.b16 %v1696
  %v1767 = vunpack.c.l.b16 %v1697
  %v1768 = vunpack.c.h.b16 %v1697
  %v1769 = vunpack.c.l.b16 %v1698
  %v1770 = vunpack.c.h.b16 %v1698
  %v1771 = vunpack.c.l.b16 %v1699
  %v1772 = vunpack.c.h.b16 %v1699
  %v1773 = vunpack.c.l.b16 %v1700
  %v1774 = vunpack.c.h.b16 %v1700
  %v1775 = vunpack.c.l.b16 %v1701
  %v1776 = vunpack.c.h.b16 %v1701
  %v1777 = vunpack.c.l.b16 %v1702
  %v1778 = vunpack.c.h.b16 %v1702
  %v1779 = vunpack.c.l.b16 %v1703
  %v1780 = vunpack.c.h.b16 %v1703
  %v1781 = vunpack.c.l.b16 %v1704
  %v1782 = vunpack.c.h.b16 %v1704
  %v1783 = vunpack.c.l.b16 %v1705
  %v1784 = vunpack.c.h.b16 %v1705
  %v1785 = vunpack.c.l.b16 %v1706
  %v1786 = vunpack.c.h.b16 %v1706
  %v1787 = vunpack.c.l.b16 %v1707
  %v1788 = vunpack.c.h.b16 %v1707
  %v1789 = vunpack.c.l.b16 %v1708
  %v1790 = vunpack.c.h.b16 %v1708
  %v1791 = vunpack.c.l.b16 %v1709
  %v1792 = vunpack.c.h.b16 %v1709
  %v1793 = vunpack.c.l.b16 %v1710
  %v1794 = vunpack.c.h.b16 %v1710
  %v1795 = vunpack.c.l.b16 %v1711
  %v1796 = vunpack.c.h.b16 %v1711
  %v1797 = vunpack.c.l.b16 %v1712
  %v1798 = vunpack.c.h.b16 %v1712
  %v1799 = vunpack.c.l.b16 %v1713
  %v1800 = vunpack.c.h.b16 %v1713
  %v1801 = vunpack.c.l.b16 %v1714
  %v1802 = vunpack.c.h.b16 %v1714
  %v1803 = vunpack.c.l.b16 %v1715
  %v1804 = vunpack.c.h.b16 %v1715
  %v1805 = vunpack.c.l.b16 %v1716
  %v1806 = vunpack.c.h.b16 %v1716
  %v1807 = vunpack.c.l.b16 %v1717
  %v1808 = vunpack.c.h.b16 %v1717
  %v1809 = vunpack.c.l.b16 %v1718
  %v1810 = vunpack.c.h.b16 %v1718
  %v1811 = vunpack.c.l.b16 %v1719
  %v1812 = vunpack.c.h.b16 %v1719
  %v1813 = vunpack.c.l.b16 %v1720
  %v1814 = vunpack.c.h.b16 %v1720
  %v1815 = vunpack.c.l.b16 %v1721
  %v1816 = vunpack.c.h.b16 %v1721
  %v1817 = vunpack.c.l.b16 %v1722
  %v1818 = vunpack.c.h.b16 %v1722
  %v1819 = vpack.c.b16 %v1755, %v1755
  %v1820 = vpack.c.b16 %v1756, %v1756
  %v1821 = vpack.c.b16 %v1757, %v1757
  %v1822 = vpack.c.b16 %v1758, %v1758
  %v1823 = vpack.c.b16 %v1759, %v1759
  %v1824 = vpack.c.b16 %v1760, %v1760
  %v1825 = vpack.c.b16 %v1761, %v1761
  %v1826 = vpack.c.b16 %v1762, %v1762
  %v1827 = vpack.c.b16 %v1763, %v1763
  %v1828 = vpack.c.b16 %v1764, %v1764
  %v1829 = vpack.c.b16 %v1765, %v1765
  %v1830 = vpack.c.b16 %v1766, %v1766
  %v1831 = vpack.c.b16 %v1767, %v1767
  %v1832 = vpack.c.b16 %v1768, %v1768
  %v1833 = vpack.c.b16 %v1769, %v1769
  %v1834 = vpack.c.b16 %v1770, %v1770
  %v1835 = vpack.c.b16 %v1771, %v1771
  %v1836 = vpack.c.b16 %v1772, %v1772
  %v1837 = vpack.c.b16 %v1773, %v1773
  %v1838 = vpack.c.b16 %v1774, %v1774
  %v1839 = vpack.c.b16 %v1775, %v1775
  %v1840 = vpack.c.b16 %v1776, %v1776
  %v1841 = vpack.c.b16 %v1777, %v1777
  %v1842 = vpack.c.b16 %v1778, %v1778
  %v1843 = vpack.c.b16 %v1779, %v1779
  %v1844 = vpack.c.b16 %v1780, %v1780
  %v1845 = vpack.c.b16 %v1781, %v1781
  %v1846 = vpack.c.b16 %v1782, %v1782
  %v1847 = vpack.c.b16 %v1783, %v1783
  %v1848 = vpack.c.b16 %v1784, %v1784
  %v1849 = vpack.c.b16 %v1785, %v1785
  %v1850 = vpack.c.b16 %v1786, %v1786
  %v1851 = vpack.c.b16 %v1787, %v1787
  %v1852 = vpack.c.b16 %v1788, %v1788
  %v1853 = vpack.c.b16 %v1789, %v1789
  %v1854 = vpack.c.b16 %v1790, %v1790
  %v1855 = vpack.c.b16 %v1791, %v1791
  %v1856 = vpack.c.b16 %v1792, %v1792
  %v1857 = vpack.c.b16 %v1793, %v1793
  %v1858 = vpack.c.b16 %v1794, %v1794
  %v1859 = vpack.c.b16 %v1795, %v1795
  %v1860 = vpack.c.b16 %v1796, %v1796
  %v1861 = vpack.c.b16 %v1797, %v1797
  %v1862 = vpack.c.b16 %v1798, %v1798
  %v1863 = vpack.c.b16 %v1799, %v1799
  %v1864 = vpack.c.b16 %v1800, %v1800
  %v1865 = vpack.c.b16 %v1801, %v1801
  %v1866 = vpack.c.b16 %v1802, %v1802
  %v1867 = vpack.c.b16 %v1803, %v1803
  %v1868 = vpack.c.b16 %v1804, %v1804
  %v1869 = vpack.c.b16 %v1805, %v1805
  %v1870 = vpack.c.b16 %v1806, %v1806
  %v1871 = vpack.c.b16 %v1807, %v1807
  %v1872 = vpack.c.b16 %v1808, %v1808
  %v1873 = vpack.c.b16 %v1809, %v1809
  %v1874 = vpack.c.b16 %v1810, %v1810
  %v1875 = vpack.c.b16 %v1811, %v1811
  %v1876 = vpack.c.b16 %v1812, %v1812
  %v1877 = vpack.c.b16 %v1813, %v1813
  %v1878 = vpack.c.b16 %v1814, %v1814
  %v1879 = vpack.c.b16 %v1815, %v1815
  %v1880 = vpack.c.b16 %v1816, %v1816
  %v1881 = vpack.c.b16 %v1817, %v1817
  %v1882 = vpack.c.b16 %v1818, %v1818
  %1947 = vst [vmem:[%s4] sm:$0xf] %v1819
  %1948 = vst [vmem:[%s4 + $0x4] sm:$0xf] %v1820
  %1949 = vst [vmem:[%s4 + $0x8] sm:$0xf] %v1821
  %1950 = vst [vmem:[%s4 + $0xc] sm:$0xf] %v1822
  %1951 = vst [vmem:[%s4 + $0x10] sm:$0xf] %v1823
  %1952 = vst [vmem:[%s4 + $0x14] sm:$0xf] %v1824
  %1953 = vst [vmem:[%s4 + $0x18] sm:$0xf] %v1825
  %1954 = vst [vmem:[%s4 + $0x1c] sm:$0xf] %v1826
  %1955 = vst [vmem:[%s4 + $0x20] sm:$0xf] %v1827
  %1956 = vst [vmem:[%s4 + $0x24] sm:$0xf] %v1828
  %1957 = vst [vmem:[%s4 + $0x28] sm:$0xf] %v1829
  %1958 = vst [vmem:[%s4 + $0x2c] sm:$0xf] %v1830
  %1959 = vst [vmem:[%s4 + $0x30] sm:$0xf] %v1831
  %1960 = vst [vmem:[%s4 + $0x34] sm:$0xf] %v1832
  %1961 = vst [vmem:[%s4 + $0x38] sm:$0xf] %v1833
  %1962 = vst [vmem:[%s4 + $0x3c] sm:$0xf] %v1834
  %1963 = vst [vmem:[%s4 + $0x40] sm:$0xf] %v1835
  %1964 = vst [vmem:[%s4 + $0x44] sm:$0xf] %v1836
  %1965 = vst [vmem:[%s4 + $0x48] sm:$0xf] %v1837
  %1966 = vst [vmem:[%s4 + $0x4c] sm:$0xf] %v1838
  %1967 = vst [vmem:[%s4 + $0x50] sm:$0xf] %v1839
  %1968 = vst [vmem:[%s4 + $0x54] sm:$0xf] %v1840
  %1969 = vst [vmem:[%s4 + $0x58] sm:$0xf] %v1841
  %1970 = vst [vmem:[%s4 + $0x5c] sm:$0xf] %v1842
  %1971 = vst [vmem:[%s4 + $0x60] sm:$0xf] %v1843
  %1972 = vst [vmem:[%s4 + $0x64] sm:$0xf] %v1844
  %1973 = vst [vmem:[%s4 + $0x68] sm:$0xf] %v1845
  %1974 = vst [vmem:[%s4 + $0x6c] sm:$0xf] %v1846
  %1975 = vst [vmem:[%s4 + $0x70] sm:$0xf] %v1847
  %1976 = vst [vmem:[%s4 + $0x74] sm:$0xf] %v1848
  %1977 = vst [vmem:[%s4 + $0x78] sm:$0xf] %v1849
  %1978 = vst [vmem:[%s4 + $0x7c] sm:$0xf] %v1850
  %1979 = vst [vmem:[%s4 + $0x80] sm:$0xf] %v1851
  %1980 = vst [vmem:[%s4 + $0x84] sm:$0xf] %v1852
  %1981 = vst [vmem:[%s4 + $0x88] sm:$0xf] %v1853
  %1982 = vst [vmem:[%s4 + $0x8c] sm:$0xf] %v1854
  %1983 = vst [vmem:[%s4 + $0x90] sm:$0xf] %v1855
  %1984 = vst [vmem:[%s4 + $0x94] sm:$0xf] %v1856
  %1985 = vst [vmem:[%s4 + $0x98] sm:$0xf] %v1857
  %1986 = vst [vmem:[%s4 + $0x9c] sm:$0xf] %v1858
  %1987 = vst [vmem:[%s4 + $0xa0] sm:$0xf] %v1859
  %1988 = vst [vmem:[%s4 + $0xa4] sm:$0xf] %v1860
  %1989 = vst [vmem:[%s4 + $0xa8] sm:$0xf] %v1861
  %1990 = vst [vmem:[%s4 + $0xac] sm:$0xf] %v1862
  %1991 = vst [vmem:[%s4 + $0xb0] sm:$0xf] %v1863
  %1992 = vst [vmem:[%s4 + $0xb4] sm:$0xf] %v1864
  %1993 = vst [vmem:[%s4 + $0xb8] sm:$0xf] %v1865
  %1994 = vst [vmem:[%s4 + $0xbc] sm:$0xf] %v1866
  %1995 = vst [vmem:[%s4 + $0xc0] sm:$0xf] %v1867
  %1996 = vst [vmem:[%s4 + $0xc4] sm:$0xf] %v1868
  %1997 = vst [vmem:[%s4 + $0xc8] sm:$0xf] %v1869
  %1998 = vst [vmem:[%s4 + $0xcc] sm:$0xf] %v1870
  %1999 = vst [vmem:[%s4 + $0xd0] sm:$0xf] %v1871
  %2000 = vst [vmem:[%s4 + $0xd4] sm:$0xf] %v1872
  %2001 = vst [vmem:[%s4 + $0xd8] sm:$0xf] %v1873
  %2002 = vst [vmem:[%s4 + $0xdc] sm:$0xf] %v1874
  %2003 = vst [vmem:[%s4 + $0xe0] sm:$0xf] %v1875
  %2004 = vst [vmem:[%s4 + $0xe4] sm:$0xf] %v1876
  %2005 = vst [vmem:[%s4 + $0xe8] sm:$0xf] %v1877
  %2006 = vst [vmem:[%s4 + $0xec] sm:$0xf] %v1878
  %2007 = vst [vmem:[%s4 + $0xf0] sm:$0xf] %v1879
  %2008 = vst [vmem:[%s4 + $0xf4] sm:$0xf] %v1880
  %2009 = vst [vmem:[%s4 + $0xf8] sm:$0xf] %v1881
  %2010 = vst [vmem:[%s4 + $0xfc] sm:$0xf] %v1882
  // Predicated region
  $region18: #{resnetx_feature_extractor_forward.7} parent=0 // pred_check
    _
  $region19: #{resnetx_feature_extractor_forward.7} parent=0 // pred_check_branch
    %2012 = sbr.rel (0) target = $region21
  $region20: #{resnetx_feature_extractor_forward.7} parent=0 // pred_region
    _
  $region21: #{resnetx_feature_extractor_forward.7} parent=0 // pred_fallthru
    _
  // Predicated region
  $region22: #{resnetx_feature_extractor_forward.7} parent=0 // pred_check
    _
  $region23: #{resnetx_feature_extractor_forward.7} parent=0 // pred_check_branch
    %2014 = sbr.rel (0) target = $region25
  $region24: #{resnetx_feature_extractor_forward.7} parent=0 // pred_region
    _
  $region25: #{resnetx_feature_extractor_forward.7} parent=0 // pred_fallthru
    _

// kernel: resnetx_feature_extractor_forward.8
$region0: #{resnetx_feature_extractor_forward.8}
  #allocation0 [shape = 'u32[]', space=smem, size = 0x4, offset = 0x4, fixed_abs, tag = 'smem constant byte address 0x4 - core index']
  #allocation1 [shape = 'u32[144,128]{1,0:T(1,128)}', space=vmem, size = 0x12000, scoped, tag = 'internal scratch']
  %s0 = inlined_call_operand.vmem [shape: bf16[128,384], index: 0, kind: input, shape index: {}]
  %s1 = inlined_call_operand.vmem [shape: bf16[384,128], index: 1, kind: input, shape index: {}]
  %s2 = inlined_call_operand.vmem [shape: f32[1,128], index: 2, kind: input, shape index: {}]
  %s3 = inlined_call_operand.vmem [shape: bf16[128,128], index: 3, kind: output, shape index: {}]
  %s4 = sld [smem:[#allocation0]]
  $region22: #{resnetx_feature_extractor_forward.8} parent=0
    _
  %s6 = ssub.s32 1, %s4
  %s7 = scalar_select 0, %s6, %s4
  // Predicated region
  $region2: #{resnetx_feature_extractor_forward.8} parent=0 // pred_check
    _
  $region3: #{resnetx_feature_extractor_forward.8} parent=0 // pred_check_branch
    %9 = sbr.rel (0) target = $region5
  $region4: #{resnetx_feature_extractor_forward.8} parent=0 // pred_region
    _
  $region5: #{resnetx_feature_extractor_forward.8} parent=0 // pred_fallthru
    _
  // Predicated region
  $region6: #{resnetx_feature_extractor_forward.8} parent=0 // pred_check
    _
  $region7: #{resnetx_feature_extractor_forward.8} parent=0 // pred_check_branch
    %11 = sbr.rel (0) target = $region9
  $region8: #{resnetx_feature_extractor_forward.8} parent=0 // pred_region
    _
  $region9: #{resnetx_feature_extractor_forward.8} parent=0 // pred_fallthru
    _
  // Predicated region
  $region10: #{resnetx_feature_extractor_forward.8} parent=0 // pred_check
    _
  $region11: #{resnetx_feature_extractor_forward.8} parent=0 // pred_check_branch
    %13 = sbr.rel (0) target = $region13
  $region12: #{resnetx_feature_extractor_forward.8} parent=0 // pred_region
    _
  $region13: #{resnetx_feature_extractor_forward.8} parent=0 // pred_fallthru
    _
  %v15 = vld [vmem:[%s0] sm:$0xff]
  %v16 = vld [vmem:[%s0 + $0x8] sm:$0xf]
  %v17 = vld [vmem:[%s0 + $0xc] sm:$0xff]
  %v18 = vld [vmem:[%s0 + $0x14] sm:$0xf]
  %v19 = vld [vmem:[%s0 + $0x18] sm:$0xff]
  %v20 = vld [vmem:[%s0 + $0x20] sm:$0xf]
  %v21 = vld [vmem:[%s0 + $0x24] sm:$0xff]
  %v22 = vld [vmem:[%s0 + $0x2c] sm:$0xf]
  %v23 = vld [vmem:[%s0 + $0x30] sm:$0xff]
  %v24 = vld [vmem:[%s0 + $0x38] sm:$0xf]
  %v25 = vld [vmem:[%s0 + $0x3c] sm:$0xff]
  %v26 = vld [vmem:[%s0 + $0x44] sm:$0xf]
  %v27 = vld [vmem:[%s0 + $0x48] sm:$0xff]
  %v28 = vld [vmem:[%s0 + $0x50] sm:$0xf]
  %v29 = vld [vmem:[%s0 + $0x54] sm:$0xff]
  %v30 = vld [vmem:[%s0 + $0x5c] sm:$0xf]
  %v31 = vld [vmem:[%s0 + $0x60] sm:$0xff]
  %v32 = vld [vmem:[%s0 + $0x68] sm:$0xf]
  %v33 = vld [vmem:[%s0 + $0x6c] sm:$0xff]
  %v34 = vld [vmem:[%s0 + $0x74] sm:$0xf]
  %v35 = vld [vmem:[%s0 + $0x78] sm:$0xff]
  %v36 = vld [vmem:[%s0 + $0x80] sm:$0xf]
  %v37 = vld [vmem:[%s0 + $0x84] sm:$0xff]
  %v38 = vld [vmem:[%s0 + $0x8c] sm:$0xf]
  %v39 = vld [vmem:[%s0 + $0x90] sm:$0xff]
  %v40 = vld [vmem:[%s0 + $0x98] sm:$0xf]
  %v41 = vld [vmem:[%s0 + $0x9c] sm:$0xff]
  %v42 = vld [vmem:[%s0 + $0xa4] sm:$0xf]
  %v43 = vld [vmem:[%s0 + $0xa8] sm:$0xff]
  %v44 = vld [vmem:[%s0 + $0xb0] sm:$0xf]
  %v45 = vld [vmem:[%s0 + $0xb4] sm:$0xff]
  %v46 = vld [vmem:[%s0 + $0xbc] sm:$0xf]
  %v47 = vld [vmem:[%s1] sm:$0xf]
  %v48 = vld [vmem:[%s1 + $0x4] sm:$0xf]
  %v49 = vld [vmem:[%s1 + $0x8] sm:$0xf]
  %v50 = vld [vmem:[%s1 + $0xc] sm:$0xf]
  %v51 = vld [vmem:[%s1 + $0x10] sm:$0xf]
  %v52 = vld [vmem:[%s1 + $0x14] sm:$0xf]
  %v53 = vld [vmem:[%s1 + $0x18] sm:$0xf]
  %v54 = vld [vmem:[%s1 + $0x1c] sm:$0xf]
  %v55 = vld [vmem:[%s1 + $0x20] sm:$0xf]
  %v56 = vld [vmem:[%s1 + $0x24] sm:$0xf]
  %v57 = vld [vmem:[%s1 + $0x28] sm:$0xf]
  %v58 = vld [vmem:[%s1 + $0x2c] sm:$0xf]
  %v59 = vld [vmem:[%s1 + $0x30] sm:$0xf]
  %v60 = vld [vmem:[%s1 + $0x34] sm:$0xf]
  %v61 = vld [vmem:[%s1 + $0x38] sm:$0xf]
  %v62 = vld [vmem:[%s1 + $0x3c] sm:$0xf]
  %v63 = vld [vmem:[%s1 + $0x40] sm:$0xf]
  %v64 = vld [vmem:[%s1 + $0x44] sm:$0xf]
  %v65 = vld [vmem:[%s1 + $0x48] sm:$0xf]
  %v66 = vld [vmem:[%s1 + $0x4c] sm:$0xf]
  %v67 = vld [vmem:[%s1 + $0x50] sm:$0xf]
  %v68 = vld [vmem:[%s1 + $0x54] sm:$0xf]
  %v69 = vld [vmem:[%s1 + $0x58] sm:$0xf]
  %v70 = vld [vmem:[%s1 + $0x5c] sm:$0xf]
  %v71 = vld [vmem:[%s1 + $0x60] sm:$0xf]
  %v72 = vld [vmem:[%s1 + $0x64] sm:$0xf]
  %v73 = vld [vmem:[%s1 + $0x68] sm:$0xf]
  %v74 = vld [vmem:[%s1 + $0x6c] sm:$0xf]
  %v75 = vld [vmem:[%s1 + $0x70] sm:$0xf]
  %v76 = vld [vmem:[%s1 + $0x74] sm:$0xf]
  %v77 = vld [vmem:[%s1 + $0x78] sm:$0xf]
  %v78 = vld [vmem:[%s1 + $0x7c] sm:$0xf]
  %v79 = vld [vmem:[%s1 + $0x80] sm:$0xf]
  %v80 = vld [vmem:[%s1 + $0x84] sm:$0xf]
  %v81 = vld [vmem:[%s1 + $0x88] sm:$0xf]
  %v82 = vld [vmem:[%s1 + $0x8c] sm:$0xf]
  %v83 = vld [vmem:[%s1 + $0x90] sm:$0xf]
  %v84 = vld [vmem:[%s1 + $0x94] sm:$0xf]
  %v85 = vld [vmem:[%s1 + $0x98] sm:$0xf]
  %v86 = vld [vmem:[%s1 + $0x9c] sm:$0xf]
  %v87 = vld [vmem:[%s1 + $0xa0] sm:$0xf]
  %v88 = vld [vmem:[%s1 + $0xa4] sm:$0xf]
  %v89 = vld [vmem:[%s1 + $0xa8] sm:$0xf]
  %v90 = vld [vmem:[%s1 + $0xac] sm:$0xf]
  %v91 = vld [vmem:[%s1 + $0xb0] sm:$0xf]
  %v92 = vld [vmem:[%s1 + $0xb4] sm:$0xf]
  %v93 = vld [vmem:[%s1 + $0xb8] sm:$0xf]
  %v94 = vld [vmem:[%s1 + $0xbc] sm:$0xf]
  %v95 = vld [vmem:[%s2] sm:$0x1]
  %v97 = vlaneseq
  %v98 = vshrl.u32 %v97, 7
  %v99 = vsub.s32 0, %v98
  %v100 = vrot.slane %v95, %v99
  %v134 = vunpack.c.l.b16 %v15
  %v135 = vunpack.c.h.b16 %v15
  %v136 = vunpack.c.l.b16 %v16
  %v137 = vunpack.c.l.b16 %v17
  %v138 = vunpack.c.h.b16 %v17
  %v139 = vunpack.c.l.b16 %v18
  %v140 = vunpack.c.l.b16 %v19
  %v141 = vunpack.c.h.b16 %v19
  %v142 = vunpack.c.l.b16 %v20
  %v143 = vunpack.c.l.b16 %v21
  %v144 = vunpack.c.h.b16 %v21
  %v145 = vunpack.c.l.b16 %v22
  %v146 = vunpack.c.l.b16 %v23
  %v147 = vunpack.c.h.b16 %v23
  %v148 = vunpack.c.l.b16 %v24
  %v149 = vunpack.c.l.b16 %v25
  %v150 = vunpack.c.h.b16 %v25
  %v151 = vunpack.c.l.b16 %v26
  %v152 = vunpack.c.l.b16 %v27
  %v153 = vunpack.c.h.b16 %v27
  %v154 = vunpack.c.l.b16 %v28
  %v155 = vunpack.c.l.b16 %v29
  %v156 = vunpack.c.h.b16 %v29
  %v157 = vunpack.c.l.b16 %v30
  %v158 = vunpack.c.l.b16 %v31
  %v159 = vunpack.c.h.b16 %v31
  %v160 = vunpack.c.l.b16 %v32
  %v161 = vunpack.c.l.b16 %v33
  %v162 = vunpack.c.h.b16 %v33
  %v163 = vunpack.c.l.b16 %v34
  %v164 = vunpack.c.l.b16 %v35
  %v165 = vunpack.c.h.b16 %v35
  %v166 = vunpack.c.l.b16 %v36
  %v167 = vunpack.c.l.b16 %v37
  %v168 = vunpack.c.h.b16 %v37
  %v169 = vunpack.c.l.b16 %v38
  %v170 = vunpack.c.l.b16 %v39
  %v171 = vunpack.c.h.b16 %v39
  %v172 = vunpack.c.l.b16 %v40
  %v173 = vunpack.c.l.b16 %v41
  %v174 = vunpack.c.h.b16 %v41
  %v175 = vunpack.c.l.b16 %v42
  %v176 = vunpack.c.l.b16 %v43
  %v177 = vunpack.c.h.b16 %v43
  %v178 = vunpack.c.l.b16 %v44
  %v179 = vunpack.c.l.b16 %v45
  %v180 = vunpack.c.h.b16 %v45
  %v181 = vunpack.c.l.b16 %v46
  %v182 = vpack.c.b16 %v137, %v134
  %v183 = vpack.c.b16 %v138, %v135
  %v184 = vpack.c.b16 %v139, %v136
  %v185 = vpack.c.b16 %v143, %v140
  %v186 = vpack.c.b16 %v144, %v141
  %v187 = vpack.c.b16 %v145, %v142
  %v188 = vpack.c.b16 %v149, %v146
  %v189 = vpack.c.b16 %v150, %v147
  %v190 = vpack.c.b16 %v151, %v148
  %v191 = vpack.c.b16 %v155, %v152
  %v192 = vpack.c.b16 %v156, %v153
  %v193 = vpack.c.b16 %v157, %v154
  %v194 = vpack.c.b16 %v161, %v158
  %v195 = vpack.c.b16 %v162, %v159
  %v196 = vpack.c.b16 %v163, %v160
  %v197 = vpack.c.b16 %v167, %v164
  %v198 = vpack.c.b16 %v168, %v165
  %v199 = vpack.c.b16 %v169, %v166
  %v200 = vpack.c.b16 %v173, %v170
  %v201 = vpack.c.b16 %v174, %v171
  %v202 = vpack.c.b16 %v175, %v172
  %v203 = vpack.c.b16 %v179, %v176
  %v204 = vpack.c.b16 %v180, %v177
  %v205 = vpack.c.b16 %v181, %v178
  %v278 = vunpack.c.l.b16 %v47
  %v279 = vunpack.c.l.b16 %v48
  %v280 = vunpack.c.l.b16 %v49
  %v281 = vunpack.c.l.b16 %v50
  %v282 = vunpack.c.l.b16 %v51
  %v283 = vunpack.c.l.b16 %v52
  %v284 = vunpack.c.l.b16 %v53
  %v285 = vunpack.c.l.b16 %v54
  %v286 = vunpack.c.l.b16 %v55
  %v287 = vunpack.c.l.b16 %v56
  %v288 = vunpack.c.l.b16 %v57
  %v289 = vunpack.c.l.b16 %v58
  %v290 = vunpack.c.l.b16 %v59
  %v291 = vunpack.c.l.b16 %v60
  %v292 = vunpack.c.l.b16 %v61
  %v293 = vunpack.c.l.b16 %v62
  %v294 = vunpack.c.l.b16 %v63
  %v295 = vunpack.c.l.b16 %v64
  %v296 = vunpack.c.l.b16 %v65
  %v297 = vunpack.c.l.b16 %v66
  %v298 = vunpack.c.l.b16 %v67
  %v299 = vunpack.c.l.b16 %v68
  %v300 = vunpack.c.l.b16 %v69
  %v301 = vunpack.c.l.b16 %v70
  %v302 = vunpack.c.l.b16 %v71
  %v303 = vunpack.c.l.b16 %v72
  %v304 = vunpack.c.l.b16 %v73
  %v305 = vunpack.c.l.b16 %v74
  %v306 = vunpack.c.l.b16 %v75
  %v307 = vunpack.c.l.b16 %v76
  %v308 = vunpack.c.l.b16 %v77
  %v309 = vunpack.c.l.b16 %v78
  %v310 = vunpack.c.l.b16 %v79
  %v311 = vunpack.c.l.b16 %v80
  %v312 = vunpack.c.l.b16 %v81
  %v313 = vunpack.c.l.b16 %v82
  %v314 = vunpack.c.l.b16 %v83
  %v315 = vunpack.c.l.b16 %v84
  %v316 = vunpack.c.l.b16 %v85
  %v317 = vunpack.c.l.b16 %v86
  %v318 = vunpack.c.l.b16 %v87
  %v319 = vunpack.c.l.b16 %v88
  %v320 = vunpack.c.l.b16 %v89
  %v321 = vunpack.c.l.b16 %v90
  %v322 = vunpack.c.l.b16 %v91
  %v323 = vunpack.c.l.b16 %v92
  %v324 = vunpack.c.l.b16 %v93
  %v325 = vunpack.c.l.b16 %v94
  %v326 = vpack.c.b16 %v279, %v278
  %v327 = vpack.c.b16 %v281, %v280
  %v328 = vpack.c.b16 %v283, %v282
  %v329 = vpack.c.b16 %v285, %v284
  %v330 = vpack.c.b16 %v287, %v286
  %v331 = vpack.c.b16 %v289, %v288
  %v332 = vpack.c.b16 %v291, %v290
  %v333 = vpack.c.b16 %v293, %v292
  %v334 = vpack.c.b16 %v295, %v294
  %v335 = vpack.c.b16 %v297, %v296
  %v336 = vpack.c.b16 %v299, %v298
  %v337 = vpack.c.b16 %v301, %v300
  %v338 = vpack.c.b16 %v303, %v302
  %v339 = vpack.c.b16 %v305, %v304
  %v340 = vpack.c.b16 %v307, %v306
  %v341 = vpack.c.b16 %v309, %v308
  %v342 = vpack.c.b16 %v311, %v310
  %v343 = vpack.c.b16 %v313, %v312
  %v344 = vpack.c.b16 %v315, %v314
  %v345 = vpack.c.b16 %v317, %v316
  %v346 = vpack.c.b16 %v319, %v318
  %v347 = vpack.c.b16 %v321, %v320
  %v348 = vpack.c.b16 %v323, %v322
  %v349 = vpack.c.b16 %v325, %v324
  %374 = vmatprep.subr.bf16.mxu0 0
  %375 = vmatpush1.bf16.msra.mxu0 %v326
  %376 = vmatprep.subr.bf16.mxu0 0
  %377 = vmatpush1.bf16.msra.mxu0 %v327
  %378 = vmatprep.subr.bf16.mxu0 0
  %379 = vmatpush1.bf16.msra.mxu0 %v328
  %380 = vmatprep.subr.bf16.mxu0 0
  %381 = vmatpush1.bf16.msra.mxu0 %v329
  %382 = vmatprep.subr.bf16.mxu0 0
  %383 = vmatpush1.bf16.msra.mxu0 %v330
  %384 = vmatprep.subr.bf16.mxu0 0
  %385 = vmatpush1.bf16.msra.mxu0 %v331
  %386 = vmatprep.subr.bf16.mxu0 0
  %387 = vmatpush1.bf16.msra.mxu0 %v332
  %388 = vmatprep.subr.bf16.mxu0 0
  %389 = vmatpush1.bf16.msra.mxu0 %v333
  %390 = vmatprep.subr.bf16.mxu0 0
  %391 = vmatpush1.bf16.msra.mxu0 %v334
  %392 = vmatprep.subr.bf16.mxu0 0
  %393 = vmatpush1.bf16.msra.mxu0 %v335
  %394 = vmatprep.subr.bf16.mxu0 0
  %395 = vmatpush1.bf16.msra.mxu0 %v336
  %396 = vmatprep.subr.bf16.mxu0 0
  %397 = vmatpush1.bf16.msra.mxu0 %v337
  %398 = vmatprep.subr.bf16.mxu0 0
  %399 = vmatpush1.bf16.msra.mxu0 %v338
  %400 = vmatprep.subr.bf16.mxu0 0
  %401 = vmatpush1.bf16.msra.mxu0 %v339
  %402 = vmatprep.subr.bf16.mxu0 0
  %403 = vmatpush1.bf16.msra.mxu0 %v340
  %404 = vmatprep.subr.bf16.mxu0 0
  %405 = vmatpush1.bf16.msra.mxu0 %v341
  %406 = vmatprep.mubr.bf16.mxu0 %v183
  %407 = vmatmul.mubr.bf16.gmra.mrb[0].mxu0 %v182
  %v408 = vpop.f32.mrb[0].mxu0
  %v409 = vadd.f32 %v100, %v408
  %v410 = vpop.f32.mrb[0].mxu0
  %v411 = vpop.f32.mrb[0].mxu0
  %v412 = vadd.f32 %v100, %v411
  %v413 = vpop.f32.mrb[0].mxu0
  %414 = vmatprep.mubr.bf16.mxu0 %v186
  %415 = vmatmul.mubr.bf16.gmra.mrb[0].mxu0 %v185
  %v416 = vpop.f32.mrb[0].mxu0
  %v417 = vadd.f32 %v100, %v416
  %v418 = vpop.f32.mrb[0].mxu0
  %v419 = vpop.f32.mrb[0].mxu0
  %v420 = vadd.f32 %v100, %v419
  %v421 = vpop.f32.mrb[0].mxu0
  %422 = vmatprep.mubr.bf16.mxu0 %v189
  %423 = vmatmul.mubr.bf16.gmra.mrb[0].mxu0 %v188
  %v424 = vpop.f32.mrb[0].mxu0
  %v425 = vadd.f32 %v100, %v424
  %v426 = vpop.f32.mrb[0].mxu0
  %v427 = vpop.f32.mrb[0].mxu0
  %v428 = vadd.f32 %v100, %v427
  %v429 = vpop.f32.mrb[0].mxu0
  %430 = vmatprep.mubr.bf16.mxu0 %v192
  %431 = vmatmul.mubr.bf16.gmra.mrb[0].mxu0 %v191
  %v432 = vpop.f32.mrb[0].mxu0
  %v433 = vadd.f32 %v100, %v432
  %v434 = vpop.f32.mrb[0].mxu0
  %v435 = vpop.f32.mrb[0].mxu0
  %v436 = vadd.f32 %v100, %v435
  %v437 = vpop.f32.mrb[0].mxu0
  %438 = vmatprep.mubr.bf16.mxu0 %v195
  %439 = vmatmul.mubr.bf16.gmra.mrb[0].mxu0 %v194
  %v440 = vpop.f32.mrb[0].mxu0
  %v441 = vadd.f32 %v100, %v440
  %v442 = vpop.f32.mrb[0].mxu0
  %v443 = vpop.f32.mrb[0].mxu0
  %v444 = vadd.f32 %v100, %v443
  %v445 = vpop.f32.mrb[0].mxu0
  %446 = vmatprep.mubr.bf16.mxu0 %v198
  %447 = vmatmul.mubr.bf16.gmra.mrb[0].mxu0 %v197
  %v448 = vpop.f32.mrb[0].mxu0
  %v449 = vadd.f32 %v100, %v448
  %v450 = vpop.f32.mrb[0].mxu0
  %v451 = vpop.f32.mrb[0].mxu0
  %v452 = vadd.f32 %v100, %v451
  %v453 = vpop.f32.mrb[0].mxu0
  %454 = vmatprep.mubr.bf16.mxu0 %v201
  %455 = vmatmul.mubr.bf16.gmra.mrb[0].mxu0 %v200
  %v456 = vpop.f32.mrb[0].mxu0
  %v457 = vadd.f32 %v100, %v456
  %v458 = vpop.f32.mrb[0].mxu0
  %v459 = vpop.f32.mrb[0].mxu0
  %v460 = vadd.f32 %v100, %v459
  %v461 = vpop.f32.mrb[0].mxu0
  %462 = vmatprep.mubr.bf16.mxu0 %v204
  %463 = vmatmul.mubr.bf16.gmra.mrb[0].mxu0 %v203
  %v464 = vpop.f32.mrb[0].mxu0
  %v465 = vadd.f32 %v100, %v464
  %v466 = vpop.f32.mrb[0].mxu0
  %v467 = vpop.f32.mrb[0].mxu0
  %v468 = vadd.f32 %v100, %v467
  %v469 = vpop.f32.mrb[0].mxu0
  %470 = vdwg.mxu0
  %471 = vmatprep.subr.bf16.mxu0 0
  %472 = vmatpush1.bf16.msra.mxu0 %v342
  %473 = vmatprep.subr.bf16.mxu0 0
  %474 = vmatpush1.bf16.msra.mxu0 %v343
  %475 = vmatprep.subr.bf16.mxu0 0
  %476 = vmatpush1.bf16.msra.mxu0 %v344
  %477 = vmatprep.subr.bf16.mxu0 0
  %478 = vmatpush1.bf16.msra.mxu0 %v345
  %479 = vmatprep.subr.bf16.mxu0 0
  %480 = vmatpush1.bf16.msra.mxu0 %v346
  %481 = vmatprep.subr.bf16.mxu0 0
  %482 = vmatpush1.bf16.msra.mxu0 %v347
  %483 = vmatprep.subr.bf16.mxu0 0
  %484 = vmatpush1.bf16.msra.mxu0 %v348
  %485 = vmatprep.subr.bf16.mxu0 0
  %486 = vmatpush1.bf16.msra.mxu0 %v349
  %487 = vmatprep.subr.bf16.mxu0 0
  %488 = vmatpush1.bf16.msra.mxu0 0
  %489 = vmatprep.subr.bf16.mxu0 0
  %490 = vmatpush1.bf16.msra.mxu0 0
  %491 = vmatprep.subr.bf16.mxu0 0
  %492 = vmatpush1.bf16.msra.mxu0 0
  %493 = vmatprep.subr.bf16.mxu0 0
  %494 = vmatpush1.bf16.msra.mxu0 0
  %495 = vmatprep.subr.bf16.mxu0 0
  %496 = vmatpush1.bf16.msra.mxu0 0
  %497 = vmatprep.subr.bf16.mxu0 0
  %498 = vmatpush1.bf16.msra.mxu0 0
  %499 = vmatprep.subr.bf16.mxu0 0
  %500 = vmatpush1.bf16.msra.mxu0 0
  %501 = vmatprep.subr.bf16.mxu0 0
  %502 = vmatpush1.bf16.msra.mxu0 0
  %503 = vmatprep.mubr.bf16.mxu0 0
  %504 = vmatmul.mubr.bf16.gmra.mrb[0].mxu0 %v184
  %v505 = vpop.f32.mrb[0].mxu0
  %v506 = vadd.f32 %v409, %v505
  %v507 = vpop.f32.mrb[0].mxu0
  %v508 = vpop.f32.mrb[0].mxu0
  %v509 = vadd.f32 %v412, %v508
  %v510 = vpop.f32.mrb[0].mxu0
  %511 = vmatprep.mubr.bf16.mxu0 0
  %512 = vmatmul.mubr.bf16.gmra.mrb[0].mxu0 %v187
  %v513 = vpop.f32.mrb[0].mxu0
  %v514 = vadd.f32 %v417, %v513
  %v515 = vpop.f32.mrb[0].mxu0
  %v516 = vpop.f32.mrb[0].mxu0
  %v517 = vadd.f32 %v420, %v516
  %v518 = vpop.f32.mrb[0].mxu0
  %519 = vmatprep.mubr.bf16.mxu0 0
  %520 = vmatmul.mubr.bf16.gmra.mrb[0].mxu0 %v190
  %v521 = vpop.f32.mrb[0].mxu0
  %v522 = vadd.f32 %v425, %v521
  %v523 = vpop.f32.mrb[0].mxu0
  %v524 = vpop.f32.mrb[0].mxu0
  %v525 = vadd.f32 %v428, %v524
  %v526 = vpop.f32.mrb[0].mxu0
  %527 = vmatprep.mubr.bf16.mxu0 0
  %528 = vmatmul.mubr.bf16.gmra.mrb[0].mxu0 %v193
  %v529 = vpop.f32.mrb[0].mxu0
  %v530 = vadd.f32 %v433, %v529
  %v531 = vpop.f32.mrb[0].mxu0
  %v532 = vpop.f32.mrb[0].mxu0
  %v533 = vadd.f32 %v436, %v532
  %v534 = vpop.f32.mrb[0].mxu0
  %535 = vmatprep.mubr.bf16.mxu0 0
  %536 = vmatmul.mubr.bf16.gmra.mrb[0].mxu0 %v196
  %v537 = vpop.f32.mrb[0].mxu0
  %v538 = vadd.f32 %v441, %v537
  %v539 = vpop.f32.mrb[0].mxu0
  %v540 = vpop.f32.mrb[0].mxu0
  %v541 = vadd.f32 %v444, %v540
  %v542 = vpop.f32.mrb[0].mxu0
  %543 = vmatprep.mubr.bf16.mxu0 0
  %544 = vmatmul.mubr.bf16.gmra.mrb[0].mxu0 %v199
  %v545 = vpop.f32.mrb[0].mxu0
  %v546 = vadd.f32 %v449, %v545
  %v547 = vpop.f32.mrb[0].mxu0
  %v548 = vpop.f32.mrb[0].mxu0
  %v549 = vadd.f32 %v452, %v548
  %v550 = vpop.f32.mrb[0].mxu0
  %551 = vmatprep.mubr.bf16.mxu0 0
  %552 = vmatmul.mubr.bf16.gmra.mrb[0].mxu0 %v202
  %v553 = vpop.f32.mrb[0].mxu0
  %v554 = vadd.f32 %v457, %v553
  %v555 = vpop.f32.mrb[0].mxu0
  %v556 = vpop.f32.mrb[0].mxu0
  %v557 = vadd.f32 %v460, %v556
  %v558 = vpop.f32.mrb[0].mxu0
  %559 = vmatprep.mubr.bf16.mxu0 0
  %560 = vmatmul.mubr.bf16.gmra.mrb[0].mxu0 %v205
  %v561 = vpop.f32.mrb[0].mxu0
  %v562 = vadd.f32 %v465, %v561
  %v563 = vpop.f32.mrb[0].mxu0
  %v564 = vpop.f32.mrb[0].mxu0
  %v565 = vadd.f32 %v468, %v564
  %v566 = vpop.f32.mrb[0].mxu0
  %567 = vdwg.mxu0
  %v568 = vmax.f32 %v506, 0.0
  %v569 = vmax.f32 %v509, 0.0
  %v570 = vmax.f32 %v514, 0.0
  %v571 = vmax.f32 %v517, 0.0
  %v572 = vmax.f32 %v522, 0.0
  %v573 = vmax.f32 %v525, 0.0
  %v574 = vmax.f32 %v530, 0.0
  %v575 = vmax.f32 %v533, 0.0
  %v576 = vmax.f32 %v538, 0.0
  %v577 = vmax.f32 %v541, 0.0
  %v578 = vmax.f32 %v546, 0.0
  %v579 = vmax.f32 %v549, 0.0
  %v580 = vmax.f32 %v554, 0.0
  %v581 = vmax.f32 %v557, 0.0
  %v582 = vmax.f32 %v562, 0.0
  %v583 = vmax.f32 %v565, 0.0
  %v584 = vpack.c.bf16 %v569, %v568
  %v585 = vpack.c.bf16 %v571, %v570
  %v586 = vpack.c.bf16 %v573, %v572
  %v587 = vpack.c.bf16 %v575, %v574
  %v588 = vpack.c.bf16 %v577, %v576
  %v589 = vpack.c.bf16 %v579, %v578
  %v590 = vpack.c.bf16 %v581, %v580
  %v591 = vpack.c.bf16 %v583, %v582
  %v600 = vunpack.c.l.b16 %v584
  %v601 = vunpack.c.h.b16 %v584
  %v602 = vunpack.c.l.b16 %v585
  %v603 = vunpack.c.h.b16 %v585
  %v604 = vunpack.c.l.b16 %v586
  %v605 = vunpack.c.h.b16 %v586
  %v606 = vunpack.c.l.b16 %v587
  %v607 = vunpack.c.h.b16 %v587
  %v608 = vunpack.c.l.b16 %v588
  %v609 = vunpack.c.h.b16 %v588
  %v610 = vunpack.c.l.b16 %v589
  %v611 = vunpack.c.h.b16 %v589
  %v612 = vunpack.c.l.b16 %v590
  %v613 = vunpack.c.h.b16 %v590
  %v614 = vunpack.c.l.b16 %v591
  %v615 = vunpack.c.h.b16 %v591
  %v616 = vpack.c.b16 %v600, %v600
  %v617 = vpack.c.b16 %v601, %v601
  %v618 = vpack.c.b16 %v602, %v602
  %v619 = vpack.c.b16 %v603, %v603
  %v620 = vpack.c.b16 %v604, %v604
  %v621 = vpack.c.b16 %v605, %v605
  %v622 = vpack.c.b16 %v606, %v606
  %v623 = vpack.c.b16 %v607, %v607
  %v624 = vpack.c.b16 %v608, %v608
  %v625 = vpack.c.b16 %v609, %v609
  %v626 = vpack.c.b16 %v610, %v610
  %v627 = vpack.c.b16 %v611, %v611
  %v628 = vpack.c.b16 %v612, %v612
  %v629 = vpack.c.b16 %v613, %v613
  %v630 = vpack.c.b16 %v614, %v614
  %v631 = vpack.c.b16 %v615, %v615
  %648 = vst [vmem:[%s3] sm:$0xf] %v616
  %649 = vst [vmem:[%s3 + $0x4] sm:$0xf] %v617
  %650 = vst [vmem:[%s3 + $0x8] sm:$0xf] %v618
  %651 = vst [vmem:[%s3 + $0xc] sm:$0xf] %v619
  %652 = vst [vmem:[%s3 + $0x10] sm:$0xf] %v620
  %653 = vst [vmem:[%s3 + $0x14] sm:$0xf] %v621
  %654 = vst [vmem:[%s3 + $0x18] sm:$0xf] %v622
  %655 = vst [vmem:[%s3 + $0x1c] sm:$0xf] %v623
  %656 = vst [vmem:[%s3 + $0x20] sm:$0xf] %v624
  %657 = vst [vmem:[%s3 + $0x24] sm:$0xf] %v625
  %658 = vst [vmem:[%s3 + $0x28] sm:$0xf] %v626
  %659 = vst [vmem:[%s3 + $0x2c] sm:$0xf] %v627
  %660 = vst [vmem:[%s3 + $0x30] sm:$0xf] %v628
  %661 = vst [vmem:[%s3 + $0x34] sm:$0xf] %v629
  %662 = vst [vmem:[%s3 + $0x38] sm:$0xf] %v630
  %663 = vst [vmem:[%s3 + $0x3c] sm:$0xf] %v631
  // Predicated region
  $region14: #{resnetx_feature_extractor_forward.8} parent=0 // pred_check
    _
  $region15: #{resnetx_feature_extractor_forward.8} parent=0 // pred_check_branch
    %665 = sbr.rel (0) target = $region17
  $region16: #{resnetx_feature_extractor_forward.8} parent=0 // pred_region
    _
  $region17: #{resnetx_feature_extractor_forward.8} parent=0 // pred_fallthru
    _
  // Predicated region
  $region18: #{resnetx_feature_extractor_forward.8} parent=0 // pred_check
    _
  $region19: #{resnetx_feature_extractor_forward.8} parent=0 // pred_check_branch
    %667 = sbr.rel (0) target = $region21
  $region20: #{resnetx_feature_extractor_forward.8} parent=0 // pred_region
    _
  $region21: #{resnetx_feature_extractor_forward.8} parent=0 // pred_fallthru
    _

// kernel: resnetx_feature_extractor_forward.9
$region0: #{resnetx_feature_extractor_forward.9}
  #allocation0 [shape = 'u32[]', space=smem, size = 0x4, offset = 0x4, fixed_abs, tag = 'smem constant byte address 0x4 - core index']
  #allocation1 [shape = 'u32[144,128]{1,0:T(1,128)}', space=vmem, size = 0x12000, scoped, tag = 'internal scratch']
  #allocation2 [shape = 'f32[8,128]{1,0:T(8,128)}', space=vmem, size = 0x1000, scoped, tag = 'scratch operand']
  %s0 = inlined_call_operand.vmem [shape: bf16[8,64,128], index: 0, kind: input, shape index: {}]
  %s1 = inlined_call_operand.vmem [shape: bf16[128,256], index: 1, kind: input, shape index: {}]
  %s2 = inlined_call_operand.vmem [shape: f32[1,256], index: 2, kind: input, shape index: {}]
  %s3 = inlined_call_operand.vmem [shape: bf16[256,128], index: 3, kind: input, shape index: {}]
  %s4 = inlined_call_operand.vmem [shape: f32[1,128], index: 4, kind: input, shape index: {}]
  %s5 = inlined_call_operand.vmem [shape: f32[8,128], index: 5, kind: output, shape index: {}]
  %s6 = sld [smem:[#allocation0]]
  $region38: #{resnetx_feature_extractor_forward.9} parent=0
    _
  %s8 = ssub.s32 1, %s6
  %s9 = scalar_select 0, %s8, %s6
  // Predicated region
  $region2: #{resnetx_feature_extractor_forward.9} parent=0 // pred_check
    _
  $region3: #{resnetx_feature_extractor_forward.9} parent=0 // pred_check_branch
    %11 = sbr.rel (0) target = $region5
  $region4: #{resnetx_feature_extractor_forward.9} parent=0 // pred_region
    _
  $region5: #{resnetx_feature_extractor_forward.9} parent=0 // pred_fallthru
    _
  // Predicated region
  $region6: #{resnetx_feature_extractor_forward.9} parent=0 // pred_check
    _
  $region7: #{resnetx_feature_extractor_forward.9} parent=0 // pred_check_branch
    %13 = sbr.rel (0) target = $region9
  $region8: #{resnetx_feature_extractor_forward.9} parent=0 // pred_region
    _
  $region9: #{resnetx_feature_extractor_forward.9} parent=0 // pred_fallthru
    _
  // Predicated region
  $region10: #{resnetx_feature_extractor_forward.9} parent=0 // pred_check
    _
  $region11: #{resnetx_feature_extractor_forward.9} parent=0 // pred_check_branch
    %15 = sbr.rel (0) target = $region13
  $region12: #{resnetx_feature_extractor_forward.9} parent=0 // pred_region
    _
  $region13: #{resnetx_feature_extractor_forward.9} parent=0 // pred_fallthru
    _
  // Predicated region
  $region14: #{resnetx_feature_extractor_forward.9} parent=0 // pred_check
    _
  $region15: #{resnetx_feature_extractor_forward.9} parent=0 // pred_check_branch
    %17 = sbr.rel (0) target = $region17
  $region16: #{resnetx_feature_extractor_forward.9} parent=0 // pred_region
    _
  $region17: #{resnetx_feature_extractor_forward.9} parent=0 // pred_fallthru
    _
  // Predicated region
  $region18: #{resnetx_feature_extractor_forward.9} parent=0 // pred_check
    _
  $region19: #{resnetx_feature_extractor_forward.9} parent=0 // pred_check_branch
    %19 = sbr.rel (0) target = $region21
  $region20: #{resnetx_feature_extractor_forward.9} parent=0 // pred_region
    _
  $region21: #{resnetx_feature_extractor_forward.9} parent=0 // pred_fallthru
    _
  %p21 = scmp.eq.s32.totalorder 0, 0
  // Predicated region
  $region22: #{resnetx_feature_extractor_forward.9} parent=0 // pred_check
    %p22 = pneg %p21
  $region23: #{resnetx_feature_extractor_forward.9} parent=0 // pred_check_branch
    %24 = sbr.rel (%p22) target = $region25
  $region24: #{resnetx_feature_extractor_forward.9} parent=0 // pred_region
    %25 = vst [vmem:[#allocation2] sm:$0xff] 0.0
  $region25: #{resnetx_feature_extractor_forward.9} parent=0 // pred_fallthru
    _
  %v26 = vld [vmem:[#allocation2] sm:$0xff]
  %v27 = vld [vmem:[%s0] sm:$0xf]
  %v28 = vld [vmem:[%s0 + $0x4] sm:$0xf]
  %v29 = vld [vmem:[%s0 + $0x8] sm:$0xf]
  %v30 = vld [vmem:[%s0 + $0xc] sm:$0xf]
  %v31 = vld [vmem:[%s0 + $0x10] sm:$0xf]
  %v32 = vld [vmem:[%s0 + $0x14] sm:$0xf]
  %v33 = vld [vmem:[%s0 + $0x18] sm:$0xf]
  %v34 = vld [vmem:[%s0 + $0x1c] sm:$0xf]
  %v35 = vld [vmem:[%s0 + $0x20] sm:$0xf]
  %v36 = vld [vmem:[%s0 + $0x24] sm:$0xf]
  %v37 = vld [vmem:[%s0 + $0x28] sm:$0xf]
  %v38 = vld [vmem:[%s0 + $0x2c] sm:$0xf]
  %v39 = vld [vmem:[%s0 + $0x30] sm:$0xf]
  %v40 = vld [vmem:[%s0 + $0x34] sm:$0xf]
  %v41 = vld [vmem:[%s0 + $0x38] sm:$0xf]
  %v42 = vld [vmem:[%s0 + $0x3c] sm:$0xf]
  %v43 = vld [vmem:[%s0 + $0x40] sm:$0xf]
  %v44 = vld [vmem:[%s0 + $0x44] sm:$0xf]
  %v45 = vld [vmem:[%s0 + $0x48] sm:$0xf]
  %v46 = vld [vmem:[%s0 + $0x4c] sm:$0xf]
  %v47 = vld [vmem:[%s0 + $0x50] sm:$0xf]
  %v48 = vld [vmem:[%s0 + $0x54] sm:$0xf]
  %v49 = vld [vmem:[%s0 + $0x58] sm:$0xf]
  %v50 = vld [vmem:[%s0 + $0x5c] sm:$0xf]
  %v51 = vld [vmem:[%s0 + $0x60] sm:$0xf]
  %v52 = vld [vmem:[%s0 + $0x64] sm:$0xf]
  %v53 = vld [vmem:[%s0 + $0x68] sm:$0xf]
  %v54 = vld [vmem:[%s0 + $0x6c] sm:$0xf]
  %v55 = vld [vmem:[%s0 + $0x70] sm:$0xf]
  %v56 = vld [vmem:[%s0 + $0x74] sm:$0xf]
  %v57 = vld [vmem:[%s0 + $0x78] sm:$0xf]
  %v58 = vld [vmem:[%s0 + $0x7c] sm:$0xf]
  %v59 = vld [vmem:[%s0 + $0x80] sm:$0xf]
  %v60 = vld [vmem:[%s0 + $0x84] sm:$0xf]
  %v61 = vld [vmem:[%s0 + $0x88] sm:$0xf]
  %v62 = vld [vmem:[%s0 + $0x8c] sm:$0xf]
  %v63 = vld [vmem:[%s0 + $0x90] sm:$0xf]
  %v64 = vld [vmem:[%s0 + $0x94] sm:$0xf]
  %v65 = vld [vmem:[%s0 + $0x98] sm:$0xf]
  %v66 = vld [vmem:[%s0 + $0x9c] sm:$0xf]
  %v67 = vld [vmem:[%s0 + $0xa0] sm:$0xf]
  %v68 = vld [vmem:[%s0 + $0xa4] sm:$0xf]
  %v69 = vld [vmem:[%s0 + $0xa8] sm:$0xf]
  %v70 = vld [vmem:[%s0 + $0xac] sm:$0xf]
  %v71 = vld [vmem:[%s0 + $0xb0] sm:$0xf]
  %v72 = vld [vmem:[%s0 + $0xb4] sm:$0xf]
  %v73 = vld [vmem:[%s0 + $0xb8] sm:$0xf]
  %v74 = vld [vmem:[%s0 + $0xbc] sm:$0xf]
  %v75 = vld [vmem:[%s0 + $0xc0] sm:$0xf]
  %v76 = vld [vmem:[%s0 + $0xc4] sm:$0xf]
  %v77 = vld [vmem:[%s0 + $0xc8] sm:$0xf]
  %v78 = vld [vmem:[%s0 + $0xcc] sm:$0xf]
  %v79 = vld [vmem:[%s0 + $0xd0] sm:$0xf]
  %v80 = vld [vmem:[%s0 + $0xd4] sm:$0xf]
  %v81 = vld [vmem:[%s0 + $0xd8] sm:$0xf]
  %v82 = vld [vmem:[%s0 + $0xdc] sm:$0xf]
  %v83 = vld [vmem:[%s0 + $0xe0] sm:$0xf]
  %v84 = vld [vmem:[%s0 + $0xe4] sm:$0xf]
  %v85 = vld [vmem:[%s0 + $0xe8] sm:$0xf]
  %v86 = vld [vmem:[%s0 + $0xec] sm:$0xf]
  %v87 = vld [vmem:[%s0 + $0xf0] sm:$0xf]
  %v88 = vld [vmem:[%s0 + $0xf4] sm:$0xf]
  %v89 = vld [vmem:[%s0 + $0xf8] sm:$0xf]
  %v90 = vld [vmem:[%s0 + $0xfc] sm:$0xf]
  %v91 = vunpack.c.l.bf16 %v27
  %v92 = vunpack.c.l.bf16 %v28
  %v93 = vunpack.c.l.bf16 %v29
  %v94 = vunpack.c.l.bf16 %v30
  %v95 = vunpack.c.l.bf16 %v31
  %v96 = vunpack.c.l.bf16 %v32
  %v97 = vunpack.c.l.bf16 %v33
  %v98 = vunpack.c.l.bf16 %v34
  %v99 = vunpack.c.l.bf16 %v35
  %v100 = vunpack.c.l.bf16 %v36
  %v101 = vunpack.c.l.bf16 %v37
  %v102 = vunpack.c.l.bf16 %v38
  %v103 = vunpack.c.l.bf16 %v39
  %v104 = vunpack.c.l.bf16 %v40
  %v105 = vunpack.c.l.bf16 %v41
  %v106 = vunpack.c.l.bf16 %v42
  %v107 = vunpack.c.l.bf16 %v43
  %v108 = vunpack.c.l.bf16 %v44
  %v109 = vunpack.c.l.bf16 %v45
  %v110 = vunpack.c.l.bf16 %v46
  %v111 = vunpack.c.l.bf16 %v47
  %v112 = vunpack.c.l.bf16 %v48
  %v113 = vunpack.c.l.bf16 %v49
  %v114 = vunpack.c.l.bf16 %v50
  %v115 = vunpack.c.l.bf16 %v51
  %v116 = vunpack.c.l.bf16 %v52
  %v117 = vunpack.c.l.bf16 %v53
  %v118 = vunpack.c.l.bf16 %v54
  %v119 = vunpack.c.l.bf16 %v55
  %v120 = vunpack.c.l.bf16 %v56
  %v121 = vunpack.c.l.bf16 %v57
  %v122 = vunpack.c.l.bf16 %v58
  %v123 = vunpack.c.l.bf16 %v59
  %v124 = vunpack.c.l.bf16 %v60
  %v125 = vunpack.c.l.bf16 %v61
  %v126 = vunpack.c.l.bf16 %v62
  %v127 = vunpack.c.l.bf16 %v63
  %v128 = vunpack.c.l.bf16 %v64
  %v129 = vunpack.c.l.bf16 %v65
  %v130 = vunpack.c.l.bf16 %v66
  %v131 = vunpack.c.l.bf16 %v67
  %v132 = vunpack.c.l.bf16 %v68
  %v133 = vunpack.c.l.bf16 %v69
  %v134 = vunpack.c.l.bf16 %v70
  %v135 = vunpack.c.l.bf16 %v71
  %v136 = vunpack.c.l.bf16 %v72
  %v137 = vunpack.c.l.bf16 %v73
  %v138 = vunpack.c.l.bf16 %v74
  %v139 = vunpack.c.l.bf16 %v75
  %v140 = vunpack.c.l.bf16 %v76
  %v141 = vunpack.c.l.bf16 %v77
  %v142 = vunpack.c.l.bf16 %v78
  %v143 = vunpack.c.l.bf16 %v79
  %v144 = vunpack.c.l.bf16 %v80
  %v145 = vunpack.c.l.bf16 %v81
  %v146 = vunpack.c.l.bf16 %v82
  %v147 = vunpack.c.l.bf16 %v83
  %v148 = vunpack.c.l.bf16 %v84
  %v149 = vunpack.c.l.bf16 %v85
  %v150 = vunpack.c.l.bf16 %v86
  %v151 = vunpack.c.l.bf16 %v87
  %v152 = vunpack.c.l.bf16 %v88
  %v153 = vunpack.c.l.bf16 %v89
  %v154 = vunpack.c.l.bf16 %v90
  %v155 = vadd.f32 %v91, %v92
  %v156 = vadd.f32 %v155, %v93
  %v157 = vadd.f32 %v156, %v94
  %v158 = vadd.f32 %v157, %v95
  %v159 = vadd.f32 %v158, %v96
  %v160 = vadd.f32 %v159, %v97
  %v161 = vadd.f32 %v160, %v98
  %v162 = vrot.slane %v161, 4
  %v163 = vadd.f32 %v161, %v162
  %v164 = vrot.slane %v163, 2
  %v165 = vadd.f32 %v163, %v164
  %v166 = vrot.slane %v165, 1
  %v167 = vadd.f32 %v165, %v166
  %v168 = vadd.f32 %v99, %v100
  %v169 = vadd.f32 %v168, %v101
  %v170 = vadd.f32 %v169, %v102
  %v171 = vadd.f32 %v170, %v103
  %v172 = vadd.f32 %v171, %v104
  %v173 = vadd.f32 %v172, %v105
  %v174 = vadd.f32 %v173, %v106
  %v175 = vrot.slane %v174, 4
  %v176 = vadd.f32 %v174, %v175
  %v177 = vrot.slane %v176, 2
  %v178 = vadd.f32 %v176, %v177
  %v179 = vrot.slane %v178, 1
  %v180 = vadd.f32 %v178, %v179
  %v181 = vadd.f32 %v107, %v108
  %v182 = vadd.f32 %v181, %v109
  %v183 = vadd.f32 %v182, %v110
  %v184 = vadd.f32 %v183, %v111
  %v185 = vadd.f32 %v184, %v112
  %v186 = vadd.f32 %v185, %v113
  %v187 = vadd.f32 %v186, %v114
  %v188 = vrot.slane %v187, 4
  %v189 = vadd.f32 %v187, %v188
  %v190 = vrot.slane %v189, 2
  %v191 = vadd.f32 %v189, %v190
  %v192 = vrot.slane %v191, 1
  %v193 = vadd.f32 %v191, %v192
  %v194 = vadd.f32 %v115, %v116
  %v195 = vadd.f32 %v194, %v117
  %v196 = vadd.f32 %v195, %v118
  %v197 = vadd.f32 %v196, %v119
  %v198 = vadd.f32 %v197, %v120
  %v199 = vadd.f32 %v198, %v121
  %v200 = vadd.f32 %v199, %v122
  %v201 = vrot.slane %v200, 4
  %v202 = vadd.f32 %v200, %v201
  %v203 = vrot.slane %v202, 2
  %v204 = vadd.f32 %v202, %v203
  %v205 = vrot.slane %v204, 1
  %v206 = vadd.f32 %v204, %v205
  %v207 = vadd.f32 %v123, %v124
  %v208 = vadd.f32 %v207, %v125
  %v209 = vadd.f32 %v208, %v126
  %v210 = vadd.f32 %v209, %v127
  %v211 = vadd.f32 %v210, %v128
  %v212 = vadd.f32 %v211, %v129
  %v213 = vadd.f32 %v212, %v130
  %v214 = vrot.slane %v213, 4
  %v215 = vadd.f32 %v213, %v214
  %v216 = vrot.slane %v215, 2
  %v217 = vadd.f32 %v215, %v216
  %v218 = vrot.slane %v217, 1
  %v219 = vadd.f32 %v217, %v218
  %v220 = vadd.f32 %v131, %v132
  %v221 = vadd.f32 %v220, %v133
  %v222 = vadd.f32 %v221, %v134
  %v223 = vadd.f32 %v222, %v135
  %v224 = vadd.f32 %v223, %v136
  %v225 = vadd.f32 %v224, %v137
  %v226 = vadd.f32 %v225, %v138
  %v227 = vrot.slane %v226, 4
  %v228 = vadd.f32 %v226, %v227
  %v229 = vrot.slane %v228, 2
  %v230 = vadd.f32 %v228, %v229
  %v231 = vrot.slane %v230, 1
  %v232 = vadd.f32 %v230, %v231
  %v233 = vadd.f32 %v139, %v140
  %v234 = vadd.f32 %v233, %v141
  %v235 = vadd.f32 %v234, %v142
  %v236 = vadd.f32 %v235, %v143
  %v237 = vadd.f32 %v236, %v144
  %v238 = vadd.f32 %v237, %v145
  %v239 = vadd.f32 %v238, %v146
  %v240 = vrot.slane %v239, 4
  %v241 = vadd.f32 %v239, %v240
  %v242 = vrot.slane %v241, 2
  %v243 = vadd.f32 %v241, %v242
  %v244 = vrot.slane %v243, 1
  %v245 = vadd.f32 %v243, %v244
  %v246 = vadd.f32 %v147, %v148
  %v247 = vadd.f32 %v246, %v149
  %v248 = vadd.f32 %v247, %v150
  %v249 = vadd.f32 %v248, %v151
  %v250 = vadd.f32 %v249, %v152
  %v251 = vadd.f32 %v250, %v153
  %v252 = vadd.f32 %v251, %v154
  %v253 = vrot.slane %v252, 4
  %v254 = vadd.f32 %v252, %v253
  %v255 = vrot.slane %v254, 2
  %v256 = vadd.f32 %v254, %v255
  %v257 = vrot.slane %v256, 1
  %v258 = vadd.f32 %v256, %v257
  %vm267 = vcmask 1041409
  %v268 = vsel %vm267, %v180, %v167
  %vm269 = vcmask 1042434
  %v270 = vsel %vm269, %v193, %v268
  %vm271 = vcmask 1043459
  %v272 = vsel %vm271, %v206, %v270
  %vm273 = vcmask 1044484
  %v274 = vsel %vm273, %v219, %v272
  %vm275 = vcmask 1045509
  %v276 = vsel %vm275, %v232, %v274
  %vm277 = vcmask 1046534
  %v278 = vsel %vm277, %v245, %v276
  %vm279 = vcmask 1047559
  %v280 = vsel %vm279, %v258, %v278
  %v282 = vadd.f32 %v26, %v280
  %283 = vst [vmem:[#allocation2] sm:$0xff] %v282
  // Predicated region
  $region26: #{resnetx_feature_extractor_forward.9} parent=0 // pred_check
    %p284 = pneg %p21
  $region27: #{resnetx_feature_extractor_forward.9} parent=0 // pred_check_branch
    %286 = sbr.rel (%p284) target = $region29
  $region28: #{resnetx_feature_extractor_forward.9} parent=0 // pred_region
    %v287 = vld [vmem:[#allocation2] sm:$0xff]
    %v288 = vmul.f32 %v287, 0.015625
    %v289 = vpack.c.bf16 %v288, %v288
    %v290 = vld [vmem:[%s1] sm:$0xff]
    %v291 = vld [vmem:[%s1 + $0x8] sm:$0xff]
    %v292 = vld [vmem:[%s1 + $0x10] sm:$0xff]
    %v293 = vld [vmem:[%s1 + $0x18] sm:$0xff]
    %v294 = vld [vmem:[%s1 + $0x20] sm:$0xff]
    %v295 = vld [vmem:[%s1 + $0x28] sm:$0xff]
    %v296 = vld [vmem:[%s1 + $0x30] sm:$0xff]
    %v297 = vld [vmem:[%s1 + $0x38] sm:$0xff]
    %v298 = vld [vmem:[%s1 + $0x40] sm:$0xff]
    %v299 = vld [vmem:[%s1 + $0x48] sm:$0xff]
    %v300 = vld [vmem:[%s1 + $0x50] sm:$0xff]
    %v301 = vld [vmem:[%s1 + $0x58] sm:$0xff]
    %v302 = vld [vmem:[%s1 + $0x60] sm:$0xff]
    %v303 = vld [vmem:[%s1 + $0x68] sm:$0xff]
    %v304 = vld [vmem:[%s1 + $0x70] sm:$0xff]
    %v305 = vld [vmem:[%s1 + $0x78] sm:$0xff]
    %v306 = vld [vmem:[%s2] sm:$0x3]
    %v308 = vlaneseq
    %v309 = vshrl.u32 %v308, 7
    %v310 = vsub.s32 0, %v309
    %v311 = vrot.slane %v306, %v310
    %v312 = vlaneseq
    %v313 = vshrl.u32 %v312, 7
    %v314 = vsub.s32 1, %v313
    %v315 = vrot.slane %v306, %v314
    %v334 = vunpack.c.l.b16 %v290
    %v335 = vunpack.c.h.b16 %v290
    %v336 = vunpack.c.l.b16 %v291
    %v337 = vunpack.c.h.b16 %v291
    %v338 = vunpack.c.l.b16 %v292
    %v339 = vunpack.c.h.b16 %v292
    %v340 = vunpack.c.l.b16 %v293
    %v341 = vunpack.c.h.b16 %v293
    %v342 = vunpack.c.l.b16 %v294
    %v343 = vunpack.c.h.b16 %v294
    %v344 = vunpack.c.l.b16 %v295
    %v345 = vunpack.c.h.b16 %v295
    %v346 = vunpack.c.l.b16 %v296
    %v347 = vunpack.c.h.b16 %v296
    %v348 = vunpack.c.l.b16 %v297
    %v349 = vunpack.c.h.b16 %v297
    %v350 = vunpack.c.l.b16 %v298
    %v351 = vunpack.c.h.b16 %v298
    %v352 = vunpack.c.l.b16 %v299
    %v353 = vunpack.c.h.b16 %v299
    %v354 = vunpack.c.l.b16 %v300
    %v355 = vunpack.c.h.b16 %v300
    %v356 = vunpack.c.l.b16 %v301
    %v357 = vunpack.c.h.b16 %v301
    %v358 = vunpack.c.l.b16 %v302
    %v359 = vunpack.c.h.b16 %v302
    %v360 = vunpack.c.l.b16 %v303
    %v361 = vunpack.c.h.b16 %v303
    %v362 = vunpack.c.l.b16 %v304
    %v363 = vunpack.c.h.b16 %v304
    %v364 = vunpack.c.l.b16 %v305
    %v365 = vunpack.c.h.b16 %v305
    %v366 = vpack.c.b16 %v336, %v334
    %v367 = vpack.c.b16 %v337, %v335
    %v368 = vpack.c.b16 %v340, %v338
    %v369 = vpack.c.b16 %v341, %v339
    %v370 = vpack.c.b16 %v344, %v342
    %v371 = vpack.c.b16 %v345, %v343
    %v372 = vpack.c.b16 %v348, %v346
    %v373 = vpack.c.b16 %v349, %v347
    %v374 = vpack.c.b16 %v352, %v350
    %v375 = vpack.c.b16 %v353, %v351
    %v376 = vpack.c.b16 %v356, %v354
    %v377 = vpack.c.b16 %v357, %v355
    %v378 = vpack.c.b16 %v360, %v358
    %v379 = vpack.c.b16 %v361, %v359
    %v380 = vpack.c.b16 %v364, %v362
    %v381 = vpack.c.b16 %v365, %v363
    %398 = vmatprep.subr.bf16.mxu0 %v367
    %399 = vmatpush1.bf16.msra.mxu0 %v366
    %400 = vmatprep.subr.bf16.mxu0 %v369
    %401 = vmatpush1.bf16.msra.mxu0 %v368
    %402 = vmatprep.subr.bf16.mxu0 %v371
    %403 = vmatpush1.bf16.msra.mxu0 %v370
    %404 = vmatprep.subr.bf16.mxu0 %v373
    %405 = vmatpush1.bf16.msra.mxu0 %v372
    %406 = vmatprep.subr.bf16.mxu0 %v375
    %407 = vmatpush1.bf16.msra.mxu0 %v374
    %408 = vmatprep.subr.bf16.mxu0 %v377
    %409 = vmatpush1.bf16.msra.mxu0 %v376
    %410 = vmatprep.subr.bf16.mxu0 %v379
    %411 = vmatpush1.bf16.msra.mxu0 %v378
    %412 = vmatprep.subr.bf16.mxu0 %v381
    %413 = vmatpush1.bf16.msra.mxu0 %v380
    %414 = vmatprep.subr.bf16.mxu0 0
    %415 = vmatpush1.bf16.msra.mxu0 0
    %416 = vmatprep.subr.bf16.mxu0 0
    %417 = vmatpush1.bf16.msra.mxu0 0
    %418 = vmatprep.subr.bf16.mxu0 0
    %419 = vmatpush1.bf16.msra.mxu0 0
    %420 = vmatprep.subr.bf16.mxu0 0
    %421 = vmatpush1.bf16.msra.mxu0 0
    %422 = vmatprep.subr.bf16.mxu0 0
    %423 = vmatpush1.bf16.msra.mxu0 0
    %424 = vmatprep.subr.bf16.mxu0 0
    %425 = vmatpush1.bf16.msra.mxu0 0
    %426 = vmatprep.subr.bf16.mxu0 0
    %427 = vmatpush1.bf16.msra.mxu0 0
    %428 = vmatprep.subr.bf16.mxu0 0
    %429 = vmatpush1.bf16.msra.mxu0 0
    %430 = vmatprep.mubr.bf16.mxu0 0
    %431 = vmatmul.mubr.bf16.gmra.mrb[0].mxu0 %v289
    %v432 = vpop.f32.mrb[0].mxu0
    %v433 = vadd.f32 %v311, %v432
    %v434 = vpop.f32.mrb[0].mxu0
    %v435 = vadd.f32 %v315, %v434
    %v436 = vpop.f32.mrb[0].mxu0
    %v437 = vpop.f32.mrb[0].mxu0
    %438 = vdwg.mxu0
    %v439 = vmax.f32 %v433, 0.0
    %v440 = vmax.f32 %v435, 0.0
    %v441 = vpack.c.bf16 %v439, %v439
    %v442 = vpack.c.bf16 %v440, %v440
    %v443 = vld [vmem:[%s3] sm:$0xf]
    %v444 = vld [vmem:[%s3 + $0x4] sm:$0xf]
    %v445 = vld [vmem:[%s3 + $0x8] sm:$0xf]
    %v446 = vld [vmem:[%s3 + $0xc] sm:$0xf]
    %v447 = vld [vmem:[%s3 + $0x10] sm:$0xf]
    %v448 = vld [vmem:[%s3 + $0x14] sm:$0xf]
    %v449 = vld [vmem:[%s3 + $0x18] sm:$0xf]
    %v450 = vld [vmem:[%s3 + $0x1c] sm:$0xf]
    %v451 = vld [vmem:[%s3 + $0x20] sm:$0xf]
    %v452 = vld [vmem:[%s3 + $0x24] sm:$0xf]
    %v453 = vld [vmem:[%s3 + $0x28] sm:$0xf]
    %v454 = vld [vmem:[%s3 + $0x2c] sm:$0xf]
    %v455 = vld [vmem:[%s3 + $0x30] sm:$0xf]
    %v456 = vld [vmem:[%s3 + $0x34] sm:$0xf]
    %v457 = vld [vmem:[%s3 + $0x38] sm:$0xf]
    %v458 = vld [vmem:[%s3 + $0x3c] sm:$0xf]
    %v459 = vld [vmem:[%s3 + $0x40] sm:$0xf]
    %v460 = vld [vmem:[%s3 + $0x44] sm:$0xf]
    %v461 = vld [vmem:[%s3 + $0x48] sm:$0xf]
    %v462 = vld [vmem:[%s3 + $0x4c] sm:$0xf]
    %v463 = vld [vmem:[%s3 + $0x50] sm:$0xf]
    %v464 = vld [vmem:[%s3 + $0x54] sm:$0xf]
    %v465 = vld [vmem:[%s3 + $0x58] sm:$0xf]
    %v466 = vld [vmem:[%s3 + $0x5c] sm:$0xf]
    %v467 = vld [vmem:[%s3 + $0x60] sm:$0xf]
    %v468 = vld [vmem:[%s3 + $0x64] sm:$0xf]
    %v469 = vld [vmem:[%s3 + $0x68] sm:$0xf]
    %v470 = vld [vmem:[%s3 + $0x6c] sm:$0xf]
    %v471 = vld [vmem:[%s3 + $0x70] sm:$0xf]
    %v472 = vld [vmem:[%s3 + $0x74] sm:$0xf]
    %v473 = vld [vmem:[%s3 + $0x78] sm:$0xf]
    %v474 = vld [vmem:[%s3 + $0x7c] sm:$0xf]
    %v475 = vld [vmem:[%s4] sm:$0x1]
    %v477 = vlaneseq
    %v478 = vshrl.u32 %v477, 7
    %v479 = vsub.s32 0, %v478
    %v480 = vrot.slane %v475, %v479
    %v514 = vunpack.c.l.b16 %v443
    %v515 = vunpack.c.l.b16 %v444
    %v516 = vunpack.c.l.b16 %v445
    %v517 = vunpack.c.l.b16 %v446
    %v518 = vunpack.c.l.b16 %v447
    %v519 = vunpack.c.l.b16 %v448
    %v520 = vunpack.c.l.b16 %v449
    %v521 = vunpack.c.l.b16 %v450
    %v522 = vunpack.c.l.b16 %v451
    %v523 = vunpack.c.l.b16 %v452
    %v524 = vunpack.c.l.b16 %v453
    %v525 = vunpack.c.l.b16 %v454
    %v526 = vunpack.c.l.b16 %v455
    %v527 = vunpack.c.l.b16 %v456
    %v528 = vunpack.c.l.b16 %v457
    %v529 = vunpack.c.l.b16 %v458
    %v530 = vunpack.c.l.b16 %v459
    %v531 = vunpack.c.l.b16 %v460
    %v532 = vunpack.c.l.b16 %v461
    %v533 = vunpack.c.l.b16 %v462
    %v534 = vunpack.c.l.b16 %v463
    %v535 = vunpack.c.l.b16 %v464
    %v536 = vunpack.c.l.b16 %v465
    %v537 = vunpack.c.l.b16 %v466
    %v538 = vunpack.c.l.b16 %v467
    %v539 = vunpack.c.l.b16 %v468
    %v540 = vunpack.c.l.b16 %v469
    %v541 = vunpack.c.l.b16 %v470
    %v542 = vunpack.c.l.b16 %v471
    %v543 = vunpack.c.l.b16 %v472
    %v544 = vunpack.c.l.b16 %v473
    %v545 = vunpack.c.l.b16 %v474
    %v546 = vpack.c.b16 %v515, %v514
    %v547 = vpack.c.b16 %v517, %v516
    %v548 = vpack.c.b16 %v519, %v518
    %v549 = vpack.c.b16 %v521, %v520
    %v550 = vpack.c.b16 %v523, %v522
    %v551 = vpack.c.b16 %v525, %v524
    %v552 = vpack.c.b16 %v527, %v526
    %v553 = vpack.c.b16 %v529, %v528
    %v554 = vpack.c.b16 %v531, %v530
    %v555 = vpack.c.b16 %v533, %v532
    %v556 = vpack.c.b16 %v535, %v534
    %v557 = vpack.c.b16 %v537, %v536
    %v558 = vpack.c.b16 %v539, %v538
    %v559 = vpack.c.b16 %v541, %v540
    %v560 = vpack.c.b16 %v543, %v542
    %v561 = vpack.c.b16 %v545, %v544
    %578 = vmatprep.subr.bf16.mxu0 0
    %579 = vmatpush1.bf16.msra.mxu0 %v546
    %580 = vmatprep.subr.bf16.mxu0 0
    %581 = vmatpush1.bf16.msra.mxu0 %v547
    %582 = vmatprep.subr.bf16.mxu0 0
    %583 = vmatpush1.bf16.msra.mxu0 %v548
    %584 = vmatprep.subr.bf16.mxu0 0
    %585 = vmatpush1.bf16.msra.mxu0 %v549
    %586 = vmatprep.subr.bf16.mxu0 0
    %587 = vmatpush1.bf16.msra.mxu0 %v550
    %588 = vmatprep.subr.bf16.mxu0 0
    %589 = vmatpush1.bf16.msra.mxu0 %v551
    %590 = vmatprep.subr.bf16.mxu0 0
    %591 = vmatpush1.bf16.msra.mxu0 %v552
    %592 = vmatprep.subr.bf16.mxu0 0
    %593 = vmatpush1.bf16.msra.mxu0 %v553
    %594 = vmatprep.subr.bf16.mxu0 0
    %595 = vmatpush1.bf16.msra.mxu0 %v554
    %596 = vmatprep.subr.bf16.mxu0 0
    %597 = vmatpush1.bf16.msra.mxu0 %v555
    %598 = vmatprep.subr.bf16.mxu0 0
    %599 = vmatpush1.bf16.msra.mxu0 %v556
    %600 = vmatprep.subr.bf16.mxu0 0
    %601 = vmatpush1.bf16.msra.mxu0 %v557
    %602 = vmatprep.subr.bf16.mxu0 0
    %603 = vmatpush1.bf16.msra.mxu0 %v558
    %604 = vmatprep.subr.bf16.mxu0 0
    %605 = vmatpush1.bf16.msra.mxu0 %v559
    %606 = vmatprep.subr.bf16.mxu0 0
    %607 = vmatpush1.bf16.msra.mxu0 %v560
    %608 = vmatprep.subr.bf16.mxu0 0
    %609 = vmatpush1.bf16.msra.mxu0 %v561
    %610 = vmatprep.mubr.bf16.mxu0 %v442
    %611 = vmatmul.mubr.bf16.gmra.mrb[0].mxu0 %v441
    %v612 = vpop.f32.mrb[0].mxu0
    %v613 = vadd.f32 %v480, %v612
    %v614 = vpop.f32.mrb[0].mxu0
    %v615 = vpop.f32.mrb[0].mxu0
    %v616 = vpop.f32.mrb[0].mxu0
    %617 = vdwg.mxu0
    %618 = vst [vmem:[%s5] sm:$0xff] %v613
  $region29: #{resnetx_feature_extractor_forward.9} parent=0 // pred_fallthru
    _
  // Predicated region
  $region30: #{resnetx_feature_extractor_forward.9} parent=0 // pred_check
    _
  $region31: #{resnetx_feature_extractor_forward.9} parent=0 // pred_check_branch
    %620 = sbr.rel (0) target = $region33
  $region32: #{resnetx_feature_extractor_forward.9} parent=0 // pred_region
    _
  $region33: #{resnetx_feature_extractor_forward.9} parent=0 // pred_fallthru
    _
  // Predicated region
  $region34: #{resnetx_feature_extractor_forward.9} parent=0 // pred_check
    _
  $region35: #{resnetx_feature_extractor_forward.9} parent=0 // pred_check_branch
    %622 = sbr.rel (0) target = $region37
  $region36: #{resnetx_feature_extractor_forward.9} parent=0 // pred_region
    _
  $region37: #{resnetx_feature_extractor_forward.9} parent=0 // pred_fallthru
    _

</llo_original>
